<compile_context>
chip_gen: v7x
topology: tpu7x:2x2x1
jax: 0.10.0
libtpu: 0.0.40
codegen_flags: <defaults>
</compile_context>

<pallas_src>
import functools

import jax
import jax.numpy as jnp
from jax import lax
from jax.experimental import pallas as pl
from jax.experimental.pallas import tpu as pltpu


PRELU_ALPHA = 0.25  # nn.PReLU() default init


# ----------------------------------------------------------------------------
# Pallas kernels
# ----------------------------------------------------------------------------

def _prelu(y, alpha):
    return jnp.maximum(y, 0.0) + alpha * jnp.minimum(y, 0.0)


def _conv1_fused_kernel(x_ref, s1_ref, t1_ref, a1_ref,
                        w1_ref, b1_ref,
                        s2_ref, t2_ref, a2_ref, o_ref):
    """out = PReLU2(BN2(conv1(PReLU1(BN1(x)))))  — 1x1 conv as matmul."""
    xa = x_ref[...].astype(jnp.float32) * s1_ref[...] + t1_ref[...]
    xa = _prelu(xa, a1_ref[...])
    y = jnp.dot(xa.astype(jnp.bfloat16), w1_ref[...],
                preferred_element_type=jnp.float32) + b1_ref[...]
    y = y * s2_ref[...] + t2_ref[...]
    y = _prelu(y, a2_ref[...])
    o_ref[...] = y.astype(o_ref.dtype)


def _conv23_convid_kernel(cols_ref, w2_ref, b2_ref,
                          s3_ref, t3_ref, a3_ref,
                          w3_ref, b3_ref,
                          xid_ref, wid_ref, bid_ref, o_ref):
    """out = conv3(PReLU3(BN3(conv2(cols)))) + conv_identity(x)  (all fused)."""
    h = jnp.dot(cols_ref[...], w2_ref[...],
                preferred_element_type=jnp.float32) + b2_ref[...]
    h = h * s3_ref[...] + t3_ref[...]
    h = _prelu(h, a3_ref[...])
    y = jnp.dot(h.astype(jnp.bfloat16), w3_ref[...],
                preferred_element_type=jnp.float32) + b3_ref[...]
    ident = jnp.dot(xid_ref[...].astype(jnp.bfloat16), wid_ref[...],
                    preferred_element_type=jnp.float32) + bid_ref[...]
    o_ref[...] = (y + ident).astype(o_ref.dtype)


def _conv23_plainid_kernel(cols_ref, w2_ref, b2_ref,
                           s3_ref, t3_ref, a3_ref,
                           w3_ref, b3_ref,
                           ident_ref, o_ref):
    """out = conv3(PReLU3(BN3(conv2(cols)))) + identity  (identity = x)."""
    h = jnp.dot(cols_ref[...], w2_ref[...],
                preferred_element_type=jnp.float32) + b2_ref[...]
    h = h * s3_ref[...] + t3_ref[...]
    h = _prelu(h, a3_ref[...])
    y = jnp.dot(h.astype(jnp.bfloat16), w3_ref[...],
                preferred_element_type=jnp.float32) + b3_ref[...]
    o_ref[...] = (y + ident_ref[...].astype(jnp.float32)).astype(o_ref.dtype)


# ----------------------------------------------------------------------------
# pallas_call wrappers
# ----------------------------------------------------------------------------

def _pick_tile_m(m, cap=256):
    """Largest multiple-of-8 divisor of m that is <= cap (full dim fallback).

    Prefers >= 2 grid blocks so both v7x TensorCores get work.
    """
    best = None
    for t in range(8, min(cap, m) + 1, 8):
        if m % t == 0:
            best = t
    if best is None:
        return m
    if best == m and m % 16 == 0:
        best = m // 2
    return best


def _row(v):
    return v.reshape(1, -1).astype(jnp.float32)


def conv1_bn_act_fused(x2d, bn1, alpha1, w1, b1, bn2, alpha2):
    """(M,Cin) -> (M,planes) bf16: BN1+PReLU1 -> conv1+bias -> BN2+PReLU2."""
    M, Cin = x2d.shape
    Cout = w1.shape[1]
    s1, t1 = bn1
    s2, t2 = bn2
    tm = _pick_tile_m(M)
    return pl.pallas_call(
        _conv1_fused_kernel,
        out_shape=jax.ShapeDtypeStruct((M, Cout), jnp.bfloat16),
        grid_spec=pltpu.PrefetchScalarGridSpec(
            num_scalar_prefetch=0,
            grid=(M // tm,),
            in_specs=[
                pl.BlockSpec((tm, Cin), lambda i: (i, 0)),
                pl.BlockSpec((1, Cin), lambda i: (0, 0)),
                pl.BlockSpec((1, Cin), lambda i: (0, 0)),
                pl.BlockSpec((1, Cin), lambda i: (0, 0)),
                pl.BlockSpec((Cin, Cout), lambda i: (0, 0)),
                pl.BlockSpec((1, Cout), lambda i: (0, 0)),
                pl.BlockSpec((1, Cout), lambda i: (0, 0)),
                pl.BlockSpec((1, Cout), lambda i: (0, 0)),
                pl.BlockSpec((1, Cout), lambda i: (0, 0)),
            ],
            out_specs=pl.BlockSpec((tm, Cout), lambda i: (i, 0)),
        ),
        compiler_params=pltpu.CompilerParams(
            dimension_semantics=("parallel",)),
    )(x2d, _row(s1), _row(t1), _row(alpha1),
      w1.astype(jnp.bfloat16), _row(b1), _row(s2), _row(t2), _row(alpha2))


def conv23_with_conv_identity(cols, w2col, b2, bn3, alpha3, w3, b3,
                              xid2d, wid, bid):
    M, K2 = cols.shape
    Cmid = w2col.shape[1]
    Cout = w3.shape[1]
    Cin = xid2d.shape[1]
    s3, t3 = bn3
    tm = _pick_tile_m(M)
    return pl.pallas_call(
        _conv23_convid_kernel,
        out_shape=jax.ShapeDtypeStruct((M, Cout), jnp.float32),
        grid_spec=pltpu.PrefetchScalarGridSpec(
            num_scalar_prefetch=0,
            grid=(M // tm,),
            in_specs=[
                pl.BlockSpec((tm, K2), lambda i: (i, 0)),
                pl.BlockSpec((K2, Cmid), lambda i: (0, 0)),
                pl.BlockSpec((1, Cmid), lambda i: (0, 0)),
                pl.BlockSpec((1, Cmid), lambda i: (0, 0)),
                pl.BlockSpec((1, Cmid), lambda i: (0, 0)),
                pl.BlockSpec((1, Cmid), lambda i: (0, 0)),
                pl.BlockSpec((Cmid, Cout), lambda i: (0, 0)),
                pl.BlockSpec((1, Cout), lambda i: (0, 0)),
                pl.BlockSpec((tm, Cin), lambda i: (i, 0)),
                pl.BlockSpec((Cin, Cout), lambda i: (0, 0)),
                pl.BlockSpec((1, Cout), lambda i: (0, 0)),
            ],
            out_specs=pl.BlockSpec((tm, Cout), lambda i: (i, 0)),
        ),
        compiler_params=pltpu.CompilerParams(
            dimension_semantics=("parallel",)),
    )(cols, w2col.astype(jnp.bfloat16), _row(b2),
      _row(s3), _row(t3), _row(alpha3),
      w3.astype(jnp.bfloat16), _row(b3),
      xid2d, wid.astype(jnp.bfloat16), _row(bid))


def conv23_with_plain_identity(cols, w2col, b2, bn3, alpha3, w3, b3, ident2d):
    M, K2 = cols.shape
    Cmid = w2col.shape[1]
    Cout = w3.shape[1]
    s3, t3 = bn3
    tm = _pick_tile_m(M)
    return pl.pallas_call(
        _conv23_plainid_kernel,
        out_shape=jax.ShapeDtypeStruct((M, Cout), jnp.float32),
        grid_spec=pltpu.PrefetchScalarGridSpec(
            num_scalar_prefetch=0,
            grid=(M // tm,),
            in_specs=[
                pl.BlockSpec((tm, K2), lambda i: (i, 0)),
                pl.BlockSpec((K2, Cmid), lambda i: (0, 0)),
                pl.BlockSpec((1, Cmid), lambda i: (0, 0)),
                pl.BlockSpec((1, Cmid), lambda i: (0, 0)),
                pl.BlockSpec((1, Cmid), lambda i: (0, 0)),
                pl.BlockSpec((1, Cmid), lambda i: (0, 0)),
                pl.BlockSpec((Cmid, Cout), lambda i: (0, 0)),
                pl.BlockSpec((1, Cout), lambda i: (0, 0)),
                pl.BlockSpec((tm, Cout), lambda i: (i, 0)),
            ],
            out_specs=pl.BlockSpec((tm, Cout), lambda i: (i, 0)),
        ),
        compiler_params=pltpu.CompilerParams(
            dimension_semantics=("parallel",)),
    )(cols, w2col.astype(jnp.bfloat16), _row(b2),
      _row(s3), _row(t3), _row(alpha3),
      w3.astype(jnp.bfloat16), _row(b3), ident2d)


# ----------------------------------------------------------------------------
# Host-side glue
# ----------------------------------------------------------------------------

def _bn_fold(bn, eps=1e-5):
    scale = bn['gamma'] / jnp.sqrt(bn['var'] + eps)
    shift = bn['beta'] - bn['mean'] * scale
    return scale, shift


def _im2col(x_nhwc, kh, kw, stride, pad):
    """Columns for a conv on an already-activated map (zero padding is exact)."""
    N, H, W, C = x_nhwc.shape
    Ho = (H + 2 * pad - kh) // stride + 1
    Wo = (W + 2 * pad - kw) // stride + 1
    xp = jnp.pad(x_nhwc, ((0, 0), (pad, pad), (pad, pad), (0, 0)))
    parts = []
    for i in range(kh):
        for j in range(kw):
            parts.append(xp[:, i:i + stride * (Ho - 1) + 1:stride,
                            j:j + stride * (Wo - 1) + 1:stride, :])
    cols = jnp.concatenate(parts, axis=-1).reshape(N * Ho * Wo, kh * kw * C)
    return cols, Ho, Wo


def bottleneck_forward(x_nchw, params, *, expansion=4, stride_3x3=1,
                       padding_3x3=1, conv_identity=False,
                       stride_conv_identity=1, prelu=True):
    """Forward pass of _ResNet_Bottleneck. x_nchw: (N, Cin, H, W) float32."""
    x = jnp.transpose(x_nchw, (0, 2, 3, 1)).astype(jnp.float32)   # NHWC
    N, H, W, Cin = x.shape
    planes = params['conv1']['w'].shape[-1]
    outplanes = expansion * planes
    x2d = x.reshape(N * H * W, Cin)

    def alpha_vec(a, c):
        a = a if prelu else 0.0   # PReLU=False path == plain ReLU (alpha=0)
        return jnp.broadcast_to(jnp.asarray(a, jnp.float32), (c,))

    a1 = alpha_vec(params['alpha1'], Cin)
    a2 = alpha_vec(params['alpha2'], planes)
    a3 = alpha_vec(params['alpha3'], planes)

    bn1 = _bn_fold(params['conv1_bn'])
    bn2 = _bn_fold(params['conv2_bn'])
    bn3 = _bn_fold(params['conv3_bn'])

    # --- Pallas call 1: BN1+PReLU1 -> conv1(1x1)+b -> BN2+PReLU2 (bf16 out) --
    a2_act = conv1_bn_act_fused(
        x2d, bn1, a1, params['conv1']['w'].reshape(Cin, planes),
        params['conv1']['b'], bn2, a2)

    # --- host glue: pad the activated map + bf16 im2col columns for conv2 ---
    a2_nhwc = a2_act.reshape(N, H, W, planes)
    cols, Ho, Wo = _im2col(a2_nhwc, 3, 3, stride_3x3, padding_3x3)
    M2 = N * Ho * Wo
    w2col = params['conv2']['w'].reshape(9 * planes, planes)

    # --- Pallas call 2: conv2+b -> BN3+PReLU3 -> conv3+b (+identity) --------
    if conv_identity:
        s = stride_conv_identity
        xid = x[:, ::s, ::s, :]
        assert N * xid.shape[1] * xid.shape[2] == M2, "identity shape mismatch"
        out2d = conv23_with_conv_identity(
            cols, w2col, params['conv2']['b'], bn3, a3,
            params['conv3']['w'].reshape(planes, outplanes),
            params['conv3']['b'],
            xid.reshape(M2, Cin),
            params['conv_identity']['w'].reshape(Cin, outplanes),
            params['conv_identity']['b'])
    else:
        assert Cin == outplanes and Ho == H and Wo == W, "identity mismatch"
        out2d = conv23_with_plain_identity(
            cols, w2col, params['conv2']['b'], bn3, a3,
            params['conv3']['w'].reshape(planes, outplanes),
            params['conv3']['b'], x2d)

    out = out2d.reshape(N, Ho, Wo, outplanes)
    return jnp.transpose(out, (0, 3, 1, 2))                       # back to NCHW


# ----------------------------------------------------------------------------
# Synthetic deterministic parameters
# ----------------------------------------------------------------------------

class ParamGen:
    def __init__(self, seed=0):
        self._key = jax.random.PRNGKey(seed)

    def normal(self, shape):
        self._key, sub = jax.random.split(self._key)
        return jax.random.normal(sub, shape, dtype=jnp.float32)


def init_conv(pg, kh, kw, cin, cout):
    fan_in = kh * kw * cin
    return {'w': pg.normal((kh, kw, cin, cout)) * jnp.sqrt(2.0 / fan_in),
            'b': 0.01 * pg.normal((cout,))}


def init_bn(pg, c):
    return {'gamma': 1.0 + 0.1 * pg.normal((c,)),
            'beta': 0.1 * pg.normal((c,)),
            'mean': 0.1 * pg.normal((c,)),
            'var': 1.0 + 0.1 * jnp.abs(pg.normal((c,)))}


def init_bottleneck(pg, inplanes, planes, prev_layer_depth,
                    expansion=4, conv_identity=False):
    p = {
        'conv1': init_conv(pg, 1, 1, inplanes, planes),
        'conv1_bn': init_bn(pg, prev_layer_depth),
        'conv2': init_conv(pg, 3, 3, planes, planes),
        'conv2_bn': init_bn(pg, planes),
        'conv3': init_conv(pg, 1, 1, planes, expansion * planes),
        'conv3_bn': init_bn(pg, planes),
        'alpha1': jnp.float32(PRELU_ALPHA),
        'alpha2': jnp.float32(PRELU_ALPHA),
        'alpha3': jnp.float32(PRELU_ALPHA),
    }
    if conv_identity:
        p['conv_identity'] = init_conv(pg, 1, 1, inplanes, expansion * planes)
    return p


# ----------------------------------------------------------------------------
# Pure-JAX reference (f32) for a correctness check
# ----------------------------------------------------------------------------

def _conv_ref(x, w, b, stride=1, pad=0):
    y = lax.conv_general_dilated(
        x, w, window_strides=(stride, stride),
        padding=((pad, pad), (pad, pad)),
        dimension_numbers=('NHWC', 'HWIO', 'NHWC'))
    return y + b


def bottleneck_reference(x_nchw, params, *, expansion=4, stride_3x3=1,
                         padding_3x3=1, conv_identity=False,
                         stride_conv_identity=1, prelu=True):
    x = jnp.transpose(x_nchw, (0, 2, 3, 1)).astype(jnp.float32)

    def bn(t, b):
        s, sh = _bn_fold(b)
        return t * s + sh

    def act(t, a):
        a = a if prelu else 0.0
        return jnp.maximum(t, 0.0) + a * jnp.minimum(t, 0.0)

    out = _conv_ref(act(bn(x, params['conv1_bn']), params['alpha1']),
                    params['conv1']['w'], params['conv1']['b'])
    out = _conv_ref(act(bn(out, params['conv2_bn']), params['alpha2']),
                    params['conv2']['w'], params['conv2']['b'],
                    stride=stride_3x3, pad=padding_3x3)
    out = _conv_ref(act(bn(out, params['conv3_bn']), params['alpha3']),
                    params['conv3']['w'], params['conv3']['b'])
    if conv_identity:
        ident = _conv_ref(x, params['conv_identity']['w'],
                          params['conv_identity']['b'],
                          stride=stride_conv_identity)
    else:
        ident = x
    out = out + ident
    return jnp.transpose(out, (0, 3, 1, 2))


# ----------------------------------------------------------------------------

if __name__ == "__main__":
    # Config A: conv_identity=True (as used inside _make_layer towers).
    inplanes, planes, expansion = 64, 32, 4
    pg = ParamGen(seed=0)
    params = init_bottleneck(pg, inplanes, planes, prev_layer_depth=inplanes,
                             expansion=expansion, conv_identity=True)
    x = jax.random.normal(jax.random.PRNGKey(0), (2, inplanes, 16, 16),
                          jnp.float32)

    fwd = jax.jit(functools.partial(bottleneck_forward, expansion=expansion,
                                    conv_identity=True))
    out = jax.block_until_ready(fwd(x, params))
    assert out.shape == (2, expansion * planes, 16, 16), out.shape
    ref = bottleneck_reference(x, params, expansion=expansion,
                               conv_identity=True)
    err = float(jnp.max(jnp.abs(out - ref)) / (jnp.max(jnp.abs(ref)) + 1e-6))
    assert err < 5e-2, f"mismatch vs reference (conv_identity=True): {err}"

    # Config B: default conv_identity=False (identity passthrough; requires
    # inplanes == expansion * planes).
    pg2 = ParamGen(seed=1)
    params2 = init_bottleneck(pg2, 128, 32, prev_layer_depth=128,
                              expansion=4, conv_identity=False)
    x2 = jax.random.normal(jax.random.PRNGKey(1), (2, 128, 16, 16),
                           jnp.float32)
    fwd2 = jax.jit(functools.partial(bottleneck_forward, expansion=4,
                                     conv_identity=False))
    out2 = jax.block_until_ready(fwd2(x2, params2))
    assert out2.shape == (2, 128, 16, 16), out2.shape
    ref2 = bottleneck_reference(x2, params2, expansion=4, conv_identity=False)
    err2 = float(jnp.max(jnp.abs(out2 - ref2)) / (jnp.max(jnp.abs(ref2)) + 1e-6))
    assert err2 < 5e-2, f"mismatch vs reference (conv_identity=False): {err2}"

    assert bool(jnp.all(jnp.isfinite(out))) and bool(jnp.all(jnp.isfinite(out2)))
    print("KERNEL_OK")
</pallas_src>

<mosaic_0001>
module attributes {stable_mosaic.version = 11 : i64} {
  func.func @_conv1_fused_kernel(%arg0: i32, %arg1: memref<256x64xf32, #tpu.memory_space<vmem>>, %arg2: memref<1x64xf32, #tpu.memory_space<vmem>>, %arg3: memref<1x64xf32, #tpu.memory_space<vmem>>, %arg4: memref<1x64xf32, #tpu.memory_space<vmem>>, %arg5: memref<64x32xbf16, #tpu.memory_space<vmem>>, %arg6: memref<1x32xf32, #tpu.memory_space<vmem>>, %arg7: memref<1x32xf32, #tpu.memory_space<vmem>>, %arg8: memref<1x32xf32, #tpu.memory_space<vmem>>, %arg9: memref<1x32xf32, #tpu.memory_space<vmem>>, %arg10: memref<256x32xbf16, #tpu.memory_space<vmem>>) attributes {dimension_semantics = [#tpu.dimension_semantics<parallel>], iteration_bounds = array<i64: 2>, scalar_prefetch = 0 : i64, scratch_operands = 0 : i64, tpu.core_type = #tpu.core_type<tc>, window_params = [{transform_indices = @transform_0, window_bounds = array<i64: 256, 64>}, {pipeline_mode = #tpu.pipeline_mode<synchronous>, transform_indices = @transform_1, window_bounds = array<i64: 1, 64>}, {pipeline_mode = #tpu.pipeline_mode<synchronous>, transform_indices = @transform_2, window_bounds = array<i64: 1, 64>}, {pipeline_mode = #tpu.pipeline_mode<synchronous>, transform_indices = @transform_3, window_bounds = array<i64: 1, 64>}, {pipeline_mode = #tpu.pipeline_mode<synchronous>, transform_indices = @transform_4, window_bounds = array<i64: 64, 32>}, {pipeline_mode = #tpu.pipeline_mode<synchronous>, transform_indices = @transform_5, window_bounds = array<i64: 1, 32>}, {pipeline_mode = #tpu.pipeline_mode<synchronous>, transform_indices = @transform_6, window_bounds = array<i64: 1, 32>}, {pipeline_mode = #tpu.pipeline_mode<synchronous>, transform_indices = @transform_7, window_bounds = array<i64: 1, 32>}, {pipeline_mode = #tpu.pipeline_mode<synchronous>, transform_indices = @transform_8, window_bounds = array<i64: 1, 32>}, {transform_indices = @transform_9, window_bounds = array<i64: 256, 32>}]} {
    %c0 = arith.constant 0 : index
    %c0_0 = arith.constant 0 : index
    %0 = vector.load %arg1[%c0, %c0_0] : memref<256x64xf32, #tpu.memory_space<vmem>>, vector<256x64xf32>
    %c0_1 = arith.constant 0 : index
    %c0_2 = arith.constant 0 : index
    %1 = vector.load %arg2[%c0_1, %c0_2] : memref<1x64xf32, #tpu.memory_space<vmem>>, vector<1x64xf32>
    %2 = vector.broadcast %1 : vector<1x64xf32> to vector<256x64xf32>
    %3 = arith.mulf %0, %2 : vector<256x64xf32>
    %c0_3 = arith.constant 0 : index
    %c0_4 = arith.constant 0 : index
    %4 = vector.load %arg3[%c0_3, %c0_4] : memref<1x64xf32, #tpu.memory_space<vmem>>, vector<1x64xf32>
    %5 = vector.broadcast %4 : vector<1x64xf32> to vector<256x64xf32>
    %6 = arith.addf %3, %5 : vector<256x64xf32>
    %c0_5 = arith.constant 0 : index
    %c0_6 = arith.constant 0 : index
    %7 = vector.load %arg4[%c0_5, %c0_6] : memref<1x64xf32, #tpu.memory_space<vmem>>, vector<1x64xf32>
    %cst = arith.constant 0.000000e+00 : f32
    %8 = vector.broadcast %cst : f32 to vector<256x64xf32>
    %9 = arith.maximumf %6, %8 : vector<256x64xf32>
    %cst_7 = arith.constant 0.000000e+00 : f32
    %10 = vector.broadcast %cst_7 : f32 to vector<256x64xf32>
    %11 = arith.minimumf %6, %10 : vector<256x64xf32>
    %12 = vector.broadcast %7 : vector<1x64xf32> to vector<256x64xf32>
    %13 = arith.mulf %12, %11 : vector<256x64xf32>
    %14 = arith.addf %9, %13 : vector<256x64xf32>
    %15 = arith.truncf %14 : vector<256x64xf32> to vector<256x64xbf16>
    %c0_8 = arith.constant 0 : index
    %c0_9 = arith.constant 0 : index
    %16 = vector.load %arg5[%c0_8, %c0_9] : memref<64x32xbf16, #tpu.memory_space<vmem>>, vector<64x32xbf16>
    %cst_10 = arith.constant dense<0.000000e+00> : vector<256x32xf32>
    %17 = tpu.matmul %15, %16, %cst_10 {dimension_numbers = #tpu.dot_dimension_numbers<[1], [0], [0], [1], [0, 0, 1, 1], [], []>} : vector<256x64xbf16>, vector<64x32xbf16>, vector<256x32xf32> -> vector<256x32xf32>
    %c0_11 = arith.constant 0 : index
    %c0_12 = arith.constant 0 : index
    %18 = vector.load %arg6[%c0_11, %c0_12] : memref<1x32xf32, #tpu.memory_space<vmem>>, vector<1x32xf32>
    %19 = vector.broadcast %18 : vector<1x32xf32> to vector<256x32xf32>
    %20 = arith.addf %17, %19 : vector<256x32xf32>
    %c0_13 = arith.constant 0 : index
    %c0_14 = arith.constant 0 : index
    %21 = vector.load %arg7[%c0_13, %c0_14] : memref<1x32xf32, #tpu.memory_space<vmem>>, vector<1x32xf32>
    %22 = vector.broadcast %21 : vector<1x32xf32> to vector<256x32xf32>
    %23 = arith.mulf %20, %22 : vector<256x32xf32>
    %c0_15 = arith.constant 0 : index
    %c0_16 = arith.constant 0 : index
    %24 = vector.load %arg8[%c0_15, %c0_16] : memref<1x32xf32, #tpu.memory_space<vmem>>, vector<1x32xf32>
    %25 = vector.broadcast %24 : vector<1x32xf32> to vector<256x32xf32>
    %26 = arith.addf %23, %25 : vector<256x32xf32>
    %c0_17 = arith.constant 0 : index
    %c0_18 = arith.constant 0 : index
    %27 = vector.load %arg9[%c0_17, %c0_18] : memref<1x32xf32, #tpu.memory_space<vmem>>, vector<1x32xf32>
    %cst_19 = arith.constant 0.000000e+00 : f32
    %28 = vector.broadcast %cst_19 : f32 to vector<256x32xf32>
    %29 = arith.maximumf %26, %28 : vector<256x32xf32>
    %cst_20 = arith.constant 0.000000e+00 : f32
    %30 = vector.broadcast %cst_20 : f32 to vector<256x32xf32>
    %31 = arith.minimumf %26, %30 : vector<256x32xf32>
    %32 = vector.broadcast %27 : vector<1x32xf32> to vector<256x32xf32>
    %33 = arith.mulf %32, %31 : vector<256x32xf32>
    %34 = arith.addf %29, %33 : vector<256x32xf32>
    %35 = arith.truncf %34 : vector<256x32xf32> to vector<256x32xbf16>
    %c0_21 = arith.constant 0 : index
    %c0_22 = arith.constant 0 : index
    %36 = vector.load %arg10[%c0_21, %c0_22] : memref<256x32xbf16, #tpu.memory_space<vmem>>, vector<256x32xbf16>
    tpu.vector_store %arg10[%c0_21, %c0_22], %35 {strides = array<i32>} : memref<256x32xbf16, #tpu.memory_space<vmem>>, vector<256x32xbf16>,
    return
  }
  func.func @transform_0(%arg0: i32) -> (i32, i32) {
    %c0_i32 = arith.constant 0 : i32
    %c0_i32_0 = arith.constant 0 : i32
    return %arg0, %c0_i32 : i32, i32
  }
  func.func @transform_1(%arg0: i32) -> (i32, i32) {
    %c0_i32 = arith.constant 0 : i32
    %c0_i32_0 = arith.constant 0 : i32
    %c0_i32_1 = arith.constant 0 : i32
    return %c0_i32, %c0_i32_0 : i32, i32
  }
  func.func @transform_2(%arg0: i32) -> (i32, i32) {
    %c0_i32 = arith.constant 0 : i32
    %c0_i32_0 = arith.constant 0 : i32
    %c0_i32_1 = arith.constant 0 : i32
    return %c0_i32, %c0_i32_0 : i32, i32
  }
  func.func @transform_3(%arg0: i32) -> (i32, i32) {
    %c0_i32 = arith.constant 0 : i32
    %c0_i32_0 = arith.constant 0 : i32
    %c0_i32_1 = arith.constant 0 : i32
    return %c0_i32, %c0_i32_0 : i32, i32
  }
  func.func @transform_4(%arg0: i32) -> (i32, i32) {
    %c0_i32 = arith.constant 0 : i32
    %c0_i32_0 = arith.constant 0 : i32
    %c0_i32_1 = arith.constant 0 : i32
    return %c0_i32, %c0_i32_0 : i32, i32
  }
  func.func @transform_5(%arg0: i32) -> (i32, i32) {
    %c0_i32 = arith.constant 0 : i32
    %c0_i32_0 = arith.constant 0 : i32
    %c0_i32_1 = arith.constant 0 : i32
    return %c0_i32, %c0_i32_0 : i32, i32
  }
  func.func @transform_6(%arg0: i32) -> (i32, i32) {
    %c0_i32 = arith.constant 0 : i32
    %c0_i32_0 = arith.constant 0 : i32
    %c0_i32_1 = arith.constant 0 : i32
    return %c0_i32, %c0_i32_0 : i32, i32
  }
  func.func @transform_7(%arg0: i32) -> (i32, i32) {
    %c0_i32 = arith.constant 0 : i32
    %c0_i32_0 = arith.constant 0 : i32
    %c0_i32_1 = arith.constant 0 : i32
    return %c0_i32, %c0_i32_0 : i32, i32
  }
  func.func @transform_8(%arg0: i32) -> (i32, i32) {
    %c0_i32 = arith.constant 0 : i32
    %c0_i32_0 = arith.constant 0 : i32
    %c0_i32_1 = arith.constant 0 : i32
    return %c0_i32, %c0_i32_0 : i32, i32
  }
  func.func @transform_9(%arg0: i32) -> (i32, i32) {
    %c0_i32 = arith.constant 0 : i32
    %c0_i32_0 = arith.constant 0 : i32
    return %arg0, %c0_i32 : i32, i32
  }
}

module attributes {stable_mosaic.version = 11 : i64} {
  func.func @_conv23_convid_kernel(%arg0: i32, %arg1: memref<256x288xbf16, #tpu.memory_space<vmem>>, %arg2: memref<288x32xbf16, #tpu.memory_space<vmem>>, %arg3: memref<1x32xf32, #tpu.memory_space<vmem>>, %arg4: memref<1x32xf32, #tpu.memory_space<vmem>>, %arg5: memref<1x32xf32, #tpu.memory_space<vmem>>, %arg6: memref<1x32xf32, #tpu.memory_space<vmem>>, %arg7: memref<32x128xbf16, #tpu.memory_space<vmem>>, %arg8: memref<1x128xf32, #tpu.memory_space<vmem>>, %arg9: memref<256x64xf32, #tpu.memory_space<vmem>>, %arg10: memref<64x128xbf16, #tpu.memory_space<vmem>>, %arg11: memref<1x128xf32, #tpu.memory_space<vmem>>, %arg12: memref<256x128xf32, #tpu.memory_space<vmem>>) attributes {dimension_semantics = [#tpu.dimension_semantics<parallel>], iteration_bounds = array<i64: 2>, scalar_prefetch = 0 : i64, scratch_operands = 0 : i64, tpu.core_type = #tpu.core_type<tc>, window_params = [{transform_indices = @transform_0, window_bounds = array<i64: 256, 288>}, {pipeline_mode = #tpu.pipeline_mode<synchronous>, transform_indices = @transform_1, window_bounds = array<i64: 288, 32>}, {pipeline_mode = #tpu.pipeline_mode<synchronous>, transform_indices = @transform_2, window_bounds = array<i64: 1, 32>}, {pipeline_mode = #tpu.pipeline_mode<synchronous>, transform_indices = @transform_3, window_bounds = array<i64: 1, 32>}, {pipeline_mode = #tpu.pipeline_mode<synchronous>, transform_indices = @transform_4, window_bounds = array<i64: 1, 32>}, {pipeline_mode = #tpu.pipeline_mode<synchronous>, transform_indices = @transform_5, window_bounds = array<i64: 1, 32>}, {pipeline_mode = #tpu.pipeline_mode<synchronous>, transform_indices = @transform_6, window_bounds = array<i64: 32, 128>}, {pipeline_mode = #tpu.pipeline_mode<synchronous>, transform_indices = @transform_7, window_bounds = array<i64: 1, 128>}, {transform_indices = @transform_8, window_bounds = array<i64: 256, 64>}, {pipeline_mode = #tpu.pipeline_mode<synchronous>, transform_indices = @transform_9, window_bounds = array<i64: 64, 128>}, {pipeline_mode = #tpu.pipeline_mode<synchronous>, transform_indices = @transform_10, window_bounds = array<i64: 1, 128>}, {transform_indices = @transform_11, window_bounds = array<i64: 256, 128>}]} {
    %c0 = arith.constant 0 : index
    %c0_0 = arith.constant 0 : index
    %0 = vector.load %arg1[%c0, %c0_0] : memref<256x288xbf16, #tpu.memory_space<vmem>>, vector<256x288xbf16>
    %c0_1 = arith.constant 0 : index
    %c0_2 = arith.constant 0 : index
    %1 = vector.load %arg2[%c0_1, %c0_2] : memref<288x32xbf16, #tpu.memory_space<vmem>>, vector<288x32xbf16>
    %cst = arith.constant dense<0.000000e+00> : vector<256x32xf32>
    %2 = tpu.matmul %0, %1, %cst {dimension_numbers = #tpu.dot_dimension_numbers<[1], [0], [0], [1], [0, 0, 1, 1], [], []>} : vector<256x288xbf16>, vector<288x32xbf16>, vector<256x32xf32> -> vector<256x32xf32>
    %c0_3 = arith.constant 0 : index
    %c0_4 = arith.constant 0 : index
    %3 = vector.load %arg3[%c0_3, %c0_4] : memref<1x32xf32, #tpu.memory_space<vmem>>, vector<1x32xf32>
    %4 = vector.broadcast %3 : vector<1x32xf32> to vector<256x32xf32>
    %5 = arith.addf %2, %4 : vector<256x32xf32>
    %c0_5 = arith.constant 0 : index
    %c0_6 = arith.constant 0 : index
    %6 = vector.load %arg4[%c0_5, %c0_6] : memref<1x32xf32, #tpu.memory_space<vmem>>, vector<1x32xf32>
    %7 = vector.broadcast %6 : vector<1x32xf32> to vector<256x32xf32>
    %8 = arith.mulf %5, %7 : vector<256x32xf32>
    %c0_7 = arith.constant 0 : index
    %c0_8 = arith.constant 0 : index
    %9 = vector.load %arg5[%c0_7, %c0_8] : memref<1x32xf32, #tpu.memory_space<vmem>>, vector<1x32xf32>
    %10 = vector.broadcast %9 : vector<1x32xf32> to vector<256x32xf32>
    %11 = arith.addf %8, %10 : vector<256x32xf32>
    %c0_9 = arith.constant 0 : index
    %c0_10 = arith.constant 0 : index
    %12 = vector.load %arg6[%c0_9, %c0_10] : memref<1x32xf32, #tpu.memory_space<vmem>>, vector<1x32xf32>
    %cst_11 = arith.constant 0.000000e+00 : f32
    %13 = vector.broadcast %cst_11 : f32 to vector<256x32xf32>
    %14 = arith.maximumf %11, %13 : vector<256x32xf32>
    %cst_12 = arith.constant 0.000000e+00 : f32
    %15 = vector.broadcast %cst_12 : f32 to vector<256x32xf32>
    %16 = arith.minimumf %11, %15 : vector<256x32xf32>
    %17 = vector.broadcast %12 : vector<1x32xf32> to vector<256x32xf32>
    %18 = arith.mulf %17, %16 : vector<256x32xf32>
    %19 = arith.addf %14, %18 : vector<256x32xf32>
    %20 = arith.truncf %19 : vector<256x32xf32> to vector<256x32xbf16>
    %c0_13 = arith.constant 0 : index
    %c0_14 = arith.constant 0 : index
    %21 = vector.load %arg7[%c0_13, %c0_14] : memref<32x128xbf16, #tpu.memory_space<vmem>>, vector<32x128xbf16>
    %cst_15 = arith.constant dense<0.000000e+00> : vector<256x128xf32>
    %22 = tpu.matmul %20, %21, %cst_15 {dimension_numbers = #tpu.dot_dimension_numbers<[1], [0], [0], [1], [0, 0, 1, 1], [], []>} : vector<256x32xbf16>, vector<32x128xbf16>, vector<256x128xf32> -> vector<256x128xf32>
    %c0_16 = arith.constant 0 : index
    %c0_17 = arith.constant 0 : index
    %23 = vector.load %arg8[%c0_16, %c0_17] : memref<1x128xf32, #tpu.memory_space<vmem>>, vector<1x128xf32>
    %24 = vector.broadcast %23 : vector<1x128xf32> to vector<256x128xf32>
    %25 = arith.addf %22, %24 : vector<256x128xf32>
    %c0_18 = arith.constant 0 : index
    %c0_19 = arith.constant 0 : index
    %26 = vector.load %arg9[%c0_18, %c0_19] : memref<256x64xf32, #tpu.memory_space<vmem>>, vector<256x64xf32>
    %27 = arith.truncf %26 : vector<256x64xf32> to vector<256x64xbf16>
    %c0_20 = arith.constant 0 : index
    %c0_21 = arith.constant 0 : index
    %28 = vector.load %arg10[%c0_20, %c0_21] : memref<64x128xbf16, #tpu.memory_space<vmem>>, vector<64x128xbf16>
    %cst_22 = arith.constant dense<0.000000e+00> : vector<256x128xf32>
    %29 = tpu.matmul %27, %28, %cst_22 {dimension_numbers = #tpu.dot_dimension_numbers<[1], [0], [0], [1], [0, 0, 1, 1], [], []>} : vector<256x64xbf16>, vector<64x128xbf16>, vector<256x128xf32> -> vector<256x128xf32>
    %c0_23 = arith.constant 0 : index
    %c0_24 = arith.constant 0 : index
    %30 = vector.load %arg11[%c0_23, %c0_24] : memref<1x128xf32, #tpu.memory_space<vmem>>, vector<1x128xf32>
    %31 = vector.broadcast %30 : vector<1x128xf32> to vector<256x128xf32>
    %32 = arith.addf %29, %31 : vector<256x128xf32>
    %33 = arith.addf %25, %32 : vector<256x128xf32>
    %c0_25 = arith.constant 0 : index
    %c0_26 = arith.constant 0 : index
    %34 = vector.load %arg12[%c0_25, %c0_26] : memref<256x128xf32, #tpu.memory_space<vmem>>, vector<256x128xf32>
    tpu.vector_store %arg12[%c0_25, %c0_26], %33 {strides = array<i32>} : memref<256x128xf32, #tpu.memory_space<vmem>>, vector<256x128xf32>,
    return
  }
  func.func @transform_0(%arg0: i32) -> (i32, i32) {
    %c0_i32 = arith.constant 0 : i32
    %c0_i32_0 = arith.constant 0 : i32
    return %arg0, %c0_i32 : i32, i32
  }
  func.func @transform_1(%arg0: i32) -> (i32, i32) {
    %c0_i32 = arith.constant 0 : i32
    %c0_i32_0 = arith.constant 0 : i32
    %c0_i32_1 = arith.constant 0 : i32
    return %c0_i32, %c0_i32_0 : i32, i32
  }
  func.func @transform_2(%arg0: i32) -> (i32, i32) {
    %c0_i32 = arith.constant 0 : i32
    %c0_i32_0 = arith.constant 0 : i32
    %c0_i32_1 = arith.constant 0 : i32
    return %c0_i32, %c0_i32_0 : i32, i32
  }
  func.func @transform_3(%arg0: i32) -> (i32, i32) {
    %c0_i32 = arith.constant 0 : i32
    %c0_i32_0 = arith.constant 0 : i32
    %c0_i32_1 = arith.constant 0 : i32
    return %c0_i32, %c0_i32_0 : i32, i32
  }
  func.func @transform_4(%arg0: i32) -> (i32, i32) {
    %c0_i32 = arith.constant 0 : i32
    %c0_i32_0 = arith.constant 0 : i32
    %c0_i32_1 = arith.constant 0 : i32
    return %c0_i32, %c0_i32_0 : i32, i32
  }
  func.func @transform_5(%arg0: i32) -> (i32, i32) {
    %c0_i32 = arith.constant 0 : i32
    %c0_i32_0 = arith.constant 0 : i32
    %c0_i32_1 = arith.constant 0 : i32
    return %c0_i32, %c0_i32_0 : i32, i32
  }
  func.func @transform_6(%arg0: i32) -> (i32, i32) {
    %c0_i32 = arith.constant 0 : i32
    %c0_i32_0 = arith.constant 0 : i32
    %c0_i32_1 = arith.constant 0 : i32
    return %c0_i32, %c0_i32_0 : i32, i32
  }
  func.func @transform_7(%arg0: i32) -> (i32, i32) {
    %c0_i32 = arith.constant 0 : i32
    %c0_i32_0 = arith.constant 0 : i32
    %c0_i32_1 = arith.constant 0 : i32
    return %c0_i32, %c0_i32_0 : i32, i32
  }
  func.func @transform_8(%arg0: i32) -> (i32, i32) {
    %c0_i32 = arith.constant 0 : i32
    %c0_i32_0 = arith.constant 0 : i32
    return %arg0, %c0_i32 : i32, i32
  }
  func.func @transform_9(%arg0: i32) -> (i32, i32) {
    %c0_i32 = arith.constant 0 : i32
    %c0_i32_0 = arith.constant 0 : i32
    %c0_i32_1 = arith.constant 0 : i32
    return %c0_i32, %c0_i32_0 : i32, i32
  }
  func.func @transform_10(%arg0: i32) -> (i32, i32) {
    %c0_i32 = arith.constant 0 : i32
    %c0_i32_0 = arith.constant 0 : i32
    %c0_i32_1 = arith.constant 0 : i32
    return %c0_i32, %c0_i32_0 : i32, i32
  }
  func.func @transform_11(%arg0: i32) -> (i32, i32) {
    %c0_i32 = arith.constant 0 : i32
    %c0_i32_0 = arith.constant 0 : i32
    return %arg0, %c0_i32 : i32, i32
  }
}

</mosaic_0001>

<llo_original>
// kernel: bottleneck_forward.2
$region0: #{bottleneck_forward.2}
  #allocation0 [shape = 'u32[]', space=smem, size = 0x4, offset = 0x4, fixed_abs, tag = 'smem constant byte address 0x4 - core index']
  #allocation1 [shape = 'u32[144,128]{1,0:T(1,128)}', space=vmem, size = 0x12000, scoped, tag = 'internal scratch']
  %s0 = inlined_call_operand.hbm [shape: f32[512,64], index: 0, kind: input, shape index: {}]
  %s1 = inlined_call_operand.vmem [shape: f32[1,64], index: 1, kind: input, shape index: {}]
  %s2 = inlined_call_operand.vmem [shape: f32[1,64], index: 2, kind: input, shape index: {}]
  %s3 = inlined_call_operand.vmem [shape: f32[1,64], index: 3, kind: input, shape index: {}]
  %s4 = inlined_call_operand.vmem [shape: bf16[64,32], index: 4, kind: input, shape index: {}]
  %s5 = inlined_call_operand.vmem [shape: f32[1,32], index: 5, kind: input, shape index: {}]
  %s6 = inlined_call_operand.vmem [shape: f32[1,32], index: 6, kind: input, shape index: {}]
  %s7 = inlined_call_operand.vmem [shape: f32[1,32], index: 7, kind: input, shape index: {}]
  %s8 = inlined_call_operand.vmem [shape: f32[1,32], index: 8, kind: input, shape index: {}]
  %s9 = inlined_call_operand.vmem [shape: bf16[512,32], index: 9, kind: output, shape index: {}]
  %s10 = sld [smem:[#allocation0]]
  $region73: #{bottleneck_forward.2} parent=0
    _
  %s12 = ssub.s32 1, %s10
  %s13 = scalar_select 0, %s12, %s10
  $region1: #{bottleneck_forward.2} parent=0
    #allocation2 [shape = 'u8[262144]{0}', space=vmem, size = 0x40000, scoped, tag = 'input window, operand 0']
    #allocation3 [shape = 's32[2]{0}', space=sflag, size = 0x8, scoped, tag = 'scoped memory for bottleneck_forward.2']
    %14 = vsyncpa [#allocation3], 0
    %s15 = scalar_lea.sflag [#allocation3], 1
    %16 = vsyncpa %s15, 0
    loop: start=0, step=1, limit=4
    $region2: #{bottleneck_forward.2} parent=1 // loop_pre_header
      _
    $region3: #{bottleneck_forward.2} parent=1 // loop_header
      %s18 = sphi 0, %s22
      %p19 = scmp.ge.s32.totalorder %s18, 4
      %s28 = sphi 0, %s30
      %s31 = sphi 0, %s28
      %s32 = sphi 0, %s31
      %s48 = sphi 0, %s32
      %s52 = sphi 0, %s52
      %s54 = sphi 0, %s52
      %s55 = sphi 0, %s54
      %s69 = sphi 0, %s55
      %s73 = sphi 0, %s73
      %s75 = sphi 0, %s73
      %s76 = sphi 0, %s75
      %s90 = sphi 0, %s76
      %s94 = sphi 0, %s94
      %s96 = sphi 0, %s94
      %s97 = sphi 0, %s96
      %s111 = sphi 0, %s97
      %s115 = sphi 0, %s115
      %s117 = sphi 0, %s115
      %s118 = sphi 0, %s117
      %s132 = sphi 0, %s118
      %s136 = sphi 0, %s136
      %s138 = sphi 0, %s136
      %s139 = sphi 0, %s138
      %s153 = sphi 0, %s139
      %s157 = sphi 0, %s157
      %s159 = sphi 0, %s157
      %s160 = sphi 0, %s159
      %s174 = sphi 0, %s160
      %s178 = sphi 0, %s178
      %s180 = sphi 0, %s178
      %s181 = sphi 0, %s180
      %s195 = sphi 0, %s181
      %s199 = sphi 0, %s199
      %s201 = sphi 0, %s199
      %s202 = sphi 0, %s201
      %s216 = sphi 0, %s202
      %s222 = sphi 0, %s224
      %s225 = sphi 0, %s222
      %s226 = sphi 0, %s225
      %s242 = sphi 0, %s226
    $region4: #{bottleneck_forward.2} parent=1 // loop_header_branch
      %21 = sbr.rel (%p19) target = $region8
    $region5: #{bottleneck_forward.2} parent=1 // loop_body
      %s23 = ssub.s32 %s18, 1
      %s24 = ssub.s32 %s18, 2
      %s25 = sadd.s32 %s18, 1
      %s26 = ssub.s32 %s18, %s25
      %p27 = scmp.eq.s32.totalorder %s26, 0
      %s29 = sadd.s32 %s28, 1
      %s30 = scalar_select %p27, %s28, %s29
      %p33 = pneg %p27
      %p34 = scmp.eq.s32.totalorder %s18, 1
      %p35 = por %p33, %p34
      %p36 = scmp.ne.s32.totalorder %s28, %s31
      %p37 = scmp.eq.s32.totalorder %s18, 0
      %p38 = por %p36, %p37
      %p39 = scmp.ne.s32.totalorder %s28, %s31
      %p40 = scmp.eq.s32.totalorder %s23, 1
      %p41 = por %p39, %p40
      %p42 = scmp.ne.s32.totalorder %s31, %s32
      %p43 = scmp.eq.s32.totalorder %s23, 0
      %p44 = por %p42, %p43
      %p45 = scmp.ne.s32.totalorder %s31, %s32
      %p46 = scmp.eq.s32.totalorder %s24, 1
      %p47 = por %p45, %p46
      %p49 = scmp.ne.s32.totalorder %s32, %s48
      %p50 = scmp.eq.s32.totalorder %s24, 0
      %p51 = por %p49, %p50
      %s53 = sadd.s32 %s52, 1
      %p56 = scmp.eq.s32.totalorder %s18, 1
      %p57 = scmp.ne.s32.totalorder %s52, %s54
      %p58 = scmp.eq.s32.totalorder %s18, 0
      %p59 = por %p57, %p58
      %p60 = scmp.ne.s32.totalorder %s52, %s54
      %p61 = scmp.eq.s32.totalorder %s23, 1
      %p62 = por %p60, %p61
      %p63 = scmp.ne.s32.totalorder %s54, %s55
      %p64 = scmp.eq.s32.totalorder %s23, 0
      %p65 = por %p63, %p64
      %p66 = scmp.ne.s32.totalorder %s54, %s55
      %p67 = scmp.eq.s32.totalorder %s24, 1
      %p68 = por %p66, %p67
      %p70 = scmp.ne.s32.totalorder %s55, %s69
      %p71 = scmp.eq.s32.totalorder %s24, 0
      %p72 = por %p70, %p71
      %s74 = sadd.s32 %s73, 1
      %p77 = scmp.eq.s32.totalorder %s18, 1
      %p78 = scmp.ne.s32.totalorder %s73, %s75
      %p79 = scmp.eq.s32.totalorder %s18, 0
      %p80 = por %p78, %p79
      %p81 = scmp.ne.s32.totalorder %s73, %s75
      %p82 = scmp.eq.s32.totalorder %s23, 1
      %p83 = por %p81, %p82
      %p84 = scmp.ne.s32.totalorder %s75, %s76
      %p85 = scmp.eq.s32.totalorder %s23, 0
      %p86 = por %p84, %p85
      %p87 = scmp.ne.s32.totalorder %s75, %s76
      %p88 = scmp.eq.s32.totalorder %s24, 1
      %p89 = por %p87, %p88
      %p91 = scmp.ne.s32.totalorder %s76, %s90
      %p92 = scmp.eq.s32.totalorder %s24, 0
      %p93 = por %p91, %p92
      %s95 = sadd.s32 %s94, 1
      %p98 = scmp.eq.s32.totalorder %s18, 1
      %p99 = scmp.ne.s32.totalorder %s94, %s96
      %p100 = scmp.eq.s32.totalorder %s18, 0
      %p101 = por %p99, %p100
      %p102 = scmp.ne.s32.totalorder %s94, %s96
      %p103 = scmp.eq.s32.totalorder %s23, 1
      %p104 = por %p102, %p103
      %p105 = scmp.ne.s32.totalorder %s96, %s97
      %p106 = scmp.eq.s32.totalorder %s23, 0
      %p107 = por %p105, %p106
      %p108 = scmp.ne.s32.totalorder %s96, %s97
      %p109 = scmp.eq.s32.totalorder %s24, 1
      %p110 = por %p108, %p109
      %p112 = scmp.ne.s32.totalorder %s97, %s111
      %p113 = scmp.eq.s32.totalorder %s24, 0
      %p114 = por %p112, %p113
      %s116 = sadd.s32 %s115, 1
      %p119 = scmp.eq.s32.totalorder %s18, 1
      %p120 = scmp.ne.s32.totalorder %s115, %s117
      %p121 = scmp.eq.s32.totalorder %s18, 0
      %p122 = por %p120, %p121
      %p123 = scmp.ne.s32.totalorder %s115, %s117
      %p124 = scmp.eq.s32.totalorder %s23, 1
      %p125 = por %p123, %p124
      %p126 = scmp.ne.s32.totalorder %s117, %s118
      %p127 = scmp.eq.s32.totalorder %s23, 0
      %p128 = por %p126, %p127
      %p129 = scmp.ne.s32.totalorder %s117, %s118
      %p130 = scmp.eq.s32.totalorder %s24, 1
      %p131 = por %p129, %p130
      %p133 = scmp.ne.s32.totalorder %s118, %s132
      %p134 = scmp.eq.s32.totalorder %s24, 0
      %p135 = por %p133, %p134
      %s137 = sadd.s32 %s136, 1
      %p140 = scmp.eq.s32.totalorder %s18, 1
      %p141 = scmp.ne.s32.totalorder %s136, %s138
      %p142 = scmp.eq.s32.totalorder %s18, 0
      %p143 = por %p141, %p142
      %p144 = scmp.ne.s32.totalorder %s136, %s138
      %p145 = scmp.eq.s32.totalorder %s23, 1
      %p146 = por %p144, %p145
      %p147 = scmp.ne.s32.totalorder %s138, %s139
      %p148 = scmp.eq.s32.totalorder %s23, 0
      %p149 = por %p147, %p148
      %p150 = scmp.ne.s32.totalorder %s138, %s139
      %p151 = scmp.eq.s32.totalorder %s24, 1
      %p152 = por %p150, %p151
      %p154 = scmp.ne.s32.totalorder %s139, %s153
      %p155 = scmp.eq.s32.totalorder %s24, 0
      %p156 = por %p154, %p155
      %s158 = sadd.s32 %s157, 1
      %p161 = scmp.eq.s32.totalorder %s18, 1
      %p162 = scmp.ne.s32.totalorder %s157, %s159
      %p163 = scmp.eq.s32.totalorder %s18, 0
      %p164 = por %p162, %p163
      %p165 = scmp.ne.s32.totalorder %s157, %s159
      %p166 = scmp.eq.s32.totalorder %s23, 1
      %p167 = por %p165, %p166
      %p168 = scmp.ne.s32.totalorder %s159, %s160
      %p169 = scmp.eq.s32.totalorder %s23, 0
      %p170 = por %p168, %p169
      %p171 = scmp.ne.s32.totalorder %s159, %s160
      %p172 = scmp.eq.s32.totalorder %s24, 1
      %p173 = por %p171, %p172
      %p175 = scmp.ne.s32.totalorder %s160, %s174
      %p176 = scmp.eq.s32.totalorder %s24, 0
      %p177 = por %p175, %p176
      %s179 = sadd.s32 %s178, 1
      %p182 = scmp.eq.s32.totalorder %s18, 1
      %p183 = scmp.ne.s32.totalorder %s178, %s180
      %p184 = scmp.eq.s32.totalorder %s18, 0
      %p185 = por %p183, %p184
      %p186 = scmp.ne.s32.totalorder %s178, %s180
      %p187 = scmp.eq.s32.totalorder %s23, 1
      %p188 = por %p186, %p187
      %p189 = scmp.ne.s32.totalorder %s180, %s181
      %p190 = scmp.eq.s32.totalorder %s23, 0
      %p191 = por %p189, %p190
      %p192 = scmp.ne.s32.totalorder %s180, %s181
      %p193 = scmp.eq.s32.totalorder %s24, 1
      %p194 = por %p192, %p193
      %p196 = scmp.ne.s32.totalorder %s181, %s195
      %p197 = scmp.eq.s32.totalorder %s24, 0
      %p198 = por %p196, %p197
      %s200 = sadd.s32 %s199, 1
      %p203 = scmp.eq.s32.totalorder %s18, 1
      %p204 = scmp.ne.s32.totalorder %s199, %s201
      %p205 = scmp.eq.s32.totalorder %s18, 0
      %p206 = por %p204, %p205
      %p207 = scmp.ne.s32.totalorder %s199, %s201
      %p208 = scmp.eq.s32.totalorder %s23, 1
      %p209 = por %p207, %p208
      %p210 = scmp.ne.s32.totalorder %s201, %s202
      %p211 = scmp.eq.s32.totalorder %s23, 0
      %p212 = por %p210, %p211
      %p213 = scmp.ne.s32.totalorder %s201, %s202
      %p214 = scmp.eq.s32.totalorder %s24, 1
      %p215 = por %p213, %p214
      %p217 = scmp.ne.s32.totalorder %s202, %s216
      %p218 = scmp.eq.s32.totalorder %s24, 0
      %p219 = por %p217, %p218
      %s220 = ssub.s32 %s18, %s25
      %p221 = scmp.eq.s32.totalorder %s220, 0
      %s223 = sadd.s32 %s222, 1
      %s224 = scalar_select %p221, %s222, %s223
      %p227 = pneg %p221
      %p228 = scmp.eq.s32.totalorder %s18, 1
      %p229 = por %p227, %p228
      %p230 = scmp.ne.s32.totalorder %s222, %s225
      %p231 = scmp.eq.s32.totalorder %s18, 0
      %p232 = por %p230, %p231
      %p233 = scmp.ne.s32.totalorder %s222, %s225
      %p234 = scmp.eq.s32.totalorder %s23, 1
      %p235 = por %p233, %p234
      %p236 = scmp.ne.s32.totalorder %s225, %s226
      %p237 = scmp.eq.s32.totalorder %s23, 0
      %p238 = por %p236, %p237
      %p239 = scmp.ne.s32.totalorder %s225, %s226
      %p240 = scmp.eq.s32.totalorder %s24, 1
      %p241 = por %p239, %p240
      %p243 = scmp.ne.s32.totalorder %s226, %s242
      %p244 = scmp.eq.s32.totalorder %s24, 0
      %p245 = por %p243, %p244
      %p246 = scmp.le.s32.totalorder 1, %s18
      %p247 = scmp.lt.s32.totalorder %s18, 3
      %p248 = pnand %p246, %p247
      %p249 = pneg %p248
      // Predicated region
      $region9: #{bottleneck_forward.2} parent=5 // pred_check
        _
      $region10: #{bottleneck_forward.2} parent=5 // pred_check_branch
        %251 = sbr.rel (%p248) target = $region12
      $region11: #{bottleneck_forward.2} parent=5 // pred_region
        %s252 = ssub.s32 %s18, 1
        // Predicated region
        $region13: #{bottleneck_forward.2} parent=11 // pred_check
          %p253 = pneg %p65
        $region14: #{bottleneck_forward.2} parent=11 // pred_check_branch
          %255 = sbr.rel (%p253) target = $region16
        $region15: #{bottleneck_forward.2} parent=11 // pred_region
          _
        $region16: #{bottleneck_forward.2} parent=11 // pred_fallthru
          _
        // Predicated region
        $region17: #{bottleneck_forward.2} parent=11 // pred_check
          %p256 = pneg %p86
        $region18: #{bottleneck_forward.2} parent=11 // pred_check_branch
          %258 = sbr.rel (%p256) target = $region20
        $region19: #{bottleneck_forward.2} parent=11 // pred_region
          _
        $region20: #{bottleneck_forward.2} parent=11 // pred_fallthru
          _
        // Predicated region
        $region21: #{bottleneck_forward.2} parent=11 // pred_check
          %p259 = pneg %p107
        $region22: #{bottleneck_forward.2} parent=11 // pred_check_branch
          %261 = sbr.rel (%p259) target = $region24
        $region23: #{bottleneck_forward.2} parent=11 // pred_region
          _
        $region24: #{bottleneck_forward.2} parent=11 // pred_fallthru
          _
        // Predicated region
        $region25: #{bottleneck_forward.2} parent=11 // pred_check
          %p262 = pneg %p128
        $region26: #{bottleneck_forward.2} parent=11 // pred_check_branch
          %264 = sbr.rel (%p262) target = $region28
        $region27: #{bottleneck_forward.2} parent=11 // pred_region
          _
        $region28: #{bottleneck_forward.2} parent=11 // pred_fallthru
          _
        // Predicated region
        $region29: #{bottleneck_forward.2} parent=11 // pred_check
          %p265 = pneg %p149
        $region30: #{bottleneck_forward.2} parent=11 // pred_check_branch
          %267 = sbr.rel (%p265) target = $region32
        $region31: #{bottleneck_forward.2} parent=11 // pred_region
          _
        $region32: #{bottleneck_forward.2} parent=11 // pred_fallthru
          _
        // Predicated region
        $region33: #{bottleneck_forward.2} parent=11 // pred_check
          %p268 = pneg %p170
        $region34: #{bottleneck_forward.2} parent=11 // pred_check_branch
          %270 = sbr.rel (%p268) target = $region36
        $region35: #{bottleneck_forward.2} parent=11 // pred_region
          _
        $region36: #{bottleneck_forward.2} parent=11 // pred_fallthru
          _
        // Predicated region
        $region37: #{bottleneck_forward.2} parent=11 // pred_check
          %p271 = pneg %p191
        $region38: #{bottleneck_forward.2} parent=11 // pred_check_branch
          %273 = sbr.rel (%p271) target = $region40
        $region39: #{bottleneck_forward.2} parent=11 // pred_region
          _
        $region40: #{bottleneck_forward.2} parent=11 // pred_fallthru
          _
        // Predicated region
        $region41: #{bottleneck_forward.2} parent=11 // pred_check
          %p274 = pneg %p212
        $region42: #{bottleneck_forward.2} parent=11 // pred_check_branch
          %276 = sbr.rel (%p274) target = $region44
        $region43: #{bottleneck_forward.2} parent=11 // pred_region
          _
        $region44: #{bottleneck_forward.2} parent=11 // pred_fallthru
          _
      $region12: #{bottleneck_forward.2} parent=5 // pred_fallthru
        _
      %p277 = scmp.lt.s32.totalorder %s18, 2
      // Predicated region
      $region45: #{bottleneck_forward.2} parent=5 // pred_check
        %p278 = pneg %p277
      $region46: #{bottleneck_forward.2} parent=5 // pred_check_branch
        %280 = sbr.rel (%p278) target = $region48
      $region47: #{bottleneck_forward.2} parent=5 // pred_region
        // Predicated region
        $region49: #{bottleneck_forward.2} parent=47 // pred_check
          %p281 = pneg %p38
        $region50: #{bottleneck_forward.2} parent=47 // pred_check_branch
          %283 = sbr.rel (%p281) target = $region52
        $region51: #{bottleneck_forward.2} parent=47 // pred_region
          %s284 = sand.u32 %s28, 1
          %s285 = scalar_lea.sflag [#allocation3], %s284
          %s286 = sand.u32 %s28, 1
          %s287 = smul.addr %s286, 256
          %s288 = scalar_lea.vmem [#allocation2], %s287
          %s289 = smul.u32 32, %s18
          %s291 = ssub.s32 4096, 4096
          %292 = vsyncadd %s285, %s291
          %s293 = smul.addr %s289, 128
          %s294 = scalar_lea.hbm %s0, %s293
          %s295 = sshll.u32 %s288, 4
          %s296 = int_to_ptr.vmem [resolvable:$true] %s295
          %301 = dma.hbm_to_vmem [thread:$0]  %s294, 4096, %s296, %s285, 128, 128, 8
        $region52: #{bottleneck_forward.2} parent=47 // pred_fallthru
          _
      $region48: #{bottleneck_forward.2} parent=5 // pred_fallthru
        _
      %p302 = scmp.le.s32.totalorder 1, %s18
      %p303 = scmp.lt.s32.totalorder %s18, 3
      %p304 = pnand %p302, %p303
      %p305 = pneg %p304
      // Predicated region
      $region53: #{bottleneck_forward.2} parent=5 // pred_check
        _
      $region54: #{bottleneck_forward.2} parent=5 // pred_check_branch
        %307 = sbr.rel (%p304) target = $region56
      $region55: #{bottleneck_forward.2} parent=5 // pred_region
        %s308 = ssub.s32 %s18, 1
        %s309 = sand.u32 %s31, 1
        %s310 = scalar_lea.sflag [#allocation3], %s309
        %s311 = sand.u32 %s31, 1
        %s312 = smul.addr %s311, 256
        %s313 = scalar_lea.vmem [#allocation2], %s312
        // Predicated region
        $region57: #{bottleneck_forward.2} parent=55 // pred_check
          %p314 = pneg %p44
        $region58: #{bottleneck_forward.2} parent=55 // pred_check_branch
          %316 = sbr.rel (%p314) target = $region60
        $region59: #{bottleneck_forward.2} parent=55 // pred_region
          %317 = dma.done %s310, 4096
        $region60: #{bottleneck_forward.2} parent=55 // pred_fallthru
          _
        %s318 = sand.u32 %s31, 1
        %s319 = scalar_lea.sflag [#allocation3], %s318
        %s320 = sand.u32 %s31, 1
        %s321 = smul.addr %s320, 256
        %s322 = scalar_lea.vmem [#allocation2], %s321
        %p323 = pneg %p44
        %p324 = pneg %p41
        %p325 = pneg %p65
        %p326 = pneg %p62
        %p327 = pneg %p86
        %p328 = pneg %p83
        %p329 = pneg %p107
        %p330 = pneg %p104
        %p331 = pneg %p128
        %p332 = pneg %p125
        %p333 = pneg %p149
        %p334 = pneg %p146
        %p335 = pneg %p170
        %p336 = pneg %p167
        %p337 = pneg %p191
        %p338 = pneg %p188
        %p339 = pneg %p212
        %p340 = pneg %p209
        %p341 = pneg %p238
        %p342 = pneg %p235
        %s343 = smul.u32 32, %s23
        %p344 = scmp.lt.s32.totalorder %s343, 63
        %s345 = scalar_select %p344, %s343, 63
        %s346 = smul.addr %s345, 4
        %s347 = scalar_lea.vmem %s9, %s346
        %s348 = smul.u32 32, %s23
        %s349 = smul.u32 32, %s23
        %p350 = scmp.lt.s32.totalorder %s349, 63
        %s351 = scalar_select %p350, %s349, 63
        %s352 = smul.addr %s351, 4
        %s353 = scalar_lea.vmem %s9, %s352
        %s354 = smul.u32 32, %s23
        %v356 = vld [vmem:[%s313] sm:$0xff]
        %v357 = vld [vmem:[%s313 + $0x8] sm:$0xff]
        %v358 = vld [vmem:[%s313 + $0x10] sm:$0xff]
        %v359 = vld [vmem:[%s313 + $0x18] sm:$0xff]
        %v360 = vld [vmem:[%s313 + $0x20] sm:$0xff]
        %v361 = vld [vmem:[%s313 + $0x28] sm:$0xff]
        %v362 = vld [vmem:[%s313 + $0x30] sm:$0xff]
        %v363 = vld [vmem:[%s313 + $0x38] sm:$0xff]
        %v364 = vld [vmem:[%s313 + $0x40] sm:$0xff]
        %v365 = vld [vmem:[%s313 + $0x48] sm:$0xff]
        %v366 = vld [vmem:[%s313 + $0x50] sm:$0xff]
        %v367 = vld [vmem:[%s313 + $0x58] sm:$0xff]
        %v368 = vld [vmem:[%s313 + $0x60] sm:$0xff]
        %v369 = vld [vmem:[%s313 + $0x68] sm:$0xff]
        %v370 = vld [vmem:[%s313 + $0x70] sm:$0xff]
        %v371 = vld [vmem:[%s313 + $0x78] sm:$0xff]
        %v372 = vld [vmem:[%s313 + $0x80] sm:$0xff]
        %v373 = vld [vmem:[%s313 + $0x88] sm:$0xff]
        %v374 = vld [vmem:[%s313 + $0x90] sm:$0xff]
        %v375 = vld [vmem:[%s313 + $0x98] sm:$0xff]
        %v376 = vld [vmem:[%s313 + $0xa0] sm:$0xff]
        %v377 = vld [vmem:[%s313 + $0xa8] sm:$0xff]
        %v378 = vld [vmem:[%s313 + $0xb0] sm:$0xff]
        %v379 = vld [vmem:[%s313 + $0xb8] sm:$0xff]
        %v380 = vld [vmem:[%s313 + $0xc0] sm:$0xff]
        %v381 = vld [vmem:[%s313 + $0xc8] sm:$0xff]
        %v382 = vld [vmem:[%s313 + $0xd0] sm:$0xff]
        %v383 = vld [vmem:[%s313 + $0xd8] sm:$0xff]
        %v384 = vld [vmem:[%s313 + $0xe0] sm:$0xff]
        %v385 = vld [vmem:[%s313 + $0xe8] sm:$0xff]
        %v386 = vld [vmem:[%s313 + $0xf0] sm:$0xff]
        %v387 = vld [vmem:[%s313 + $0xf8] sm:$0xff]
        %v388 = vld [vmem:[%s1] sm:$0x1]
        %v390 = vlaneseq
        %v391 = vshrl.u32 %v390, 7
        %v392 = vsub.s32 0, %v391
        %v393 = vrot.slane %v388, %v392
        %v395 = vmul.f32 %v356, %v393
        %v396 = vmul.f32 %v357, %v393
        %v397 = vmul.f32 %v358, %v393
        %v398 = vmul.f32 %v359, %v393
        %v399 = vmul.f32 %v360, %v393
        %v400 = vmul.f32 %v361, %v393
        %v401 = vmul.f32 %v362, %v393
        %v402 = vmul.f32 %v363, %v393
        %v403 = vmul.f32 %v364, %v393
        %v404 = vmul.f32 %v365, %v393
        %v405 = vmul.f32 %v366, %v393
        %v406 = vmul.f32 %v367, %v393
        %v407 = vmul.f32 %v368, %v393
        %v408 = vmul.f32 %v369, %v393
        %v409 = vmul.f32 %v370, %v393
        %v410 = vmul.f32 %v371, %v393
        %v411 = vmul.f32 %v372, %v393
        %v412 = vmul.f32 %v373, %v393
        %v413 = vmul.f32 %v374, %v393
        %v414 = vmul.f32 %v375, %v393
        %v415 = vmul.f32 %v376, %v393
        %v416 = vmul.f32 %v377, %v393
        %v417 = vmul.f32 %v378, %v393
        %v418 = vmul.f32 %v379, %v393
        %v419 = vmul.f32 %v380, %v393
        %v420 = vmul.f32 %v381, %v393
        %v421 = vmul.f32 %v382, %v393
        %v422 = vmul.f32 %v383, %v393
        %v423 = vmul.f32 %v384, %v393
        %v424 = vmul.f32 %v385, %v393
        %v425 = vmul.f32 %v386, %v393
        %v426 = vmul.f32 %v387, %v393
        %v427 = vld [vmem:[%s2] sm:$0x1]
        %v429 = vlaneseq
        %v430 = vshrl.u32 %v429, 7
        %v431 = vsub.s32 0, %v430
        %v432 = vrot.slane %v427, %v431
        %v434 = vadd.f32 %v395, %v432
        %v435 = vadd.f32 %v396, %v432
        %v436 = vadd.f32 %v397, %v432
        %v437 = vadd.f32 %v398, %v432
        %v438 = vadd.f32 %v399, %v432
        %v439 = vadd.f32 %v400, %v432
        %v440 = vadd.f32 %v401, %v432
        %v441 = vadd.f32 %v402, %v432
        %v442 = vadd.f32 %v403, %v432
        %v443 = vadd.f32 %v404, %v432
        %v444 = vadd.f32 %v405, %v432
        %v445 = vadd.f32 %v406, %v432
        %v446 = vadd.f32 %v407, %v432
        %v447 = vadd.f32 %v408, %v432
        %v448 = vadd.f32 %v409, %v432
        %v449 = vadd.f32 %v410, %v432
        %v450 = vadd.f32 %v411, %v432
        %v451 = vadd.f32 %v412, %v432
        %v452 = vadd.f32 %v413, %v432
        %v453 = vadd.f32 %v414, %v432
        %v454 = vadd.f32 %v415, %v432
        %v455 = vadd.f32 %v416, %v432
        %v456 = vadd.f32 %v417, %v432
        %v457 = vadd.f32 %v418, %v432
        %v458 = vadd.f32 %v419, %v432
        %v459 = vadd.f32 %v420, %v432
        %v460 = vadd.f32 %v421, %v432
        %v461 = vadd.f32 %v422, %v432
        %v462 = vadd.f32 %v423, %v432
        %v463 = vadd.f32 %v424, %v432
        %v464 = vadd.f32 %v425, %v432
        %v465 = vadd.f32 %v426, %v432
        %v466 = vld [vmem:[%s3] sm:$0x1]
        %v467 = vmax.f32 %v434, 0.0
        %v468 = vmax.f32 %v435, 0.0
        %v469 = vmax.f32 %v436, 0.0
        %v470 = vmax.f32 %v437, 0.0
        %v471 = vmax.f32 %v438, 0.0
        %v472 = vmax.f32 %v439, 0.0
        %v473 = vmax.f32 %v440, 0.0
        %v474 = vmax.f32 %v441, 0.0
        %v475 = vmax.f32 %v442, 0.0
        %v476 = vmax.f32 %v443, 0.0
        %v477 = vmax.f32 %v444, 0.0
        %v478 = vmax.f32 %v445, 0.0
        %v479 = vmax.f32 %v446, 0.0
        %v480 = vmax.f32 %v447, 0.0
        %v481 = vmax.f32 %v448, 0.0
        %v482 = vmax.f32 %v449, 0.0
        %v483 = vmax.f32 %v450, 0.0
        %v484 = vmax.f32 %v451, 0.0
        %v485 = vmax.f32 %v452, 0.0
        %v486 = vmax.f32 %v453, 0.0
        %v487 = vmax.f32 %v454, 0.0
        %v488 = vmax.f32 %v455, 0.0
        %v489 = vmax.f32 %v456, 0.0
        %v490 = vmax.f32 %v457, 0.0
        %v491 = vmax.f32 %v458, 0.0
        %v492 = vmax.f32 %v459, 0.0
        %v493 = vmax.f32 %v460, 0.0
        %v494 = vmax.f32 %v461, 0.0
        %v495 = vmax.f32 %v462, 0.0
        %v496 = vmax.f32 %v463, 0.0
        %v497 = vmax.f32 %v464, 0.0
        %v498 = vmax.f32 %v465, 0.0
        %v499 = vmin.f32 %v434, 0.0
        %v500 = vmin.f32 %v435, 0.0
        %v501 = vmin.f32 %v436, 0.0
        %v502 = vmin.f32 %v437, 0.0
        %v503 = vmin.f32 %v438, 0.0
        %v504 = vmin.f32 %v439, 0.0
        %v505 = vmin.f32 %v440, 0.0
        %v506 = vmin.f32 %v441, 0.0
        %v507 = vmin.f32 %v442, 0.0
        %v508 = vmin.f32 %v443, 0.0
        %v509 = vmin.f32 %v444, 0.0
        %v510 = vmin.f32 %v445, 0.0
        %v511 = vmin.f32 %v446, 0.0
        %v512 = vmin.f32 %v447, 0.0
        %v513 = vmin.f32 %v448, 0.0
        %v514 = vmin.f32 %v449, 0.0
        %v515 = vmin.f32 %v450, 0.0
        %v516 = vmin.f32 %v451, 0.0
        %v517 = vmin.f32 %v452, 0.0
        %v518 = vmin.f32 %v453, 0.0
        %v519 = vmin.f32 %v454, 0.0
        %v520 = vmin.f32 %v455, 0.0
        %v521 = vmin.f32 %v456, 0.0
        %v522 = vmin.f32 %v457, 0.0
        %v523 = vmin.f32 %v458, 0.0
        %v524 = vmin.f32 %v459, 0.0
        %v525 = vmin.f32 %v460, 0.0
        %v526 = vmin.f32 %v461, 0.0
        %v527 = vmin.f32 %v462, 0.0
        %v528 = vmin.f32 %v463, 0.0
        %v529 = vmin.f32 %v464, 0.0
        %v530 = vmin.f32 %v465, 0.0
        %v532 = vlaneseq
        %v533 = vshrl.u32 %v532, 7
        %v534 = vsub.s32 0, %v533
        %v535 = vrot.slane %v466, %v534
        %v537 = vmul.f32 %v535, %v499
        %v538 = vmul.f32 %v535, %v500
        %v539 = vmul.f32 %v535, %v501
        %v540 = vmul.f32 %v535, %v502
        %v541 = vmul.f32 %v535, %v503
        %v542 = vmul.f32 %v535, %v504
        %v543 = vmul.f32 %v535, %v505
        %v544 = vmul.f32 %v535, %v506
        %v545 = vmul.f32 %v535, %v507
        %v546 = vmul.f32 %v535, %v508
        %v547 = vmul.f32 %v535, %v509
        %v548 = vmul.f32 %v535, %v510
        %v549 = vmul.f32 %v535, %v511
        %v550 = vmul.f32 %v535, %v512
        %v551 = vmul.f32 %v535, %v513
        %v552 = vmul.f32 %v535, %v514
        %v553 = vmul.f32 %v535, %v515
        %v554 = vmul.f32 %v535, %v516
        %v555 = vmul.f32 %v535, %v517
        %v556 = vmul.f32 %v535, %v518
        %v557 = vmul.f32 %v535, %v519
        %v558 = vmul.f32 %v535, %v520
        %v559 = vmul.f32 %v535, %v521
        %v560 = vmul.f32 %v535, %v522
        %v561 = vmul.f32 %v535, %v523
        %v562 = vmul.f32 %v535, %v524
        %v563 = vmul.f32 %v535, %v525
        %v564 = vmul.f32 %v535, %v526
        %v565 = vmul.f32 %v535, %v527
        %v566 = vmul.f32 %v535, %v528
        %v567 = vmul.f32 %v535, %v529
        %v568 = vmul.f32 %v535, %v530
        %v569 = vadd.f32 %v467, %v537
        %v570 = vadd.f32 %v468, %v538
        %v571 = vadd.f32 %v469, %v539
        %v572 = vadd.f32 %v470, %v540
        %v573 = vadd.f32 %v471, %v541
        %v574 = vadd.f32 %v472, %v542
        %v575 = vadd.f32 %v473, %v543
        %v576 = vadd.f32 %v474, %v544
        %v577 = vadd.f32 %v475, %v545
        %v578 = vadd.f32 %v476, %v546
        %v579 = vadd.f32 %v477, %v547
        %v580 = vadd.f32 %v478, %v548
        %v581 = vadd.f32 %v479, %v549
        %v582 = vadd.f32 %v480, %v550
        %v583 = vadd.f32 %v481, %v551
        %v584 = vadd.f32 %v482, %v552
        %v585 = vadd.f32 %v483, %v553
        %v586 = vadd.f32 %v484, %v554
        %v587 = vadd.f32 %v485, %v555
        %v588 = vadd.f32 %v486, %v556
        %v589 = vadd.f32 %v487, %v557
        %v590 = vadd.f32 %v488, %v558
        %v591 = vadd.f32 %v489, %v559
        %v592 = vadd.f32 %v490, %v560
        %v593 = vadd.f32 %v491, %v561
        %v594 = vadd.f32 %v492, %v562
        %v595 = vadd.f32 %v493, %v563
        %v596 = vadd.f32 %v494, %v564
        %v597 = vadd.f32 %v495, %v565
        %v598 = vadd.f32 %v496, %v566
        %v599 = vadd.f32 %v497, %v567
        %v600 = vadd.f32 %v498, %v568
        %v601 = vpack.c.bf16 %v570, %v569
        %v602 = vpack.c.bf16 %v572, %v571
        %v603 = vpack.c.bf16 %v574, %v573
        %v604 = vpack.c.bf16 %v576, %v575
        %v605 = vpack.c.bf16 %v578, %v577
        %v606 = vpack.c.bf16 %v580, %v579
        %v607 = vpack.c.bf16 %v582, %v581
        %v608 = vpack.c.bf16 %v584, %v583
        %v609 = vpack.c.bf16 %v586, %v585
        %v610 = vpack.c.bf16 %v588, %v587
        %v611 = vpack.c.bf16 %v590, %v589
        %v612 = vpack.c.bf16 %v592, %v591
        %v613 = vpack.c.bf16 %v594, %v593
        %v614 = vpack.c.bf16 %v596, %v595
        %v615 = vpack.c.bf16 %v598, %v597
        %v616 = vpack.c.bf16 %v600, %v599
        %v617 = vld [vmem:[%s4] sm:$0xf]
        %v618 = vld [vmem:[%s4 + $0x4] sm:$0xf]
        %v619 = vld [vmem:[%s4 + $0x8] sm:$0xf]
        %v620 = vld [vmem:[%s4 + $0xc] sm:$0xf]
        %v621 = vld [vmem:[%s4 + $0x10] sm:$0xf]
        %v622 = vld [vmem:[%s4 + $0x14] sm:$0xf]
        %v623 = vld [vmem:[%s4 + $0x18] sm:$0xf]
        %v624 = vld [vmem:[%s4 + $0x1c] sm:$0xf]
        %v625 = vld [vmem:[%s5] sm:$0x1]
        %v627 = vlaneseq
        %v628 = vshrl.u32 %v627, 7
        %v629 = vsub.s32 0, %v628
        %v630 = vrot.slane %v625, %v629
        %v640 = vunpack.c.l.b16 %v617
        %v641 = vunpack.c.l.b16 %v618
        %v642 = vunpack.c.l.b16 %v619
        %v643 = vunpack.c.l.b16 %v620
        %v644 = vunpack.c.l.b16 %v621
        %v645 = vunpack.c.l.b16 %v622
        %v646 = vunpack.c.l.b16 %v623
        %v647 = vunpack.c.l.b16 %v624
        %v648 = vpack.c.b16 %v641, %v640
        %v649 = vpack.c.b16 %v643, %v642
        %v650 = vpack.c.b16 %v645, %v644
        %v651 = vpack.c.b16 %v647, %v646
        %vm656 = vcmask 523264
        %v658 = vsel %vm656, %v601, 0
        %v661 = vsel %vm656, %v602, 0
        %v664 = vsel %vm656, %v603, 0
        %v667 = vsel %vm656, %v604, 0
        %v670 = vsel %vm656, %v605, 0
        %v673 = vsel %vm656, %v606, 0
        %v676 = vsel %vm656, %v607, 0
        %v679 = vsel %vm656, %v608, 0
        %v682 = vsel %vm656, %v609, 0
        %v685 = vsel %vm656, %v610, 0
        %v688 = vsel %vm656, %v611, 0
        %v691 = vsel %vm656, %v612, 0
        %v694 = vsel %vm656, %v613, 0
        %v697 = vsel %vm656, %v614, 0
        %v700 = vsel %vm656, %v615, 0
        %v703 = vsel %vm656, %v616, 0
        %705 = vmatprep.subr.bf16.mxu0 0
        %706 = vmatpush1.bf16.msra.mxu0 %v648
        %707 = vmatprep.subr.bf16.mxu0 0
        %708 = vmatpush1.bf16.msra.mxu0 %v649
        %709 = vmatprep.subr.bf16.mxu0 0
        %710 = vmatpush1.bf16.msra.mxu0 %v650
        %711 = vmatprep.subr.bf16.mxu0 0
        %712 = vmatpush1.bf16.msra.mxu0 %v651
        %713 = vmatprep.subr.bf16.mxu0 0
        %714 = vmatpush1.bf16.msra.mxu0 0
        %715 = vmatprep.subr.bf16.mxu0 0
        %716 = vmatpush1.bf16.msra.mxu0 0
        %717 = vmatprep.subr.bf16.mxu0 0
        %718 = vmatpush1.bf16.msra.mxu0 0
        %719 = vmatprep.subr.bf16.mxu0 0
        %720 = vmatpush1.bf16.msra.mxu0 0
        %721 = vmatprep.subr.bf16.mxu0 0
        %722 = vmatpush1.bf16.msra.mxu0 0
        %723 = vmatprep.subr.bf16.mxu0 0
        %724 = vmatpush1.bf16.msra.mxu0 0
        %725 = vmatprep.subr.bf16.mxu0 0
        %726 = vmatpush1.bf16.msra.mxu0 0
        %727 = vmatprep.subr.bf16.mxu0 0
        %728 = vmatpush1.bf16.msra.mxu0 0
        %729 = vmatprep.subr.bf16.mxu0 0
        %730 = vmatpush1.bf16.msra.mxu0 0
        %731 = vmatprep.subr.bf16.mxu0 0
        %732 = vmatpush1.bf16.msra.mxu0 0
        %733 = vmatprep.subr.bf16.mxu0 0
        %734 = vmatpush1.bf16.msra.mxu0 0
        %735 = vmatprep.subr.bf16.mxu0 0
        %736 = vmatpush1.bf16.msra.mxu0 0
        %737 = vmatprep.mubr.bf16.mxu0 0
        %738 = vmatmul.mubr.bf16.gmra.mrb[0].mxu0 %v658
        %v739 = vpop.f32.mrb[0].mxu0
        %v740 = vadd.f32 %v630, %v739
        %v741 = vpop.f32.mrb[0].mxu0
        %v742 = vpop.f32.mrb[0].mxu0
        %v743 = vadd.f32 %v630, %v742
        %v744 = vpop.f32.mrb[0].mxu0
        %745 = vmatprep.mubr.bf16.mxu0 0
        %746 = vmatmul.mubr.bf16.gmra.mrb[0].mxu0 %v661
        %v747 = vpop.f32.mrb[0].mxu0
        %v748 = vadd.f32 %v630, %v747
        %v749 = vpop.f32.mrb[0].mxu0
        %v750 = vpop.f32.mrb[0].mxu0
        %v751 = vadd.f32 %v630, %v750
        %v752 = vpop.f32.mrb[0].mxu0
        %753 = vmatprep.mubr.bf16.mxu0 0
        %754 = vmatmul.mubr.bf16.gmra.mrb[0].mxu0 %v664
        %v755 = vpop.f32.mrb[0].mxu0
        %v756 = vadd.f32 %v630, %v755
        %v757 = vpop.f32.mrb[0].mxu0
        %v758 = vpop.f32.mrb[0].mxu0
        %v759 = vadd.f32 %v630, %v758
        %v760 = vpop.f32.mrb[0].mxu0
        %761 = vmatprep.mubr.bf16.mxu0 0
        %762 = vmatmul.mubr.bf16.gmra.mrb[0].mxu0 %v667
        %v763 = vpop.f32.mrb[0].mxu0
        %v764 = vadd.f32 %v630, %v763
        %v765 = vpop.f32.mrb[0].mxu0
        %v766 = vpop.f32.mrb[0].mxu0
        %v767 = vadd.f32 %v630, %v766
        %v768 = vpop.f32.mrb[0].mxu0
        %769 = vmatprep.mubr.bf16.mxu0 0
        %770 = vmatmul.mubr.bf16.gmra.mrb[0].mxu0 %v670
        %v771 = vpop.f32.mrb[0].mxu0
        %v772 = vadd.f32 %v630, %v771
        %v773 = vpop.f32.mrb[0].mxu0
        %v774 = vpop.f32.mrb[0].mxu0
        %v775 = vadd.f32 %v630, %v774
        %v776 = vpop.f32.mrb[0].mxu0
        %777 = vmatprep.mubr.bf16.mxu0 0
        %778 = vmatmul.mubr.bf16.gmra.mrb[0].mxu0 %v673
        %v779 = vpop.f32.mrb[0].mxu0
        %v780 = vadd.f32 %v630, %v779
        %v781 = vpop.f32.mrb[0].mxu0
        %v782 = vpop.f32.mrb[0].mxu0
        %v783 = vadd.f32 %v630, %v782
        %v784 = vpop.f32.mrb[0].mxu0
        %785 = vmatprep.mubr.bf16.mxu0 0
        %786 = vmatmul.mubr.bf16.gmra.mrb[0].mxu0 %v676
        %v787 = vpop.f32.mrb[0].mxu0
        %v788 = vadd.f32 %v630, %v787
        %v789 = vpop.f32.mrb[0].mxu0
        %v790 = vpop.f32.mrb[0].mxu0
        %v791 = vadd.f32 %v630, %v790
        %v792 = vpop.f32.mrb[0].mxu0
        %793 = vmatprep.mubr.bf16.mxu0 0
        %794 = vmatmul.mubr.bf16.gmra.mrb[0].mxu0 %v679
        %v795 = vpop.f32.mrb[0].mxu0
        %v796 = vadd.f32 %v630, %v795
        %v797 = vpop.f32.mrb[0].mxu0
        %v798 = vpop.f32.mrb[0].mxu0
        %v799 = vadd.f32 %v630, %v798
        %v800 = vpop.f32.mrb[0].mxu0
        %801 = vmatprep.mubr.bf16.mxu0 0
        %802 = vmatmul.mubr.bf16.gmra.mrb[0].mxu0 %v682
        %v803 = vpop.f32.mrb[0].mxu0
        %v804 = vadd.f32 %v630, %v803
        %v805 = vpop.f32.mrb[0].mxu0
        %v806 = vpop.f32.mrb[0].mxu0
        %v807 = vadd.f32 %v630, %v806
        %v808 = vpop.f32.mrb[0].mxu0
        %809 = vmatprep.mubr.bf16.mxu0 0
        %810 = vmatmul.mubr.bf16.gmra.mrb[0].mxu0 %v685
        %v811 = vpop.f32.mrb[0].mxu0
        %v812 = vadd.f32 %v630, %v811
        %v813 = vpop.f32.mrb[0].mxu0
        %v814 = vpop.f32.mrb[0].mxu0
        %v815 = vadd.f32 %v630, %v814
        %v816 = vpop.f32.mrb[0].mxu0
        %817 = vmatprep.mubr.bf16.mxu0 0
        %818 = vmatmul.mubr.bf16.gmra.mrb[0].mxu0 %v688
        %v819 = vpop.f32.mrb[0].mxu0
        %v820 = vadd.f32 %v630, %v819
        %v821 = vpop.f32.mrb[0].mxu0
        %v822 = vpop.f32.mrb[0].mxu0
        %v823 = vadd.f32 %v630, %v822
        %v824 = vpop.f32.mrb[0].mxu0
        %825 = vmatprep.mubr.bf16.mxu0 0
        %826 = vmatmul.mubr.bf16.gmra.mrb[0].mxu0 %v691
        %v827 = vpop.f32.mrb[0].mxu0
        %v828 = vadd.f32 %v630, %v827
        %v829 = vpop.f32.mrb[0].mxu0
        %v830 = vpop.f32.mrb[0].mxu0
        %v831 = vadd.f32 %v630, %v830
        %v832 = vpop.f32.mrb[0].mxu0
        %833 = vmatprep.mubr.bf16.mxu0 0
        %834 = vmatmul.mubr.bf16.gmra.mrb[0].mxu0 %v694
        %v835 = vpop.f32.mrb[0].mxu0
        %v836 = vadd.f32 %v630, %v835
        %v837 = vpop.f32.mrb[0].mxu0
        %v838 = vpop.f32.mrb[0].mxu0
        %v839 = vadd.f32 %v630, %v838
        %v840 = vpop.f32.mrb[0].mxu0
        %841 = vmatprep.mubr.bf16.mxu0 0
        %842 = vmatmul.mubr.bf16.gmra.mrb[0].mxu0 %v697
        %v843 = vpop.f32.mrb[0].mxu0
        %v844 = vadd.f32 %v630, %v843
        %v845 = vpop.f32.mrb[0].mxu0
        %v846 = vpop.f32.mrb[0].mxu0
        %v847 = vadd.f32 %v630, %v846
        %v848 = vpop.f32.mrb[0].mxu0
        %849 = vmatprep.mubr.bf16.mxu0 0
        %850 = vmatmul.mubr.bf16.gmra.mrb[0].mxu0 %v700
        %v851 = vpop.f32.mrb[0].mxu0
        %v852 = vadd.f32 %v630, %v851
        %v853 = vpop.f32.mrb[0].mxu0
        %v854 = vpop.f32.mrb[0].mxu0
        %v855 = vadd.f32 %v630, %v854
        %v856 = vpop.f32.mrb[0].mxu0
        %857 = vmatprep.mubr.bf16.mxu0 0
        %858 = vmatmul.mubr.bf16.gmra.mrb[0].mxu0 %v703
        %v859 = vpop.f32.mrb[0].mxu0
        %v860 = vadd.f32 %v630, %v859
        %v861 = vpop.f32.mrb[0].mxu0
        %v862 = vpop.f32.mrb[0].mxu0
        %v863 = vadd.f32 %v630, %v862
        %v864 = vpop.f32.mrb[0].mxu0
        %865 = vdwg.mxu0
        %v866 = vld [vmem:[%s6] sm:$0x1]
        %v868 = vlaneseq
        %v869 = vshrl.u32 %v868, 7
        %v870 = vsub.s32 0, %v869
        %v871 = vrot.slane %v866, %v870
        %v873 = vmul.f32 %v740, %v871
        %v874 = vmul.f32 %v743, %v871
        %v875 = vmul.f32 %v748, %v871
        %v876 = vmul.f32 %v751, %v871
        %v877 = vmul.f32 %v756, %v871
        %v878 = vmul.f32 %v759, %v871
        %v879 = vmul.f32 %v764, %v871
        %v880 = vmul.f32 %v767, %v871
        %v881 = vmul.f32 %v772, %v871
        %v882 = vmul.f32 %v775, %v871
        %v883 = vmul.f32 %v780, %v871
        %v884 = vmul.f32 %v783, %v871
        %v885 = vmul.f32 %v788, %v871
        %v886 = vmul.f32 %v791, %v871
        %v887 = vmul.f32 %v796, %v871
        %v888 = vmul.f32 %v799, %v871
        %v889 = vmul.f32 %v804, %v871
        %v890 = vmul.f32 %v807, %v871
        %v891 = vmul.f32 %v812, %v871
        %v892 = vmul.f32 %v815, %v871
        %v893 = vmul.f32 %v820, %v871
        %v894 = vmul.f32 %v823, %v871
        %v895 = vmul.f32 %v828, %v871
        %v896 = vmul.f32 %v831, %v871
        %v897 = vmul.f32 %v836, %v871
        %v898 = vmul.f32 %v839, %v871
        %v899 = vmul.f32 %v844, %v871
        %v900 = vmul.f32 %v847, %v871
        %v901 = vmul.f32 %v852, %v871
        %v902 = vmul.f32 %v855, %v871
        %v903 = vmul.f32 %v860, %v871
        %v904 = vmul.f32 %v863, %v871
        %v905 = vld [vmem:[%s7] sm:$0x1]
        %v907 = vlaneseq
        %v908 = vshrl.u32 %v907, 7
        %v909 = vsub.s32 0, %v908
        %v910 = vrot.slane %v905, %v909
        %v912 = vadd.f32 %v873, %v910
        %v913 = vadd.f32 %v874, %v910
        %v914 = vadd.f32 %v875, %v910
        %v915 = vadd.f32 %v876, %v910
        %v916 = vadd.f32 %v877, %v910
        %v917 = vadd.f32 %v878, %v910
        %v918 = vadd.f32 %v879, %v910
        %v919 = vadd.f32 %v880, %v910
        %v920 = vadd.f32 %v881, %v910
        %v921 = vadd.f32 %v882, %v910
        %v922 = vadd.f32 %v883, %v910
        %v923 = vadd.f32 %v884, %v910
        %v924 = vadd.f32 %v885, %v910
        %v925 = vadd.f32 %v886, %v910
        %v926 = vadd.f32 %v887, %v910
        %v927 = vadd.f32 %v888, %v910
        %v928 = vadd.f32 %v889, %v910
        %v929 = vadd.f32 %v890, %v910
        %v930 = vadd.f32 %v891, %v910
        %v931 = vadd.f32 %v892, %v910
        %v932 = vadd.f32 %v893, %v910
        %v933 = vadd.f32 %v894, %v910
        %v934 = vadd.f32 %v895, %v910
        %v935 = vadd.f32 %v896, %v910
        %v936 = vadd.f32 %v897, %v910
        %v937 = vadd.f32 %v898, %v910
        %v938 = vadd.f32 %v899, %v910
        %v939 = vadd.f32 %v900, %v910
        %v940 = vadd.f32 %v901, %v910
        %v941 = vadd.f32 %v902, %v910
        %v942 = vadd.f32 %v903, %v910
        %v943 = vadd.f32 %v904, %v910
        %v944 = vld [vmem:[%s8] sm:$0x1]
        %v945 = vmax.f32 %v912, 0.0
        %v946 = vmax.f32 %v913, 0.0
        %v947 = vmax.f32 %v914, 0.0
        %v948 = vmax.f32 %v915, 0.0
        %v949 = vmax.f32 %v916, 0.0
        %v950 = vmax.f32 %v917, 0.0
        %v951 = vmax.f32 %v918, 0.0
        %v952 = vmax.f32 %v919, 0.0
        %v953 = vmax.f32 %v920, 0.0
        %v954 = vmax.f32 %v921, 0.0
        %v955 = vmax.f32 %v922, 0.0
        %v956 = vmax.f32 %v923, 0.0
        %v957 = vmax.f32 %v924, 0.0
        %v958 = vmax.f32 %v925, 0.0
        %v959 = vmax.f32 %v926, 0.0
        %v960 = vmax.f32 %v927, 0.0
        %v961 = vmax.f32 %v928, 0.0
        %v962 = vmax.f32 %v929, 0.0
        %v963 = vmax.f32 %v930, 0.0
        %v964 = vmax.f32 %v931, 0.0
        %v965 = vmax.f32 %v932, 0.0
        %v966 = vmax.f32 %v933, 0.0
        %v967 = vmax.f32 %v934, 0.0
        %v968 = vmax.f32 %v935, 0.0
        %v969 = vmax.f32 %v936, 0.0
        %v970 = vmax.f32 %v937, 0.0
        %v971 = vmax.f32 %v938, 0.0
        %v972 = vmax.f32 %v939, 0.0
        %v973 = vmax.f32 %v940, 0.0
        %v974 = vmax.f32 %v941, 0.0
        %v975 = vmax.f32 %v942, 0.0
        %v976 = vmax.f32 %v943, 0.0
        %v977 = vmin.f32 %v912, 0.0
        %v978 = vmin.f32 %v913, 0.0
        %v979 = vmin.f32 %v914, 0.0
        %v980 = vmin.f32 %v915, 0.0
        %v981 = vmin.f32 %v916, 0.0
        %v982 = vmin.f32 %v917, 0.0
        %v983 = vmin.f32 %v918, 0.0
        %v984 = vmin.f32 %v919, 0.0
        %v985 = vmin.f32 %v920, 0.0
        %v986 = vmin.f32 %v921, 0.0
        %v987 = vmin.f32 %v922, 0.0
        %v988 = vmin.f32 %v923, 0.0
        %v989 = vmin.f32 %v924, 0.0
        %v990 = vmin.f32 %v925, 0.0
        %v991 = vmin.f32 %v926, 0.0
        %v992 = vmin.f32 %v927, 0.0
        %v993 = vmin.f32 %v928, 0.0
        %v994 = vmin.f32 %v929, 0.0
        %v995 = vmin.f32 %v930, 0.0
        %v996 = vmin.f32 %v931, 0.0
        %v997 = vmin.f32 %v932, 0.0
        %v998 = vmin.f32 %v933, 0.0
        %v999 = vmin.f32 %v934, 0.0
        %v1000 = vmin.f32 %v935, 0.0
        %v1001 = vmin.f32 %v936, 0.0
        %v1002 = vmin.f32 %v937, 0.0
        %v1003 = vmin.f32 %v938, 0.0
        %v1004 = vmin.f32 %v939, 0.0
        %v1005 = vmin.f32 %v940, 0.0
        %v1006 = vmin.f32 %v941, 0.0
        %v1007 = vmin.f32 %v942, 0.0
        %v1008 = vmin.f32 %v943, 0.0
        %v1010 = vlaneseq
        %v1011 = vshrl.u32 %v1010, 7
        %v1012 = vsub.s32 0, %v1011
        %v1013 = vrot.slane %v944, %v1012
        %v1015 = vmul.f32 %v1013, %v977
        %v1016 = vmul.f32 %v1013, %v978
        %v1017 = vmul.f32 %v1013, %v979
        %v1018 = vmul.f32 %v1013, %v980
        %v1019 = vmul.f32 %v1013, %v981
        %v1020 = vmul.f32 %v1013, %v982
        %v1021 = vmul.f32 %v1013, %v983
        %v1022 = vmul.f32 %v1013, %v984
        %v1023 = vmul.f32 %v1013, %v985
        %v1024 = vmul.f32 %v1013, %v986
        %v1025 = vmul.f32 %v1013, %v987
        %v1026 = vmul.f32 %v1013, %v988
        %v1027 = vmul.f32 %v1013, %v989
        %v1028 = vmul.f32 %v1013, %v990
        %v1029 = vmul.f32 %v1013, %v991
        %v1030 = vmul.f32 %v1013, %v992
        %v1031 = vmul.f32 %v1013, %v993
        %v1032 = vmul.f32 %v1013, %v994
        %v1033 = vmul.f32 %v1013, %v995
        %v1034 = vmul.f32 %v1013, %v996
        %v1035 = vmul.f32 %v1013, %v997
        %v1036 = vmul.f32 %v1013, %v998
        %v1037 = vmul.f32 %v1013, %v999
        %v1038 = vmul.f32 %v1013, %v1000
        %v1039 = vmul.f32 %v1013, %v1001
        %v1040 = vmul.f32 %v1013, %v1002
        %v1041 = vmul.f32 %v1013, %v1003
        %v1042 = vmul.f32 %v1013, %v1004
        %v1043 = vmul.f32 %v1013, %v1005
        %v1044 = vmul.f32 %v1013, %v1006
        %v1045 = vmul.f32 %v1013, %v1007
        %v1046 = vmul.f32 %v1013, %v1008
        %v1047 = vadd.f32 %v945, %v1015
        %v1048 = vadd.f32 %v946, %v1016
        %v1049 = vadd.f32 %v947, %v1017
        %v1050 = vadd.f32 %v948, %v1018
        %v1051 = vadd.f32 %v949, %v1019
        %v1052 = vadd.f32 %v950, %v1020
        %v1053 = vadd.f32 %v951, %v1021
        %v1054 = vadd.f32 %v952, %v1022
        %v1055 = vadd.f32 %v953, %v1023
        %v1056 = vadd.f32 %v954, %v1024
        %v1057 = vadd.f32 %v955, %v1025
        %v1058 = vadd.f32 %v956, %v1026
        %v1059 = vadd.f32 %v957, %v1027
        %v1060 = vadd.f32 %v958, %v1028
        %v1061 = vadd.f32 %v959, %v1029
        %v1062 = vadd.f32 %v960, %v1030
        %v1063 = vadd.f32 %v961, %v1031
        %v1064 = vadd.f32 %v962, %v1032
        %v1065 = vadd.f32 %v963, %v1033
        %v1066 = vadd.f32 %v964, %v1034
        %v1067 = vadd.f32 %v965, %v1035
        %v1068 = vadd.f32 %v966, %v1036
        %v1069 = vadd.f32 %v967, %v1037
        %v1070 = vadd.f32 %v968, %v1038
        %v1071 = vadd.f32 %v969, %v1039
        %v1072 = vadd.f32 %v970, %v1040
        %v1073 = vadd.f32 %v971, %v1041
        %v1074 = vadd.f32 %v972, %v1042
        %v1075 = vadd.f32 %v973, %v1043
        %v1076 = vadd.f32 %v974, %v1044
        %v1077 = vadd.f32 %v975, %v1045
        %v1078 = vadd.f32 %v976, %v1046
        %v1079 = vpack.c.bf16 %v1048, %v1047
        %v1080 = vpack.c.bf16 %v1050, %v1049
        %v1081 = vpack.c.bf16 %v1052, %v1051
        %v1082 = vpack.c.bf16 %v1054, %v1053
        %v1083 = vpack.c.bf16 %v1056, %v1055
        %v1084 = vpack.c.bf16 %v1058, %v1057
        %v1085 = vpack.c.bf16 %v1060, %v1059
        %v1086 = vpack.c.bf16 %v1062, %v1061
        %v1087 = vpack.c.bf16 %v1064, %v1063
        %v1088 = vpack.c.bf16 %v1066, %v1065
        %v1089 = vpack.c.bf16 %v1068, %v1067
        %v1090 = vpack.c.bf16 %v1070, %v1069
        %v1091 = vpack.c.bf16 %v1072, %v1071
        %v1092 = vpack.c.bf16 %v1074, %v1073
        %v1093 = vpack.c.bf16 %v1076, %v1075
        %v1094 = vpack.c.bf16 %v1078, %v1077
        %v1111 = vunpack.c.l.b16 %v1079
        %v1112 = vunpack.c.h.b16 %v1079
        %v1113 = vunpack.c.l.b16 %v1080
        %v1114 = vunpack.c.h.b16 %v1080
        %v1115 = vunpack.c.l.b16 %v1081
        %v1116 = vunpack.c.h.b16 %v1081
        %v1117 = vunpack.c.l.b16 %v1082
        %v1118 = vunpack.c.h.b16 %v1082
        %v1119 = vunpack.c.l.b16 %v1083
        %v1120 = vunpack.c.h.b16 %v1083
        %v1121 = vunpack.c.l.b16 %v1084
        %v1122 = vunpack.c.h.b16 %v1084
        %v1123 = vunpack.c.l.b16 %v1085
        %v1124 = vunpack.c.h.b16 %v1085
        %v1125 = vunpack.c.l.b16 %v1086
        %v1126 = vunpack.c.h.b16 %v1086
        %v1127 = vunpack.c.l.b16 %v1087
        %v1128 = vunpack.c.h.b16 %v1087
        %v1129 = vunpack.c.l.b16 %v1088
        %v1130 = vunpack.c.h.b16 %v1088
        %v1131 = vunpack.c.l.b16 %v1089
        %v1132 = vunpack.c.h.b16 %v1089
        %v1133 = vunpack.c.l.b16 %v1090
        %v1134 = vunpack.c.h.b16 %v1090
        %v1135 = vunpack.c.l.b16 %v1091
        %v1136 = vunpack.c.h.b16 %v1091
        %v1137 = vunpack.c.l.b16 %v1092
        %v1138 = vunpack.c.h.b16 %v1092
        %v1139 = vunpack.c.l.b16 %v1093
        %v1140 = vunpack.c.h.b16 %v1093
        %v1141 = vunpack.c.l.b16 %v1094
        %v1142 = vunpack.c.h.b16 %v1094
        %v1143 = vpack.c.b16 %v1111, %v1111
        %v1144 = vpack.c.b16 %v1112, %v1112
        %v1145 = vpack.c.b16 %v1113, %v1113
        %v1146 = vpack.c.b16 %v1114, %v1114
        %v1147 = vpack.c.b16 %v1115, %v1115
        %v1148 = vpack.c.b16 %v1116, %v1116
        %v1149 = vpack.c.b16 %v1117, %v1117
        %v1150 = vpack.c.b16 %v1118, %v1118
        %v1151 = vpack.c.b16 %v1119, %v1119
        %v1152 = vpack.c.b16 %v1120, %v1120
        %v1153 = vpack.c.b16 %v1121, %v1121
        %v1154 = vpack.c.b16 %v1122, %v1122
        %v1155 = vpack.c.b16 %v1123, %v1123
        %v1156 = vpack.c.b16 %v1124, %v1124
        %v1157 = vpack.c.b16 %v1125, %v1125
        %v1158 = vpack.c.b16 %v1126, %v1126
        %v1159 = vpack.c.b16 %v1127, %v1127
        %v1160 = vpack.c.b16 %v1128, %v1128
        %v1161 = vpack.c.b16 %v1129, %v1129
        %v1162 = vpack.c.b16 %v1130, %v1130
        %v1163 = vpack.c.b16 %v1131, %v1131
        %v1164 = vpack.c.b16 %v1132, %v1132
        %v1165 = vpack.c.b16 %v1133, %v1133
        %v1166 = vpack.c.b16 %v1134, %v1134
        %v1167 = vpack.c.b16 %v1135, %v1135
        %v1168 = vpack.c.b16 %v1136, %v1136
        %v1169 = vpack.c.b16 %v1137, %v1137
        %v1170 = vpack.c.b16 %v1138, %v1138
        %v1171 = vpack.c.b16 %v1139, %v1139
        %v1172 = vpack.c.b16 %v1140, %v1140
        %v1173 = vpack.c.b16 %v1141, %v1141
        %v1174 = vpack.c.b16 %v1142, %v1142
        %vm1207 = vcmask 257024
        %1208 = vst.msk [vmem:[%s353] sm:$0xf] %vm1207, %v1143
        %1209 = vst.msk [vmem:[%s353 + $0x4] sm:$0xf] %vm1207, %v1144
        %1210 = vst.msk [vmem:[%s353 + $0x8] sm:$0xf] %vm1207, %v1145
        %1211 = vst.msk [vmem:[%s353 + $0xc] sm:$0xf] %vm1207, %v1146
        %1212 = vst.msk [vmem:[%s353 + $0x10] sm:$0xf] %vm1207, %v1147
        %1213 = vst.msk [vmem:[%s353 + $0x14] sm:$0xf] %vm1207, %v1148
        %1214 = vst.msk [vmem:[%s353 + $0x18] sm:$0xf] %vm1207, %v1149
        %1215 = vst.msk [vmem:[%s353 + $0x1c] sm:$0xf] %vm1207, %v1150
        %1216 = vst.msk [vmem:[%s353 + $0x20] sm:$0xf] %vm1207, %v1151
        %1217 = vst.msk [vmem:[%s353 + $0x24] sm:$0xf] %vm1207, %v1152
        %1218 = vst.msk [vmem:[%s353 + $0x28] sm:$0xf] %vm1207, %v1153
        %1219 = vst.msk [vmem:[%s353 + $0x2c] sm:$0xf] %vm1207, %v1154
        %1220 = vst.msk [vmem:[%s353 + $0x30] sm:$0xf] %vm1207, %v1155
        %1221 = vst.msk [vmem:[%s353 + $0x34] sm:$0xf] %vm1207, %v1156
        %1222 = vst.msk [vmem:[%s353 + $0x38] sm:$0xf] %vm1207, %v1157
        %1223 = vst.msk [vmem:[%s353 + $0x3c] sm:$0xf] %vm1207, %v1158
        %1224 = vst.msk [vmem:[%s353 + $0x40] sm:$0xf] %vm1207, %v1159
        %1225 = vst.msk [vmem:[%s353 + $0x44] sm:$0xf] %vm1207, %v1160
        %1226 = vst.msk [vmem:[%s353 + $0x48] sm:$0xf] %vm1207, %v1161
        %1227 = vst.msk [vmem:[%s353 + $0x4c] sm:$0xf] %vm1207, %v1162
        %1228 = vst.msk [vmem:[%s353 + $0x50] sm:$0xf] %vm1207, %v1163
        %1229 = vst.msk [vmem:[%s353 + $0x54] sm:$0xf] %vm1207, %v1164
        %1230 = vst.msk [vmem:[%s353 + $0x58] sm:$0xf] %vm1207, %v1165
        %1231 = vst.msk [vmem:[%s353 + $0x5c] sm:$0xf] %vm1207, %v1166
        %1232 = vst.msk [vmem:[%s353 + $0x60] sm:$0xf] %vm1207, %v1167
        %1233 = vst.msk [vmem:[%s353 + $0x64] sm:$0xf] %vm1207, %v1168
        %1234 = vst.msk [vmem:[%s353 + $0x68] sm:$0xf] %vm1207, %v1169
        %1235 = vst.msk [vmem:[%s353 + $0x6c] sm:$0xf] %vm1207, %v1170
        %1236 = vst.msk [vmem:[%s353 + $0x70] sm:$0xf] %vm1207, %v1171
        %1237 = vst.msk [vmem:[%s353 + $0x74] sm:$0xf] %vm1207, %v1172
        %1238 = vst.msk [vmem:[%s353 + $0x78] sm:$0xf] %vm1207, %v1173
        %1239 = vst.msk [vmem:[%s353 + $0x7c] sm:$0xf] %vm1207, %v1174
        %s1240 = smul.u32 32, %s23
        %p1241 = scmp.lt.s32.totalorder %s1240, 63
        %s1242 = scalar_select %p1241, %s1240, 63
        %s1243 = smul.addr %s1242, 4
        %s1244 = scalar_lea.vmem %s9, %s1243
        // Predicated region
        $region61: #{bottleneck_forward.2} parent=55 // pred_check
          %p1245 = pneg %p235
        $region62: #{bottleneck_forward.2} parent=55 // pred_check_branch
          %1247 = sbr.rel (%p1245) target = $region64
        $region63: #{bottleneck_forward.2} parent=55 // pred_region
          %s1248 = smul.u32 32, %s23
        $region64: #{bottleneck_forward.2} parent=55 // pred_fallthru
          _
      $region56: #{bottleneck_forward.2} parent=5 // pred_fallthru
        _
      %p1249 = scmp.le.s32.totalorder 2, %s18
      // Predicated region
      $region65: #{bottleneck_forward.2} parent=5 // pred_check
        %p1250 = pneg %p1249
      $region66: #{bottleneck_forward.2} parent=5 // pred_check_branch
        %1252 = sbr.rel (%p1250) target = $region68
      $region67: #{bottleneck_forward.2} parent=5 // pred_region
        %s1253 = ssub.s32 %s18, 2
        // Predicated region
        $region69: #{bottleneck_forward.2} parent=67 // pred_check
          %p1254 = pneg %p241
        $region70: #{bottleneck_forward.2} parent=67 // pred_check_branch
          %1256 = sbr.rel (%p1254) target = $region72
        $region71: #{bottleneck_forward.2} parent=67 // pred_region
          %s1257 = smul.u32 32, %s24
          %p1258 = scmp.lt.s32.totalorder %s1257, 63
          %s1259 = scalar_select %p1258, %s1257, 63
          %s1260 = smul.addr %s1259, 4
          %s1261 = scalar_lea.vmem %s9, %s1260
        $region72: #{bottleneck_forward.2} parent=67 // pred_fallthru
          _
      $region68: #{bottleneck_forward.2} parent=5 // pred_fallthru
        _
    $region6: #{bottleneck_forward.2} parent=1 // loop_footer
      %s22 = sadd.s32 1, %s18
    $region7: #{bottleneck_forward.2} parent=1 // loop_footer_branch
      %17 = sbr.rel target = $region3
    $region8: #{bottleneck_forward.2} parent=1 // loop_exit
      _
    %1262 = vsyncpa [#allocation3], 1
    %s1263 = scalar_lea.sflag [#allocation3], 1
    %1264 = vsyncpa %s1263, 1

// kernel: bottleneck_forward.3
$region0: #{bottleneck_forward.3}
  #allocation0 [shape = 'u32[]', space=smem, size = 0x4, offset = 0x4, fixed_abs, tag = 'smem constant byte address 0x4 - core index']
  #allocation1 [shape = 'u32[144,128]{1,0:T(1,128)}', space=vmem, size = 0x12000, scoped, tag = 'internal scratch']
  %s0 = inlined_call_operand.vmem [shape: bf16[512,288], index: 0, kind: input, shape index: {}]
  %s1 = inlined_call_operand.vmem [shape: bf16[288,32], index: 1, kind: input, shape index: {}]
  %s2 = inlined_call_operand.vmem [shape: f32[1,32], index: 2, kind: input, shape index: {}]
  %s3 = inlined_call_operand.vmem [shape: f32[1,32], index: 3, kind: input, shape index: {}]
  %s4 = inlined_call_operand.vmem [shape: f32[1,32], index: 4, kind: input, shape index: {}]
  %s5 = inlined_call_operand.vmem [shape: f32[1,32], index: 5, kind: input, shape index: {}]
  %s6 = inlined_call_operand.vmem [shape: bf16[32,128], index: 6, kind: input, shape index: {}]
  %s7 = inlined_call_operand.vmem [shape: f32[1,128], index: 7, kind: input, shape index: {}]
  %s8 = inlined_call_operand.vmem [shape: f32[512,64], index: 8, kind: input, shape index: {}]
  %s9 = inlined_call_operand.vmem [shape: bf16[64,128], index: 9, kind: input, shape index: {}]
  %s10 = inlined_call_operand.vmem [shape: f32[1,128], index: 10, kind: input, shape index: {}]
  %s11 = inlined_call_operand.hbm [shape: f32[512,128], index: 11, kind: output, shape index: {}]
  %s12 = sld [smem:[#allocation0]]
  $region77: #{bottleneck_forward.3} parent=0
    _
  %s14 = ssub.s32 1, %s12
  %s15 = scalar_select 0, %s14, %s12
  $region1: #{bottleneck_forward.3} parent=0
    #allocation2 [shape = 'u8[262144]{0}', space=vmem, size = 0x40000, scoped, tag = 'output window, operand 0']
    #allocation3 [shape = 's32[2]{0}', space=sflag, size = 0x8, scoped, tag = 'scoped memory for bottleneck_forward.3']
    %16 = vsyncpa [#allocation3], 0
    %s17 = scalar_lea.sflag [#allocation3], 1
    %18 = vsyncpa %s17, 0
    loop: start=0, step=1, limit=4
    $region2: #{bottleneck_forward.3} parent=1 // loop_pre_header
      _
    $region3: #{bottleneck_forward.3} parent=1 // loop_header
      %s20 = sphi 0, %s24
      %p21 = scmp.ge.s32.totalorder %s20, 4
      %s30 = sphi 0, %s32
      %s33 = sphi 0, %s30
      %s34 = sphi 0, %s33
      %s50 = sphi 0, %s34
      %s54 = sphi 0, %s54
      %s56 = sphi 0, %s54
      %s57 = sphi 0, %s56
      %s71 = sphi 0, %s57
      %s75 = sphi 0, %s75
      %s77 = sphi 0, %s75
      %s78 = sphi 0, %s77
      %s92 = sphi 0, %s78
      %s96 = sphi 0, %s96
      %s98 = sphi 0, %s96
      %s99 = sphi 0, %s98
      %s113 = sphi 0, %s99
      %s117 = sphi 0, %s117
      %s119 = sphi 0, %s117
      %s120 = sphi 0, %s119
      %s134 = sphi 0, %s120
      %s138 = sphi 0, %s138
      %s140 = sphi 0, %s138
      %s141 = sphi 0, %s140
      %s155 = sphi 0, %s141
      %s159 = sphi 0, %s159
      %s161 = sphi 0, %s159
      %s162 = sphi 0, %s161
      %s176 = sphi 0, %s162
      %s180 = sphi 0, %s180
      %s182 = sphi 0, %s180
      %s183 = sphi 0, %s182
      %s197 = sphi 0, %s183
      %s203 = sphi 0, %s205
      %s206 = sphi 0, %s203
      %s207 = sphi 0, %s206
      %s223 = sphi 0, %s207
      %s227 = sphi 0, %s227
      %s229 = sphi 0, %s227
      %s230 = sphi 0, %s229
      %s244 = sphi 0, %s230
      %s248 = sphi 0, %s248
      %s250 = sphi 0, %s248
      %s251 = sphi 0, %s250
      %s265 = sphi 0, %s251
      %s271 = sphi 0, %s273
      %s274 = sphi 0, %s271
      %s275 = sphi 0, %s274
      %s291 = sphi 0, %s275
    $region4: #{bottleneck_forward.3} parent=1 // loop_header_branch
      %23 = sbr.rel (%p21) target = $region8
    $region5: #{bottleneck_forward.3} parent=1 // loop_body
      %s25 = ssub.s32 %s20, 1
      %s26 = ssub.s32 %s20, 2
      %s27 = sadd.s32 %s20, 1
      %s28 = ssub.s32 %s20, %s27
      %p29 = scmp.eq.s32.totalorder %s28, 0
      %s31 = sadd.s32 %s30, 1
      %s32 = scalar_select %p29, %s30, %s31
      %p35 = pneg %p29
      %p36 = scmp.eq.s32.totalorder %s20, 1
      %p37 = por %p35, %p36
      %p38 = scmp.ne.s32.totalorder %s30, %s33
      %p39 = scmp.eq.s32.totalorder %s20, 0
      %p40 = por %p38, %p39
      %p41 = scmp.ne.s32.totalorder %s30, %s33
      %p42 = scmp.eq.s32.totalorder %s25, 1
      %p43 = por %p41, %p42
      %p44 = scmp.ne.s32.totalorder %s33, %s34
      %p45 = scmp.eq.s32.totalorder %s25, 0
      %p46 = por %p44, %p45
      %p47 = scmp.ne.s32.totalorder %s33, %s34
      %p48 = scmp.eq.s32.totalorder %s26, 1
      %p49 = por %p47, %p48
      %p51 = scmp.ne.s32.totalorder %s34, %s50
      %p52 = scmp.eq.s32.totalorder %s26, 0
      %p53 = por %p51, %p52
      %s55 = sadd.s32 %s54, 1
      %p58 = scmp.eq.s32.totalorder %s20, 1
      %p59 = scmp.ne.s32.totalorder %s54, %s56
      %p60 = scmp.eq.s32.totalorder %s20, 0
      %p61 = por %p59, %p60
      %p62 = scmp.ne.s32.totalorder %s54, %s56
      %p63 = scmp.eq.s32.totalorder %s25, 1
      %p64 = por %p62, %p63
      %p65 = scmp.ne.s32.totalorder %s56, %s57
      %p66 = scmp.eq.s32.totalorder %s25, 0
      %p67 = por %p65, %p66
      %p68 = scmp.ne.s32.totalorder %s56, %s57
      %p69 = scmp.eq.s32.totalorder %s26, 1
      %p70 = por %p68, %p69
      %p72 = scmp.ne.s32.totalorder %s57, %s71
      %p73 = scmp.eq.s32.totalorder %s26, 0
      %p74 = por %p72, %p73
      %s76 = sadd.s32 %s75, 1
      %p79 = scmp.eq.s32.totalorder %s20, 1
      %p80 = scmp.ne.s32.totalorder %s75, %s77
      %p81 = scmp.eq.s32.totalorder %s20, 0
      %p82 = por %p80, %p81
      %p83 = scmp.ne.s32.totalorder %s75, %s77
      %p84 = scmp.eq.s32.totalorder %s25, 1
      %p85 = por %p83, %p84
      %p86 = scmp.ne.s32.totalorder %s77, %s78
      %p87 = scmp.eq.s32.totalorder %s25, 0
      %p88 = por %p86, %p87
      %p89 = scmp.ne.s32.totalorder %s77, %s78
      %p90 = scmp.eq.s32.totalorder %s26, 1
      %p91 = por %p89, %p90
      %p93 = scmp.ne.s32.totalorder %s78, %s92
      %p94 = scmp.eq.s32.totalorder %s26, 0
      %p95 = por %p93, %p94
      %s97 = sadd.s32 %s96, 1
      %p100 = scmp.eq.s32.totalorder %s20, 1
      %p101 = scmp.ne.s32.totalorder %s96, %s98
      %p102 = scmp.eq.s32.totalorder %s20, 0
      %p103 = por %p101, %p102
      %p104 = scmp.ne.s32.totalorder %s96, %s98
      %p105 = scmp.eq.s32.totalorder %s25, 1
      %p106 = por %p104, %p105
      %p107 = scmp.ne.s32.totalorder %s98, %s99
      %p108 = scmp.eq.s32.totalorder %s25, 0
      %p109 = por %p107, %p108
      %p110 = scmp.ne.s32.totalorder %s98, %s99
      %p111 = scmp.eq.s32.totalorder %s26, 1
      %p112 = por %p110, %p111
      %p114 = scmp.ne.s32.totalorder %s99, %s113
      %p115 = scmp.eq.s32.totalorder %s26, 0
      %p116 = por %p114, %p115
      %s118 = sadd.s32 %s117, 1
      %p121 = scmp.eq.s32.totalorder %s20, 1
      %p122 = scmp.ne.s32.totalorder %s117, %s119
      %p123 = scmp.eq.s32.totalorder %s20, 0
      %p124 = por %p122, %p123
      %p125 = scmp.ne.s32.totalorder %s117, %s119
      %p126 = scmp.eq.s32.totalorder %s25, 1
      %p127 = por %p125, %p126
      %p128 = scmp.ne.s32.totalorder %s119, %s120
      %p129 = scmp.eq.s32.totalorder %s25, 0
      %p130 = por %p128, %p129
      %p131 = scmp.ne.s32.totalorder %s119, %s120
      %p132 = scmp.eq.s32.totalorder %s26, 1
      %p133 = por %p131, %p132
      %p135 = scmp.ne.s32.totalorder %s120, %s134
      %p136 = scmp.eq.s32.totalorder %s26, 0
      %p137 = por %p135, %p136
      %s139 = sadd.s32 %s138, 1
      %p142 = scmp.eq.s32.totalorder %s20, 1
      %p143 = scmp.ne.s32.totalorder %s138, %s140
      %p144 = scmp.eq.s32.totalorder %s20, 0
      %p145 = por %p143, %p144
      %p146 = scmp.ne.s32.totalorder %s138, %s140
      %p147 = scmp.eq.s32.totalorder %s25, 1
      %p148 = por %p146, %p147
      %p149 = scmp.ne.s32.totalorder %s140, %s141
      %p150 = scmp.eq.s32.totalorder %s25, 0
      %p151 = por %p149, %p150
      %p152 = scmp.ne.s32.totalorder %s140, %s141
      %p153 = scmp.eq.s32.totalorder %s26, 1
      %p154 = por %p152, %p153
      %p156 = scmp.ne.s32.totalorder %s141, %s155
      %p157 = scmp.eq.s32.totalorder %s26, 0
      %p158 = por %p156, %p157
      %s160 = sadd.s32 %s159, 1
      %p163 = scmp.eq.s32.totalorder %s20, 1
      %p164 = scmp.ne.s32.totalorder %s159, %s161
      %p165 = scmp.eq.s32.totalorder %s20, 0
      %p166 = por %p164, %p165
      %p167 = scmp.ne.s32.totalorder %s159, %s161
      %p168 = scmp.eq.s32.totalorder %s25, 1
      %p169 = por %p167, %p168
      %p170 = scmp.ne.s32.totalorder %s161, %s162
      %p171 = scmp.eq.s32.totalorder %s25, 0
      %p172 = por %p170, %p171
      %p173 = scmp.ne.s32.totalorder %s161, %s162
      %p174 = scmp.eq.s32.totalorder %s26, 1
      %p175 = por %p173, %p174
      %p177 = scmp.ne.s32.totalorder %s162, %s176
      %p178 = scmp.eq.s32.totalorder %s26, 0
      %p179 = por %p177, %p178
      %s181 = sadd.s32 %s180, 1
      %p184 = scmp.eq.s32.totalorder %s20, 1
      %p185 = scmp.ne.s32.totalorder %s180, %s182
      %p186 = scmp.eq.s32.totalorder %s20, 0
      %p187 = por %p185, %p186
      %p188 = scmp.ne.s32.totalorder %s180, %s182
      %p189 = scmp.eq.s32.totalorder %s25, 1
      %p190 = por %p188, %p189
      %p191 = scmp.ne.s32.totalorder %s182, %s183
      %p192 = scmp.eq.s32.totalorder %s25, 0
      %p193 = por %p191, %p192
      %p194 = scmp.ne.s32.totalorder %s182, %s183
      %p195 = scmp.eq.s32.totalorder %s26, 1
      %p196 = por %p194, %p195
      %p198 = scmp.ne.s32.totalorder %s183, %s197
      %p199 = scmp.eq.s32.totalorder %s26, 0
      %p200 = por %p198, %p199
      %s201 = ssub.s32 %s20, %s27
      %p202 = scmp.eq.s32.totalorder %s201, 0
      %s204 = sadd.s32 %s203, 1
      %s205 = scalar_select %p202, %s203, %s204
      %p208 = pneg %p202
      %p209 = scmp.eq.s32.totalorder %s20, 1
      %p210 = por %p208, %p209
      %p211 = scmp.ne.s32.totalorder %s203, %s206
      %p212 = scmp.eq.s32.totalorder %s20, 0
      %p213 = por %p211, %p212
      %p214 = scmp.ne.s32.totalorder %s203, %s206
      %p215 = scmp.eq.s32.totalorder %s25, 1
      %p216 = por %p214, %p215
      %p217 = scmp.ne.s32.totalorder %s206, %s207
      %p218 = scmp.eq.s32.totalorder %s25, 0
      %p219 = por %p217, %p218
      %p220 = scmp.ne.s32.totalorder %s206, %s207
      %p221 = scmp.eq.s32.totalorder %s26, 1
      %p222 = por %p220, %p221
      %p224 = scmp.ne.s32.totalorder %s207, %s223
      %p225 = scmp.eq.s32.totalorder %s26, 0
      %p226 = por %p224, %p225
      %s228 = sadd.s32 %s227, 1
      %p231 = scmp.eq.s32.totalorder %s20, 1
      %p232 = scmp.ne.s32.totalorder %s227, %s229
      %p233 = scmp.eq.s32.totalorder %s20, 0
      %p234 = por %p232, %p233
      %p235 = scmp.ne.s32.totalorder %s227, %s229
      %p236 = scmp.eq.s32.totalorder %s25, 1
      %p237 = por %p235, %p236
      %p238 = scmp.ne.s32.totalorder %s229, %s230
      %p239 = scmp.eq.s32.totalorder %s25, 0
      %p240 = por %p238, %p239
      %p241 = scmp.ne.s32.totalorder %s229, %s230
      %p242 = scmp.eq.s32.totalorder %s26, 1
      %p243 = por %p241, %p242
      %p245 = scmp.ne.s32.totalorder %s230, %s244
      %p246 = scmp.eq.s32.totalorder %s26, 0
      %p247 = por %p245, %p246
      %s249 = sadd.s32 %s248, 1
      %p252 = scmp.eq.s32.totalorder %s20, 1
      %p253 = scmp.ne.s32.totalorder %s248, %s250
      %p254 = scmp.eq.s32.totalorder %s20, 0
      %p255 = por %p253, %p254
      %p256 = scmp.ne.s32.totalorder %s248, %s250
      %p257 = scmp.eq.s32.totalorder %s25, 1
      %p258 = por %p256, %p257
      %p259 = scmp.ne.s32.totalorder %s250, %s251
      %p260 = scmp.eq.s32.totalorder %s25, 0
      %p261 = por %p259, %p260
      %p262 = scmp.ne.s32.totalorder %s250, %s251
      %p263 = scmp.eq.s32.totalorder %s26, 1
      %p264 = por %p262, %p263
      %p266 = scmp.ne.s32.totalorder %s251, %s265
      %p267 = scmp.eq.s32.totalorder %s26, 0
      %p268 = por %p266, %p267
      %s269 = ssub.s32 %s20, %s27
      %p270 = scmp.eq.s32.totalorder %s269, 0
      %s272 = sadd.s32 %s271, 1
      %s273 = scalar_select %p270, %s271, %s272
      %p276 = pneg %p270
      %p277 = scmp.eq.s32.totalorder %s20, 1
      %p278 = por %p276, %p277
      %p279 = scmp.ne.s32.totalorder %s271, %s274
      %p280 = scmp.eq.s32.totalorder %s20, 0
      %p281 = por %p279, %p280
      %p282 = scmp.ne.s32.totalorder %s271, %s274
      %p283 = scmp.eq.s32.totalorder %s25, 1
      %p284 = por %p282, %p283
      %p285 = scmp.ne.s32.totalorder %s274, %s275
      %p286 = scmp.eq.s32.totalorder %s25, 0
      %p287 = por %p285, %p286
      %p288 = scmp.ne.s32.totalorder %s274, %s275
      %p289 = scmp.eq.s32.totalorder %s26, 1
      %p290 = por %p288, %p289
      %p292 = scmp.ne.s32.totalorder %s275, %s291
      %p293 = scmp.eq.s32.totalorder %s26, 0
      %p294 = por %p292, %p293
      %p295 = scmp.le.s32.totalorder 1, %s20
      %p296 = scmp.lt.s32.totalorder %s20, 3
      %p297 = pnand %p295, %p296
      %p298 = pneg %p297
      // Predicated region
      $region9: #{bottleneck_forward.3} parent=5 // pred_check
        _
      $region10: #{bottleneck_forward.3} parent=5 // pred_check_branch
        %300 = sbr.rel (%p297) target = $region12
      $region11: #{bottleneck_forward.3} parent=5 // pred_region
        %s301 = ssub.s32 %s20, 1
        // Predicated region
        $region13: #{bottleneck_forward.3} parent=11 // pred_check
          %p302 = pneg %p67
        $region14: #{bottleneck_forward.3} parent=11 // pred_check_branch
          %304 = sbr.rel (%p302) target = $region16
        $region15: #{bottleneck_forward.3} parent=11 // pred_region
          _
        $region16: #{bottleneck_forward.3} parent=11 // pred_fallthru
          _
        // Predicated region
        $region17: #{bottleneck_forward.3} parent=11 // pred_check
          %p305 = pneg %p88
        $region18: #{bottleneck_forward.3} parent=11 // pred_check_branch
          %307 = sbr.rel (%p305) target = $region20
        $region19: #{bottleneck_forward.3} parent=11 // pred_region
          _
        $region20: #{bottleneck_forward.3} parent=11 // pred_fallthru
          _
        // Predicated region
        $region21: #{bottleneck_forward.3} parent=11 // pred_check
          %p308 = pneg %p109
        $region22: #{bottleneck_forward.3} parent=11 // pred_check_branch
          %310 = sbr.rel (%p308) target = $region24
        $region23: #{bottleneck_forward.3} parent=11 // pred_region
          _
        $region24: #{bottleneck_forward.3} parent=11 // pred_fallthru
          _
        // Predicated region
        $region25: #{bottleneck_forward.3} parent=11 // pred_check
          %p311 = pneg %p130
        $region26: #{bottleneck_forward.3} parent=11 // pred_check_branch
          %313 = sbr.rel (%p311) target = $region28
        $region27: #{bottleneck_forward.3} parent=11 // pred_region
          _
        $region28: #{bottleneck_forward.3} parent=11 // pred_fallthru
          _
        // Predicated region
        $region29: #{bottleneck_forward.3} parent=11 // pred_check
          %p314 = pneg %p151
        $region30: #{bottleneck_forward.3} parent=11 // pred_check_branch
          %316 = sbr.rel (%p314) target = $region32
        $region31: #{bottleneck_forward.3} parent=11 // pred_region
          _
        $region32: #{bottleneck_forward.3} parent=11 // pred_fallthru
          _
        // Predicated region
        $region33: #{bottleneck_forward.3} parent=11 // pred_check
          %p317 = pneg %p172
        $region34: #{bottleneck_forward.3} parent=11 // pred_check_branch
          %319 = sbr.rel (%p317) target = $region36
        $region35: #{bottleneck_forward.3} parent=11 // pred_region
          _
        $region36: #{bottleneck_forward.3} parent=11 // pred_fallthru
          _
        // Predicated region
        $region37: #{bottleneck_forward.3} parent=11 // pred_check
          %p320 = pneg %p193
        $region38: #{bottleneck_forward.3} parent=11 // pred_check_branch
          %322 = sbr.rel (%p320) target = $region40
        $region39: #{bottleneck_forward.3} parent=11 // pred_region
          _
        $region40: #{bottleneck_forward.3} parent=11 // pred_fallthru
          _
        // Predicated region
        $region41: #{bottleneck_forward.3} parent=11 // pred_check
          %p323 = pneg %p240
        $region42: #{bottleneck_forward.3} parent=11 // pred_check_branch
          %325 = sbr.rel (%p323) target = $region44
        $region43: #{bottleneck_forward.3} parent=11 // pred_region
          _
        $region44: #{bottleneck_forward.3} parent=11 // pred_fallthru
          _
        // Predicated region
        $region45: #{bottleneck_forward.3} parent=11 // pred_check
          %p326 = pneg %p261
        $region46: #{bottleneck_forward.3} parent=11 // pred_check_branch
          %328 = sbr.rel (%p326) target = $region48
        $region47: #{bottleneck_forward.3} parent=11 // pred_region
          _
        $region48: #{bottleneck_forward.3} parent=11 // pred_fallthru
          _
      $region12: #{bottleneck_forward.3} parent=5 // pred_fallthru
        _
      %p329 = scmp.lt.s32.totalorder %s20, 2
      // Predicated region
      $region49: #{bottleneck_forward.3} parent=5 // pred_check
        %p330 = pneg %p329
      $region50: #{bottleneck_forward.3} parent=5 // pred_check_branch
        %332 = sbr.rel (%p330) target = $region52
      $region51: #{bottleneck_forward.3} parent=5 // pred_region
        // Predicated region
        $region53: #{bottleneck_forward.3} parent=51 // pred_check
          %p333 = pneg %p40
        $region54: #{bottleneck_forward.3} parent=51 // pred_check_branch
          %335 = sbr.rel (%p333) target = $region56
        $region55: #{bottleneck_forward.3} parent=51 // pred_region
          %s336 = smul.u32 32, %s20
          %p337 = scmp.lt.s32.totalorder %s336, 63
          %s338 = scalar_select %p337, %s336, 63
          %s339 = smul.addr %s338, 3
          %s340 = smul.addr %s339, 4
          %s341 = scalar_lea.vmem %s0, %s340
          %s342 = smul.u32 32, %s20
        $region56: #{bottleneck_forward.3} parent=51 // pred_fallthru
          _
        // Predicated region
        $region57: #{bottleneck_forward.3} parent=51 // pred_check
          %p343 = pneg %p213
        $region58: #{bottleneck_forward.3} parent=51 // pred_check_branch
          %345 = sbr.rel (%p343) target = $region60
        $region59: #{bottleneck_forward.3} parent=51 // pred_region
          %s346 = smul.u32 32, %s20
          %p347 = scmp.lt.s32.totalorder %s346, 63
          %s348 = scalar_select %p347, %s346, 63
          %s349 = smul.addr %s348, 8
          %s350 = scalar_lea.vmem %s8, %s349
          %s351 = smul.u32 32, %s20
        $region60: #{bottleneck_forward.3} parent=51 // pred_fallthru
          _
      $region52: #{bottleneck_forward.3} parent=5 // pred_fallthru
        _
      %p352 = scmp.le.s32.totalorder 1, %s20
      %p353 = scmp.lt.s32.totalorder %s20, 3
      %p354 = pnand %p352, %p353
      %p355 = pneg %p354
      // Predicated region
      $region61: #{bottleneck_forward.3} parent=5 // pred_check
        _
      $region62: #{bottleneck_forward.3} parent=5 // pred_check_branch
        %357 = sbr.rel (%p354) target = $region64
      $region63: #{bottleneck_forward.3} parent=5 // pred_region
        %s358 = ssub.s32 %s20, 1
        %s359 = smul.u32 32, %s25
        %p360 = scmp.lt.s32.totalorder %s359, 63
        %s361 = scalar_select %p360, %s359, 63
        %s362 = smul.addr %s361, 3
        %s363 = smul.addr %s362, 4
        %s364 = scalar_lea.vmem %s0, %s363
        %p365 = pneg %p46
        %p366 = pneg %p43
        %p367 = pneg %p67
        %p368 = pneg %p64
        %p369 = pneg %p88
        %p370 = pneg %p85
        %p371 = pneg %p109
        %p372 = pneg %p106
        %p373 = pneg %p130
        %p374 = pneg %p127
        %p375 = pneg %p151
        %p376 = pneg %p148
        %p377 = pneg %p172
        %p378 = pneg %p169
        %p379 = pneg %p193
        %p380 = pneg %p190
        %s381 = smul.u32 32, %s25
        %p382 = scmp.lt.s32.totalorder %s381, 63
        %s383 = scalar_select %p382, %s381, 63
        %s384 = smul.addr %s383, 8
        %s385 = scalar_lea.vmem %s8, %s384
        %p386 = pneg %p219
        %p387 = pneg %p216
        %p388 = pneg %p240
        %p389 = pneg %p237
        %p390 = pneg %p261
        %p391 = pneg %p258
        %p392 = pneg %p287
        %p393 = pneg %p284
        %s394 = sand.u32 %s274, 1
        %s395 = scalar_lea.sflag [#allocation3], %s394
        %s396 = sand.u32 %s274, 1
        %s397 = smul.addr %s396, 256
        %s398 = scalar_lea.vmem [#allocation2], %s397
        %s399 = smul.u32 32, %s25
        %p400 = scmp.lt.s32.totalorder %s399, 63
        %s401 = scalar_select %p400, %s399, 63
        %s402 = smul.addr %s401, 3
        %s403 = smul.addr %s402, 4
        %s404 = scalar_lea.vmem %s0, %s403
        %s405 = smul.u32 32, %s25
        %s406 = smul.u32 32, %s25
        %p407 = scmp.lt.s32.totalorder %s406, 63
        %s408 = scalar_select %p407, %s406, 63
        %s409 = smul.addr %s408, 8
        %s410 = scalar_lea.vmem %s8, %s409
        %s411 = smul.u32 32, %s25
        %s412 = smul.u32 32, %s25
        %v414 = vld [vmem:[%s404] sm:$0xff]
        %v415 = vld [vmem:[%s404 + $0x8] sm:$0xf]
        %v416 = vld [vmem:[%s404 + $0xc] sm:$0xff]
        %v417 = vld [vmem:[%s404 + $0x14] sm:$0xf]
        %v418 = vld [vmem:[%s404 + $0x18] sm:$0xff]
        %v419 = vld [vmem:[%s404 + $0x20] sm:$0xf]
        %v420 = vld [vmem:[%s404 + $0x24] sm:$0xff]
        %v421 = vld [vmem:[%s404 + $0x2c] sm:$0xf]
        %v422 = vld [vmem:[%s404 + $0x30] sm:$0xff]
        %v423 = vld [vmem:[%s404 + $0x38] sm:$0xf]
        %v424 = vld [vmem:[%s404 + $0x3c] sm:$0xff]
        %v425 = vld [vmem:[%s404 + $0x44] sm:$0xf]
        %v426 = vld [vmem:[%s404 + $0x48] sm:$0xff]
        %v427 = vld [vmem:[%s404 + $0x50] sm:$0xf]
        %v428 = vld [vmem:[%s404 + $0x54] sm:$0xff]
        %v429 = vld [vmem:[%s404 + $0x5c] sm:$0xf]
        %v430 = vld [vmem:[%s404 + $0x60] sm:$0xff]
        %v431 = vld [vmem:[%s404 + $0x68] sm:$0xf]
        %v432 = vld [vmem:[%s404 + $0x6c] sm:$0xff]
        %v433 = vld [vmem:[%s404 + $0x74] sm:$0xf]
        %v434 = vld [vmem:[%s404 + $0x78] sm:$0xff]
        %v435 = vld [vmem:[%s404 + $0x80] sm:$0xf]
        %v436 = vld [vmem:[%s404 + $0x84] sm:$0xff]
        %v437 = vld [vmem:[%s404 + $0x8c] sm:$0xf]
        %v438 = vld [vmem:[%s404 + $0x90] sm:$0xff]
        %v439 = vld [vmem:[%s404 + $0x98] sm:$0xf]
        %v440 = vld [vmem:[%s404 + $0x9c] sm:$0xff]
        %v441 = vld [vmem:[%s404 + $0xa4] sm:$0xf]
        %v442 = vld [vmem:[%s404 + $0xa8] sm:$0xff]
        %v443 = vld [vmem:[%s404 + $0xb0] sm:$0xf]
        %v444 = vld [vmem:[%s404 + $0xb4] sm:$0xff]
        %v445 = vld [vmem:[%s404 + $0xbc] sm:$0xf]
        %v446 = vld [vmem:[%s404 + $0xc0] sm:$0xff]
        %v447 = vld [vmem:[%s404 + $0xc8] sm:$0xf]
        %v448 = vld [vmem:[%s404 + $0xcc] sm:$0xff]
        %v449 = vld [vmem:[%s404 + $0xd4] sm:$0xf]
        %v450 = vld [vmem:[%s404 + $0xd8] sm:$0xff]
        %v451 = vld [vmem:[%s404 + $0xe0] sm:$0xf]
        %v452 = vld [vmem:[%s404 + $0xe4] sm:$0xff]
        %v453 = vld [vmem:[%s404 + $0xec] sm:$0xf]
        %v454 = vld [vmem:[%s404 + $0xf0] sm:$0xff]
        %v455 = vld [vmem:[%s404 + $0xf8] sm:$0xf]
        %v456 = vld [vmem:[%s404 + $0xfc] sm:$0xff]
        %v457 = vld [vmem:[%s404 + $0x104] sm:$0xf]
        %v458 = vld [vmem:[%s404 + $0x108] sm:$0xff]
        %v459 = vld [vmem:[%s404 + $0x110] sm:$0xf]
        %v460 = vld [vmem:[%s404 + $0x114] sm:$0xff]
        %v461 = vld [vmem:[%s404 + $0x11c] sm:$0xf]
        %v462 = vld [vmem:[%s404 + $0x120] sm:$0xff]
        %v463 = vld [vmem:[%s404 + $0x128] sm:$0xf]
        %v464 = vld [vmem:[%s404 + $0x12c] sm:$0xff]
        %v465 = vld [vmem:[%s404 + $0x134] sm:$0xf]
        %v466 = vld [vmem:[%s404 + $0x138] sm:$0xff]
        %v467 = vld [vmem:[%s404 + $0x140] sm:$0xf]
        %v468 = vld [vmem:[%s404 + $0x144] sm:$0xff]
        %v469 = vld [vmem:[%s404 + $0x14c] sm:$0xf]
        %v470 = vld [vmem:[%s404 + $0x150] sm:$0xff]
        %v471 = vld [vmem:[%s404 + $0x158] sm:$0xf]
        %v472 = vld [vmem:[%s404 + $0x15c] sm:$0xff]
        %v473 = vld [vmem:[%s404 + $0x164] sm:$0xf]
        %v474 = vld [vmem:[%s404 + $0x168] sm:$0xff]
        %v475 = vld [vmem:[%s404 + $0x170] sm:$0xf]
        %v476 = vld [vmem:[%s404 + $0x174] sm:$0xff]
        %v477 = vld [vmem:[%s404 + $0x17c] sm:$0xf]
        %v478 = vld [vmem:[%s1] sm:$0xf]
        %v479 = vld [vmem:[%s1 + $0x4] sm:$0xf]
        %v480 = vld [vmem:[%s1 + $0x8] sm:$0xf]
        %v481 = vld [vmem:[%s1 + $0xc] sm:$0xf]
        %v482 = vld [vmem:[%s1 + $0x10] sm:$0xf]
        %v483 = vld [vmem:[%s1 + $0x14] sm:$0xf]
        %v484 = vld [vmem:[%s1 + $0x18] sm:$0xf]
        %v485 = vld [vmem:[%s1 + $0x1c] sm:$0xf]
        %v486 = vld [vmem:[%s1 + $0x20] sm:$0xf]
        %v487 = vld [vmem:[%s1 + $0x24] sm:$0xf]
        %v488 = vld [vmem:[%s1 + $0x28] sm:$0xf]
        %v489 = vld [vmem:[%s1 + $0x2c] sm:$0xf]
        %v490 = vld [vmem:[%s1 + $0x30] sm:$0xf]
        %v491 = vld [vmem:[%s1 + $0x34] sm:$0xf]
        %v492 = vld [vmem:[%s1 + $0x38] sm:$0xf]
        %v493 = vld [vmem:[%s1 + $0x3c] sm:$0xf]
        %v494 = vld [vmem:[%s1 + $0x40] sm:$0xf]
        %v495 = vld [vmem:[%s1 + $0x44] sm:$0xf]
        %v496 = vld [vmem:[%s1 + $0x48] sm:$0xf]
        %v497 = vld [vmem:[%s1 + $0x4c] sm:$0xf]
        %v498 = vld [vmem:[%s1 + $0x50] sm:$0xf]
        %v499 = vld [vmem:[%s1 + $0x54] sm:$0xf]
        %v500 = vld [vmem:[%s1 + $0x58] sm:$0xf]
        %v501 = vld [vmem:[%s1 + $0x5c] sm:$0xf]
        %v502 = vld [vmem:[%s1 + $0x60] sm:$0xf]
        %v503 = vld [vmem:[%s1 + $0x64] sm:$0xf]
        %v504 = vld [vmem:[%s1 + $0x68] sm:$0xf]
        %v505 = vld [vmem:[%s1 + $0x6c] sm:$0xf]
        %v506 = vld [vmem:[%s1 + $0x70] sm:$0xf]
        %v507 = vld [vmem:[%s1 + $0x74] sm:$0xf]
        %v508 = vld [vmem:[%s1 + $0x78] sm:$0xf]
        %v509 = vld [vmem:[%s1 + $0x7c] sm:$0xf]
        %v510 = vld [vmem:[%s1 + $0x80] sm:$0xf]
        %v511 = vld [vmem:[%s1 + $0x84] sm:$0xf]
        %v512 = vld [vmem:[%s1 + $0x88] sm:$0xf]
        %v513 = vld [vmem:[%s1 + $0x8c] sm:$0xf]
        %v514 = vld [vmem:[%s2] sm:$0x1]
        %v516 = vlaneseq
        %v517 = vshrl.u32 %v516, 7
        %v518 = vsub.s32 0, %v517
        %v519 = vrot.slane %v514, %v518
        %v585 = vunpack.c.l.b16 %v414
        %v586 = vunpack.c.h.b16 %v414
        %v587 = vunpack.c.l.b16 %v415
        %v588 = vunpack.c.l.b16 %v416
        %v589 = vunpack.c.h.b16 %v416
        %v590 = vunpack.c.l.b16 %v417
        %v591 = vunpack.c.l.b16 %v418
        %v592 = vunpack.c.h.b16 %v418
        %v593 = vunpack.c.l.b16 %v419
        %v594 = vunpack.c.l.b16 %v420
        %v595 = vunpack.c.h.b16 %v420
        %v596 = vunpack.c.l.b16 %v421
        %v597 = vunpack.c.l.b16 %v422
        %v598 = vunpack.c.h.b16 %v422
        %v599 = vunpack.c.l.b16 %v423
        %v600 = vunpack.c.l.b16 %v424
        %v601 = vunpack.c.h.b16 %v424
        %v602 = vunpack.c.l.b16 %v425
        %v603 = vunpack.c.l.b16 %v426
        %v604 = vunpack.c.h.b16 %v426
        %v605 = vunpack.c.l.b16 %v427
        %v606 = vunpack.c.l.b16 %v428
        %v607 = vunpack.c.h.b16 %v428
        %v608 = vunpack.c.l.b16 %v429
        %v609 = vunpack.c.l.b16 %v430
        %v610 = vunpack.c.h.b16 %v430
        %v611 = vunpack.c.l.b16 %v431
        %v612 = vunpack.c.l.b16 %v432
        %v613 = vunpack.c.h.b16 %v432
        %v614 = vunpack.c.l.b16 %v433
        %v615 = vunpack.c.l.b16 %v434
        %v616 = vunpack.c.h.b16 %v434
        %v617 = vunpack.c.l.b16 %v435
        %v618 = vunpack.c.l.b16 %v436
        %v619 = vunpack.c.h.b16 %v436
        %v620 = vunpack.c.l.b16 %v437
        %v621 = vunpack.c.l.b16 %v438
        %v622 = vunpack.c.h.b16 %v438
        %v623 = vunpack.c.l.b16 %v439
        %v624 = vunpack.c.l.b16 %v440
        %v625 = vunpack.c.h.b16 %v440
        %v626 = vunpack.c.l.b16 %v441
        %v627 = vunpack.c.l.b16 %v442
        %v628 = vunpack.c.h.b16 %v442
        %v629 = vunpack.c.l.b16 %v443
        %v630 = vunpack.c.l.b16 %v444
        %v631 = vunpack.c.h.b16 %v444
        %v632 = vunpack.c.l.b16 %v445
        %v633 = vunpack.c.l.b16 %v446
        %v634 = vunpack.c.h.b16 %v446
        %v635 = vunpack.c.l.b16 %v447
        %v636 = vunpack.c.l.b16 %v448
        %v637 = vunpack.c.h.b16 %v448
        %v638 = vunpack.c.l.b16 %v449
        %v639 = vunpack.c.l.b16 %v450
        %v640 = vunpack.c.h.b16 %v450
        %v641 = vunpack.c.l.b16 %v451
        %v642 = vunpack.c.l.b16 %v452
        %v643 = vunpack.c.h.b16 %v452
        %v644 = vunpack.c.l.b16 %v453
        %v645 = vunpack.c.l.b16 %v454
        %v646 = vunpack.c.h.b16 %v454
        %v647 = vunpack.c.l.b16 %v455
        %v648 = vunpack.c.l.b16 %v456
        %v649 = vunpack.c.h.b16 %v456
        %v650 = vunpack.c.l.b16 %v457
        %v651 = vunpack.c.l.b16 %v458
        %v652 = vunpack.c.h.b16 %v458
        %v653 = vunpack.c.l.b16 %v459
        %v654 = vunpack.c.l.b16 %v460
        %v655 = vunpack.c.h.b16 %v460
        %v656 = vunpack.c.l.b16 %v461
        %v657 = vunpack.c.l.b16 %v462
        %v658 = vunpack.c.h.b16 %v462
        %v659 = vunpack.c.l.b16 %v463
        %v660 = vunpack.c.l.b16 %v464
        %v661 = vunpack.c.h.b16 %v464
        %v662 = vunpack.c.l.b16 %v465
        %v663 = vunpack.c.l.b16 %v466
        %v664 = vunpack.c.h.b16 %v466
        %v665 = vunpack.c.l.b16 %v467
        %v666 = vunpack.c.l.b16 %v468
        %v667 = vunpack.c.h.b16 %v468
        %v668 = vunpack.c.l.b16 %v469
        %v669 = vunpack.c.l.b16 %v470
        %v670 = vunpack.c.h.b16 %v470
        %v671 = vunpack.c.l.b16 %v471
        %v672 = vunpack.c.l.b16 %v472
        %v673 = vunpack.c.h.b16 %v472
        %v674 = vunpack.c.l.b16 %v473
        %v675 = vunpack.c.l.b16 %v474
        %v676 = vunpack.c.h.b16 %v474
        %v677 = vunpack.c.l.b16 %v475
        %v678 = vunpack.c.l.b16 %v476
        %v679 = vunpack.c.h.b16 %v476
        %v680 = vunpack.c.l.b16 %v477
        %v681 = vpack.c.b16 %v588, %v585
        %v682 = vpack.c.b16 %v589, %v586
        %v683 = vpack.c.b16 %v590, %v587
        %v684 = vpack.c.b16 %v594, %v591
        %v685 = vpack.c.b16 %v595, %v592
        %v686 = vpack.c.b16 %v596, %v593
        %v687 = vpack.c.b16 %v600, %v597
        %v688 = vpack.c.b16 %v601, %v598
        %v689 = vpack.c.b16 %v602, %v599
        %v690 = vpack.c.b16 %v606, %v603
        %v691 = vpack.c.b16 %v607, %v604
        %v692 = vpack.c.b16 %v608, %v605
        %v693 = vpack.c.b16 %v612, %v609
        %v694 = vpack.c.b16 %v613, %v610
        %v695 = vpack.c.b16 %v614, %v611
        %v696 = vpack.c.b16 %v618, %v615
        %v697 = vpack.c.b16 %v619, %v616
        %v698 = vpack.c.b16 %v620, %v617
        %v699 = vpack.c.b16 %v624, %v621
        %v700 = vpack.c.b16 %v625, %v622
        %v701 = vpack.c.b16 %v626, %v623
        %v702 = vpack.c.b16 %v630, %v627
        %v703 = vpack.c.b16 %v631, %v628
        %v704 = vpack.c.b16 %v632, %v629
        %v705 = vpack.c.b16 %v636, %v633
        %v706 = vpack.c.b16 %v637, %v634
        %v707 = vpack.c.b16 %v638, %v635
        %v708 = vpack.c.b16 %v642, %v639
        %v709 = vpack.c.b16 %v643, %v640
        %v710 = vpack.c.b16 %v644, %v641
        %v711 = vpack.c.b16 %v648, %v645
        %v712 = vpack.c.b16 %v649, %v646
        %v713 = vpack.c.b16 %v650, %v647
        %v714 = vpack.c.b16 %v654, %v651
        %v715 = vpack.c.b16 %v655, %v652
        %v716 = vpack.c.b16 %v656, %v653
        %v717 = vpack.c.b16 %v660, %v657
        %v718 = vpack.c.b16 %v661, %v658
        %v719 = vpack.c.b16 %v662, %v659
        %v720 = vpack.c.b16 %v666, %v663
        %v721 = vpack.c.b16 %v667, %v664
        %v722 = vpack.c.b16 %v668, %v665
        %v723 = vpack.c.b16 %v672, %v669
        %v724 = vpack.c.b16 %v673, %v670
        %v725 = vpack.c.b16 %v674, %v671
        %v726 = vpack.c.b16 %v678, %v675
        %v727 = vpack.c.b16 %v679, %v676
        %v728 = vpack.c.b16 %v680, %v677
        %v797 = vunpack.c.l.b16 %v478
        %v798 = vunpack.c.l.b16 %v479
        %v799 = vunpack.c.l.b16 %v480
        %v800 = vunpack.c.l.b16 %v481
        %v801 = vunpack.c.l.b16 %v482
        %v802 = vunpack.c.l.b16 %v483
        %v803 = vunpack.c.l.b16 %v484
        %v804 = vunpack.c.l.b16 %v485
        %v805 = vunpack.c.l.b16 %v486
        %v806 = vunpack.c.l.b16 %v487
        %v807 = vunpack.c.l.b16 %v488
        %v808 = vunpack.c.l.b16 %v489
        %v809 = vunpack.c.l.b16 %v490
        %v810 = vunpack.c.l.b16 %v491
        %v811 = vunpack.c.l.b16 %v492
        %v812 = vunpack.c.l.b16 %v493
        %v813 = vunpack.c.l.b16 %v494
        %v814 = vunpack.c.l.b16 %v495
        %v815 = vunpack.c.l.b16 %v496
        %v816 = vunpack.c.l.b16 %v497
        %v817 = vunpack.c.l.b16 %v498
        %v818 = vunpack.c.l.b16 %v499
        %v819 = vunpack.c.l.b16 %v500
        %v820 = vunpack.c.l.b16 %v501
        %v821 = vunpack.c.l.b16 %v502
        %v822 = vunpack.c.l.b16 %v503
        %v823 = vunpack.c.l.b16 %v504
        %v824 = vunpack.c.l.b16 %v505
        %v825 = vunpack.c.l.b16 %v506
        %v826 = vunpack.c.l.b16 %v507
        %v827 = vunpack.c.l.b16 %v508
        %v828 = vunpack.c.l.b16 %v509
        %v829 = vunpack.c.l.b16 %v510
        %v830 = vunpack.c.l.b16 %v511
        %v831 = vunpack.c.l.b16 %v512
        %v832 = vunpack.c.l.b16 %v513
        %v833 = vpack.c.b16 %v798, %v797
        %v834 = vpack.c.b16 %v800, %v799
        %v835 = vpack.c.b16 %v802, %v801
        %v836 = vpack.c.b16 %v804, %v803
        %v837 = vpack.c.b16 %v806, %v805
        %v838 = vpack.c.b16 %v808, %v807
        %v839 = vpack.c.b16 %v810, %v809
        %v840 = vpack.c.b16 %v812, %v811
        %v841 = vpack.c.b16 %v814, %v813
        %v842 = vpack.c.b16 %v816, %v815
        %v843 = vpack.c.b16 %v818, %v817
        %v844 = vpack.c.b16 %v820, %v819
        %v845 = vpack.c.b16 %v822, %v821
        %v846 = vpack.c.b16 %v824, %v823
        %v847 = vpack.c.b16 %v826, %v825
        %v848 = vpack.c.b16 %v828, %v827
        %v849 = vpack.c.b16 %v830, %v829
        %v850 = vpack.c.b16 %v832, %v831
        %vm869 = vcmask 261120
        %v871 = vsel %vm869, %v683, 0
        %v874 = vsel %vm869, %v686, 0
        %v877 = vsel %vm869, %v689, 0
        %v880 = vsel %vm869, %v692, 0
        %v883 = vsel %vm869, %v695, 0
        %v886 = vsel %vm869, %v698, 0
        %v889 = vsel %vm869, %v701, 0
        %v892 = vsel %vm869, %v704, 0
        %v895 = vsel %vm869, %v707, 0
        %v898 = vsel %vm869, %v710, 0
        %v901 = vsel %vm869, %v713, 0
        %v904 = vsel %vm869, %v716, 0
        %v907 = vsel %vm869, %v719, 0
        %v910 = vsel %vm869, %v722, 0
        %v913 = vsel %vm869, %v725, 0
        %v916 = vsel %vm869, %v728, 0
        %918 = vmatprep.subr.bf16.mxu0 0
        %919 = vmatpush1.bf16.msra.mxu0 %v833
        %920 = vmatprep.subr.bf16.mxu0 0
        %921 = vmatpush1.bf16.msra.mxu0 %v834
        %922 = vmatprep.subr.bf16.mxu0 0
        %923 = vmatpush1.bf16.msra.mxu0 %v835
        %924 = vmatprep.subr.bf16.mxu0 0
        %925 = vmatpush1.bf16.msra.mxu0 %v836
        %926 = vmatprep.subr.bf16.mxu0 0
        %927 = vmatpush1.bf16.msra.mxu0 %v837
        %928 = vmatprep.subr.bf16.mxu0 0
        %929 = vmatpush1.bf16.msra.mxu0 %v838
        %930 = vmatprep.subr.bf16.mxu0 0
        %931 = vmatpush1.bf16.msra.mxu0 %v839
        %932 = vmatprep.subr.bf16.mxu0 0
        %933 = vmatpush1.bf16.msra.mxu0 %v840
        %934 = vmatprep.subr.bf16.mxu0 0
        %935 = vmatpush1.bf16.msra.mxu0 %v841
        %936 = vmatprep.subr.bf16.mxu0 0
        %937 = vmatpush1.bf16.msra.mxu0 %v842
        %938 = vmatprep.subr.bf16.mxu0 0
        %939 = vmatpush1.bf16.msra.mxu0 %v843
        %940 = vmatprep.subr.bf16.mxu0 0
        %941 = vmatpush1.bf16.msra.mxu0 %v844
        %942 = vmatprep.subr.bf16.mxu0 0
        %943 = vmatpush1.bf16.msra.mxu0 %v845
        %944 = vmatprep.subr.bf16.mxu0 0
        %945 = vmatpush1.bf16.msra.mxu0 %v846
        %946 = vmatprep.subr.bf16.mxu0 0
        %947 = vmatpush1.bf16.msra.mxu0 %v847
        %948 = vmatprep.subr.bf16.mxu0 0
        %949 = vmatpush1.bf16.msra.mxu0 %v848
        %950 = vmatprep.mubr.bf16.mxu0 %v682
        %951 = vmatmul.mubr.bf16.gmra.mrb[0].mxu0 %v681
        %v952 = vpop.f32.mrb[0].mxu0
        %v953 = vadd.f32 %v519, %v952
        %v954 = vpop.f32.mrb[0].mxu0
        %v955 = vpop.f32.mrb[0].mxu0
        %v956 = vadd.f32 %v519, %v955
        %v957 = vpop.f32.mrb[0].mxu0
        %958 = vmatprep.mubr.bf16.mxu0 %v685
        %959 = vmatmul.mubr.bf16.gmra.mrb[0].mxu0 %v684
        %v960 = vpop.f32.mrb[0].mxu0
        %v961 = vadd.f32 %v519, %v960
        %v962 = vpop.f32.mrb[0].mxu0
        %v963 = vpop.f32.mrb[0].mxu0
        %v964 = vadd.f32 %v519, %v963
        %v965 = vpop.f32.mrb[0].mxu0
        %966 = vmatprep.mubr.bf16.mxu0 %v688
        %967 = vmatmul.mubr.bf16.gmra.mrb[0].mxu0 %v687
        %v968 = vpop.f32.mrb[0].mxu0
        %v969 = vadd.f32 %v519, %v968
        %v970 = vpop.f32.mrb[0].mxu0
        %v971 = vpop.f32.mrb[0].mxu0
        %v972 = vadd.f32 %v519, %v971
        %v973 = vpop.f32.mrb[0].mxu0
        %974 = vmatprep.mubr.bf16.mxu0 %v691
        %975 = vmatmul.mubr.bf16.gmra.mrb[0].mxu0 %v690
        %v976 = vpop.f32.mrb[0].mxu0
        %v977 = vadd.f32 %v519, %v976
        %v978 = vpop.f32.mrb[0].mxu0
        %v979 = vpop.f32.mrb[0].mxu0
        %v980 = vadd.f32 %v519, %v979
        %v981 = vpop.f32.mrb[0].mxu0
        %982 = vmatprep.mubr.bf16.mxu0 %v694
        %983 = vmatmul.mubr.bf16.gmra.mrb[0].mxu0 %v693
        %v984 = vpop.f32.mrb[0].mxu0
        %v985 = vadd.f32 %v519, %v984
        %v986 = vpop.f32.mrb[0].mxu0
        %v987 = vpop.f32.mrb[0].mxu0
        %v988 = vadd.f32 %v519, %v987
        %v989 = vpop.f32.mrb[0].mxu0
        %990 = vmatprep.mubr.bf16.mxu0 %v697
        %991 = vmatmul.mubr.bf16.gmra.mrb[0].mxu0 %v696
        %v992 = vpop.f32.mrb[0].mxu0
        %v993 = vadd.f32 %v519, %v992
        %v994 = vpop.f32.mrb[0].mxu0
        %v995 = vpop.f32.mrb[0].mxu0
        %v996 = vadd.f32 %v519, %v995
        %v997 = vpop.f32.mrb[0].mxu0
        %998 = vmatprep.mubr.bf16.mxu0 %v700
        %999 = vmatmul.mubr.bf16.gmra.mrb[0].mxu0 %v699
        %v1000 = vpop.f32.mrb[0].mxu0
        %v1001 = vadd.f32 %v519, %v1000
        %v1002 = vpop.f32.mrb[0].mxu0
        %v1003 = vpop.f32.mrb[0].mxu0
        %v1004 = vadd.f32 %v519, %v1003
        %v1005 = vpop.f32.mrb[0].mxu0
        %1006 = vmatprep.mubr.bf16.mxu0 %v703
        %1007 = vmatmul.mubr.bf16.gmra.mrb[0].mxu0 %v702
        %v1008 = vpop.f32.mrb[0].mxu0
        %v1009 = vadd.f32 %v519, %v1008
        %v1010 = vpop.f32.mrb[0].mxu0
        %v1011 = vpop.f32.mrb[0].mxu0
        %v1012 = vadd.f32 %v519, %v1011
        %v1013 = vpop.f32.mrb[0].mxu0
        %1014 = vmatprep.mubr.bf16.mxu0 %v706
        %1015 = vmatmul.mubr.bf16.gmra.mrb[0].mxu0 %v705
        %v1016 = vpop.f32.mrb[0].mxu0
        %v1017 = vadd.f32 %v519, %v1016
        %v1018 = vpop.f32.mrb[0].mxu0
        %v1019 = vpop.f32.mrb[0].mxu0
        %v1020 = vadd.f32 %v519, %v1019
        %v1021 = vpop.f32.mrb[0].mxu0
        %1022 = vmatprep.mubr.bf16.mxu0 %v709
        %1023 = vmatmul.mubr.bf16.gmra.mrb[0].mxu0 %v708
        %v1024 = vpop.f32.mrb[0].mxu0
        %v1025 = vadd.f32 %v519, %v1024
        %v1026 = vpop.f32.mrb[0].mxu0
        %v1027 = vpop.f32.mrb[0].mxu0
        %v1028 = vadd.f32 %v519, %v1027
        %v1029 = vpop.f32.mrb[0].mxu0
        %1030 = vmatprep.mubr.bf16.mxu0 %v712
        %1031 = vmatmul.mubr.bf16.gmra.mrb[0].mxu0 %v711
        %v1032 = vpop.f32.mrb[0].mxu0
        %v1033 = vadd.f32 %v519, %v1032
        %v1034 = vpop.f32.mrb[0].mxu0
        %v1035 = vpop.f32.mrb[0].mxu0
        %v1036 = vadd.f32 %v519, %v1035
        %v1037 = vpop.f32.mrb[0].mxu0
        %1038 = vmatprep.mubr.bf16.mxu0 %v715
        %1039 = vmatmul.mubr.bf16.gmra.mrb[0].mxu0 %v714
        %v1040 = vpop.f32.mrb[0].mxu0
        %v1041 = vadd.f32 %v519, %v1040
        %v1042 = vpop.f32.mrb[0].mxu0
        %v1043 = vpop.f32.mrb[0].mxu0
        %v1044 = vadd.f32 %v519, %v1043
        %v1045 = vpop.f32.mrb[0].mxu0
        %1046 = vmatprep.mubr.bf16.mxu0 %v718
        %1047 = vmatmul.mubr.bf16.gmra.mrb[0].mxu0 %v717
        %v1048 = vpop.f32.mrb[0].mxu0
        %v1049 = vadd.f32 %v519, %v1048
        %v1050 = vpop.f32.mrb[0].mxu0
        %v1051 = vpop.f32.mrb[0].mxu0
        %v1052 = vadd.f32 %v519, %v1051
        %v1053 = vpop.f32.mrb[0].mxu0
        %1054 = vmatprep.mubr.bf16.mxu0 %v721
        %1055 = vmatmul.mubr.bf16.gmra.mrb[0].mxu0 %v720
        %v1056 = vpop.f32.mrb[0].mxu0
        %v1057 = vadd.f32 %v519, %v1056
        %v1058 = vpop.f32.mrb[0].mxu0
        %v1059 = vpop.f32.mrb[0].mxu0
        %v1060 = vadd.f32 %v519, %v1059
        %v1061 = vpop.f32.mrb[0].mxu0
        %1062 = vmatprep.mubr.bf16.mxu0 %v724
        %1063 = vmatmul.mubr.bf16.gmra.mrb[0].mxu0 %v723
        %v1064 = vpop.f32.mrb[0].mxu0
        %v1065 = vadd.f32 %v519, %v1064
        %v1066 = vpop.f32.mrb[0].mxu0
        %v1067 = vpop.f32.mrb[0].mxu0
        %v1068 = vadd.f32 %v519, %v1067
        %v1069 = vpop.f32.mrb[0].mxu0
        %1070 = vmatprep.mubr.bf16.mxu0 %v727
        %1071 = vmatmul.mubr.bf16.gmra.mrb[0].mxu0 %v726
        %v1072 = vpop.f32.mrb[0].mxu0
        %v1073 = vadd.f32 %v519, %v1072
        %v1074 = vpop.f32.mrb[0].mxu0
        %v1075 = vpop.f32.mrb[0].mxu0
        %v1076 = vadd.f32 %v519, %v1075
        %v1077 = vpop.f32.mrb[0].mxu0
        %1078 = vdwg.mxu0
        %1079 = vmatprep.subr.bf16.mxu0 0
        %1080 = vmatpush1.bf16.msra.mxu0 %v849
        %1081 = vmatprep.subr.bf16.mxu0 0
        %1082 = vmatpush1.bf16.msra.mxu0 %v850
        %1083 = vmatprep.subr.bf16.mxu0 0
        %1084 = vmatpush1.bf16.msra.mxu0 0
        %1085 = vmatprep.subr.bf16.mxu0 0
        %1086 = vmatpush1.bf16.msra.mxu0 0
        %1087 = vmatprep.subr.bf16.mxu0 0
        %1088 = vmatpush1.bf16.msra.mxu0 0
        %1089 = vmatprep.subr.bf16.mxu0 0
        %1090 = vmatpush1.bf16.msra.mxu0 0
        %1091 = vmatprep.subr.bf16.mxu0 0
        %1092 = vmatpush1.bf16.msra.mxu0 0
        %1093 = vmatprep.subr.bf16.mxu0 0
        %1094 = vmatpush1.bf16.msra.mxu0 0
        %1095 = vmatprep.subr.bf16.mxu0 0
        %1096 = vmatpush1.bf16.msra.mxu0 0
        %1097 = vmatprep.subr.bf16.mxu0 0
        %1098 = vmatpush1.bf16.msra.mxu0 0
        %1099 = vmatprep.subr.bf16.mxu0 0
        %1100 = vmatpush1.bf16.msra.mxu0 0
        %1101 = vmatprep.subr.bf16.mxu0 0
        %1102 = vmatpush1.bf16.msra.mxu0 0
        %1103 = vmatprep.subr.bf16.mxu0 0
        %1104 = vmatpush1.bf16.msra.mxu0 0
        %1105 = vmatprep.subr.bf16.mxu0 0
        %1106 = vmatpush1.bf16.msra.mxu0 0
        %1107 = vmatprep.subr.bf16.mxu0 0
        %1108 = vmatpush1.bf16.msra.mxu0 0
        %1109 = vmatprep.subr.bf16.mxu0 0
        %1110 = vmatpush1.bf16.msra.mxu0 0
        %1111 = vmatprep.mubr.bf16.mxu0 0
        %1112 = vmatmul.mubr.bf16.gmra.mrb[0].mxu0 %v871
        %v1113 = vpop.f32.mrb[0].mxu0
        %v1114 = vadd.f32 %v953, %v1113
        %v1115 = vpop.f32.mrb[0].mxu0
        %v1116 = vpop.f32.mrb[0].mxu0
        %v1117 = vadd.f32 %v956, %v1116
        %v1118 = vpop.f32.mrb[0].mxu0
        %1119 = vmatprep.mubr.bf16.mxu0 0
        %1120 = vmatmul.mubr.bf16.gmra.mrb[0].mxu0 %v874
        %v1121 = vpop.f32.mrb[0].mxu0
        %v1122 = vadd.f32 %v961, %v1121
        %v1123 = vpop.f32.mrb[0].mxu0
        %v1124 = vpop.f32.mrb[0].mxu0
        %v1125 = vadd.f32 %v964, %v1124
        %v1126 = vpop.f32.mrb[0].mxu0
        %1127 = vmatprep.mubr.bf16.mxu0 0
        %1128 = vmatmul.mubr.bf16.gmra.mrb[0].mxu0 %v877
        %v1129 = vpop.f32.mrb[0].mxu0
        %v1130 = vadd.f32 %v969, %v1129
        %v1131 = vpop.f32.mrb[0].mxu0
        %v1132 = vpop.f32.mrb[0].mxu0
        %v1133 = vadd.f32 %v972, %v1132
        %v1134 = vpop.f32.mrb[0].mxu0
        %1135 = vmatprep.mubr.bf16.mxu0 0
        %1136 = vmatmul.mubr.bf16.gmra.mrb[0].mxu0 %v880
        %v1137 = vpop.f32.mrb[0].mxu0
        %v1138 = vadd.f32 %v977, %v1137
        %v1139 = vpop.f32.mrb[0].mxu0
        %v1140 = vpop.f32.mrb[0].mxu0
        %v1141 = vadd.f32 %v980, %v1140
        %v1142 = vpop.f32.mrb[0].mxu0
        %1143 = vmatprep.mubr.bf16.mxu0 0
        %1144 = vmatmul.mubr.bf16.gmra.mrb[0].mxu0 %v883
        %v1145 = vpop.f32.mrb[0].mxu0
        %v1146 = vadd.f32 %v985, %v1145
        %v1147 = vpop.f32.mrb[0].mxu0
        %v1148 = vpop.f32.mrb[0].mxu0
        %v1149 = vadd.f32 %v988, %v1148
        %v1150 = vpop.f32.mrb[0].mxu0
        %1151 = vmatprep.mubr.bf16.mxu0 0
        %1152 = vmatmul.mubr.bf16.gmra.mrb[0].mxu0 %v886
        %v1153 = vpop.f32.mrb[0].mxu0
        %v1154 = vadd.f32 %v993, %v1153
        %v1155 = vpop.f32.mrb[0].mxu0
        %v1156 = vpop.f32.mrb[0].mxu0
        %v1157 = vadd.f32 %v996, %v1156
        %v1158 = vpop.f32.mrb[0].mxu0
        %1159 = vmatprep.mubr.bf16.mxu0 0
        %1160 = vmatmul.mubr.bf16.gmra.mrb[0].mxu0 %v889
        %v1161 = vpop.f32.mrb[0].mxu0
        %v1162 = vadd.f32 %v1001, %v1161
        %v1163 = vpop.f32.mrb[0].mxu0
        %v1164 = vpop.f32.mrb[0].mxu0
        %v1165 = vadd.f32 %v1004, %v1164
        %v1166 = vpop.f32.mrb[0].mxu0
        %1167 = vmatprep.mubr.bf16.mxu0 0
        %1168 = vmatmul.mubr.bf16.gmra.mrb[0].mxu0 %v892
        %v1169 = vpop.f32.mrb[0].mxu0
        %v1170 = vadd.f32 %v1009, %v1169
        %v1171 = vpop.f32.mrb[0].mxu0
        %v1172 = vpop.f32.mrb[0].mxu0
        %v1173 = vadd.f32 %v1012, %v1172
        %v1174 = vpop.f32.mrb[0].mxu0
        %1175 = vmatprep.mubr.bf16.mxu0 0
        %1176 = vmatmul.mubr.bf16.gmra.mrb[0].mxu0 %v895
        %v1177 = vpop.f32.mrb[0].mxu0
        %v1178 = vadd.f32 %v1017, %v1177
        %v1179 = vpop.f32.mrb[0].mxu0
        %v1180 = vpop.f32.mrb[0].mxu0
        %v1181 = vadd.f32 %v1020, %v1180
        %v1182 = vpop.f32.mrb[0].mxu0
        %1183 = vmatprep.mubr.bf16.mxu0 0
        %1184 = vmatmul.mubr.bf16.gmra.mrb[0].mxu0 %v898
        %v1185 = vpop.f32.mrb[0].mxu0
        %v1186 = vadd.f32 %v1025, %v1185
        %v1187 = vpop.f32.mrb[0].mxu0
        %v1188 = vpop.f32.mrb[0].mxu0
        %v1189 = vadd.f32 %v1028, %v1188
        %v1190 = vpop.f32.mrb[0].mxu0
        %1191 = vmatprep.mubr.bf16.mxu0 0
        %1192 = vmatmul.mubr.bf16.gmra.mrb[0].mxu0 %v901
        %v1193 = vpop.f32.mrb[0].mxu0
        %v1194 = vadd.f32 %v1033, %v1193
        %v1195 = vpop.f32.mrb[0].mxu0
        %v1196 = vpop.f32.mrb[0].mxu0
        %v1197 = vadd.f32 %v1036, %v1196
        %v1198 = vpop.f32.mrb[0].mxu0
        %1199 = vmatprep.mubr.bf16.mxu0 0
        %1200 = vmatmul.mubr.bf16.gmra.mrb[0].mxu0 %v904
        %v1201 = vpop.f32.mrb[0].mxu0
        %v1202 = vadd.f32 %v1041, %v1201
        %v1203 = vpop.f32.mrb[0].mxu0
        %v1204 = vpop.f32.mrb[0].mxu0
        %v1205 = vadd.f32 %v1044, %v1204
        %v1206 = vpop.f32.mrb[0].mxu0
        %1207 = vmatprep.mubr.bf16.mxu0 0
        %1208 = vmatmul.mubr.bf16.gmra.mrb[0].mxu0 %v907
        %v1209 = vpop.f32.mrb[0].mxu0
        %v1210 = vadd.f32 %v1049, %v1209
        %v1211 = vpop.f32.mrb[0].mxu0
        %v1212 = vpop.f32.mrb[0].mxu0
        %v1213 = vadd.f32 %v1052, %v1212
        %v1214 = vpop.f32.mrb[0].mxu0
        %1215 = vmatprep.mubr.bf16.mxu0 0
        %1216 = vmatmul.mubr.bf16.gmra.mrb[0].mxu0 %v910
        %v1217 = vpop.f32.mrb[0].mxu0
        %v1218 = vadd.f32 %v1057, %v1217
        %v1219 = vpop.f32.mrb[0].mxu0
        %v1220 = vpop.f32.mrb[0].mxu0
        %v1221 = vadd.f32 %v1060, %v1220
        %v1222 = vpop.f32.mrb[0].mxu0
        %1223 = vmatprep.mubr.bf16.mxu0 0
        %1224 = vmatmul.mubr.bf16.gmra.mrb[0].mxu0 %v913
        %v1225 = vpop.f32.mrb[0].mxu0
        %v1226 = vadd.f32 %v1065, %v1225
        %v1227 = vpop.f32.mrb[0].mxu0
        %v1228 = vpop.f32.mrb[0].mxu0
        %v1229 = vadd.f32 %v1068, %v1228
        %v1230 = vpop.f32.mrb[0].mxu0
        %1231 = vmatprep.mubr.bf16.mxu0 0
        %1232 = vmatmul.mubr.bf16.gmra.mrb[0].mxu0 %v916
        %v1233 = vpop.f32.mrb[0].mxu0
        %v1234 = vadd.f32 %v1073, %v1233
        %v1235 = vpop.f32.mrb[0].mxu0
        %v1236 = vpop.f32.mrb[0].mxu0
        %v1237 = vadd.f32 %v1076, %v1236
        %v1238 = vpop.f32.mrb[0].mxu0
        %1239 = vdwg.mxu0
        %v1240 = vld [vmem:[%s3] sm:$0x1]
        %v1242 = vlaneseq
        %v1243 = vshrl.u32 %v1242, 7
        %v1244 = vsub.s32 0, %v1243
        %v1245 = vrot.slane %v1240, %v1244
        %v1247 = vmul.f32 %v1114, %v1245
        %v1248 = vmul.f32 %v1117, %v1245
        %v1249 = vmul.f32 %v1122, %v1245
        %v1250 = vmul.f32 %v1125, %v1245
        %v1251 = vmul.f32 %v1130, %v1245
        %v1252 = vmul.f32 %v1133, %v1245
        %v1253 = vmul.f32 %v1138, %v1245
        %v1254 = vmul.f32 %v1141, %v1245
        %v1255 = vmul.f32 %v1146, %v1245
        %v1256 = vmul.f32 %v1149, %v1245
        %v1257 = vmul.f32 %v1154, %v1245
        %v1258 = vmul.f32 %v1157, %v1245
        %v1259 = vmul.f32 %v1162, %v1245
        %v1260 = vmul.f32 %v1165, %v1245
        %v1261 = vmul.f32 %v1170, %v1245
        %v1262 = vmul.f32 %v1173, %v1245
        %v1263 = vmul.f32 %v1178, %v1245
        %v1264 = vmul.f32 %v1181, %v1245
        %v1265 = vmul.f32 %v1186, %v1245
        %v1266 = vmul.f32 %v1189, %v1245
        %v1267 = vmul.f32 %v1194, %v1245
        %v1268 = vmul.f32 %v1197, %v1245
        %v1269 = vmul.f32 %v1202, %v1245
        %v1270 = vmul.f32 %v1205, %v1245
        %v1271 = vmul.f32 %v1210, %v1245
        %v1272 = vmul.f32 %v1213, %v1245
        %v1273 = vmul.f32 %v1218, %v1245
        %v1274 = vmul.f32 %v1221, %v1245
        %v1275 = vmul.f32 %v1226, %v1245
        %v1276 = vmul.f32 %v1229, %v1245
        %v1277 = vmul.f32 %v1234, %v1245
        %v1278 = vmul.f32 %v1237, %v1245
        %v1279 = vld [vmem:[%s4] sm:$0x1]
        %v1281 = vlaneseq
        %v1282 = vshrl.u32 %v1281, 7
        %v1283 = vsub.s32 0, %v1282
        %v1284 = vrot.slane %v1279, %v1283
        %v1286 = vadd.f32 %v1247, %v1284
        %v1287 = vadd.f32 %v1248, %v1284
        %v1288 = vadd.f32 %v1249, %v1284
        %v1289 = vadd.f32 %v1250, %v1284
        %v1290 = vadd.f32 %v1251, %v1284
        %v1291 = vadd.f32 %v1252, %v1284
        %v1292 = vadd.f32 %v1253, %v1284
        %v1293 = vadd.f32 %v1254, %v1284
        %v1294 = vadd.f32 %v1255, %v1284
        %v1295 = vadd.f32 %v1256, %v1284
        %v1296 = vadd.f32 %v1257, %v1284
        %v1297 = vadd.f32 %v1258, %v1284
        %v1298 = vadd.f32 %v1259, %v1284
        %v1299 = vadd.f32 %v1260, %v1284
        %v1300 = vadd.f32 %v1261, %v1284
        %v1301 = vadd.f32 %v1262, %v1284
        %v1302 = vadd.f32 %v1263, %v1284
        %v1303 = vadd.f32 %v1264, %v1284
        %v1304 = vadd.f32 %v1265, %v1284
        %v1305 = vadd.f32 %v1266, %v1284
        %v1306 = vadd.f32 %v1267, %v1284
        %v1307 = vadd.f32 %v1268, %v1284
        %v1308 = vadd.f32 %v1269, %v1284
        %v1309 = vadd.f32 %v1270, %v1284
        %v1310 = vadd.f32 %v1271, %v1284
        %v1311 = vadd.f32 %v1272, %v1284
        %v1312 = vadd.f32 %v1273, %v1284
        %v1313 = vadd.f32 %v1274, %v1284
        %v1314 = vadd.f32 %v1275, %v1284
        %v1315 = vadd.f32 %v1276, %v1284
        %v1316 = vadd.f32 %v1277, %v1284
        %v1317 = vadd.f32 %v1278, %v1284
        %v1318 = vld [vmem:[%s5] sm:$0x1]
        %v1319 = vmax.f32 %v1286, 0.0
        %v1320 = vmax.f32 %v1287, 0.0
        %v1321 = vmax.f32 %v1288, 0.0
        %v1322 = vmax.f32 %v1289, 0.0
        %v1323 = vmax.f32 %v1290, 0.0
        %v1324 = vmax.f32 %v1291, 0.0
        %v1325 = vmax.f32 %v1292, 0.0
        %v1326 = vmax.f32 %v1293, 0.0
        %v1327 = vmax.f32 %v1294, 0.0
        %v1328 = vmax.f32 %v1295, 0.0
        %v1329 = vmax.f32 %v1296, 0.0
        %v1330 = vmax.f32 %v1297, 0.0
        %v1331 = vmax.f32 %v1298, 0.0
        %v1332 = vmax.f32 %v1299, 0.0
        %v1333 = vmax.f32 %v1300, 0.0
        %v1334 = vmax.f32 %v1301, 0.0
        %v1335 = vmax.f32 %v1302, 0.0
        %v1336 = vmax.f32 %v1303, 0.0
        %v1337 = vmax.f32 %v1304, 0.0
        %v1338 = vmax.f32 %v1305, 0.0
        %v1339 = vmax.f32 %v1306, 0.0
        %v1340 = vmax.f32 %v1307, 0.0
        %v1341 = vmax.f32 %v1308, 0.0
        %v1342 = vmax.f32 %v1309, 0.0
        %v1343 = vmax.f32 %v1310, 0.0
        %v1344 = vmax.f32 %v1311, 0.0
        %v1345 = vmax.f32 %v1312, 0.0
        %v1346 = vmax.f32 %v1313, 0.0
        %v1347 = vmax.f32 %v1314, 0.0
        %v1348 = vmax.f32 %v1315, 0.0
        %v1349 = vmax.f32 %v1316, 0.0
        %v1350 = vmax.f32 %v1317, 0.0
        %v1351 = vmin.f32 %v1286, 0.0
        %v1352 = vmin.f32 %v1287, 0.0
        %v1353 = vmin.f32 %v1288, 0.0
        %v1354 = vmin.f32 %v1289, 0.0
        %v1355 = vmin.f32 %v1290, 0.0
        %v1356 = vmin.f32 %v1291, 0.0
        %v1357 = vmin.f32 %v1292, 0.0
        %v1358 = vmin.f32 %v1293, 0.0
        %v1359 = vmin.f32 %v1294, 0.0
        %v1360 = vmin.f32 %v1295, 0.0
        %v1361 = vmin.f32 %v1296, 0.0
        %v1362 = vmin.f32 %v1297, 0.0
        %v1363 = vmin.f32 %v1298, 0.0
        %v1364 = vmin.f32 %v1299, 0.0
        %v1365 = vmin.f32 %v1300, 0.0
        %v1366 = vmin.f32 %v1301, 0.0
        %v1367 = vmin.f32 %v1302, 0.0
        %v1368 = vmin.f32 %v1303, 0.0
        %v1369 = vmin.f32 %v1304, 0.0
        %v1370 = vmin.f32 %v1305, 0.0
        %v1371 = vmin.f32 %v1306, 0.0
        %v1372 = vmin.f32 %v1307, 0.0
        %v1373 = vmin.f32 %v1308, 0.0
        %v1374 = vmin.f32 %v1309, 0.0
        %v1375 = vmin.f32 %v1310, 0.0
        %v1376 = vmin.f32 %v1311, 0.0
        %v1377 = vmin.f32 %v1312, 0.0
        %v1378 = vmin.f32 %v1313, 0.0
        %v1379 = vmin.f32 %v1314, 0.0
        %v1380 = vmin.f32 %v1315, 0.0
        %v1381 = vmin.f32 %v1316, 0.0
        %v1382 = vmin.f32 %v1317, 0.0
        %v1384 = vlaneseq
        %v1385 = vshrl.u32 %v1384, 7
        %v1386 = vsub.s32 0, %v1385
        %v1387 = vrot.slane %v1318, %v1386
        %v1389 = vmul.f32 %v1387, %v1351
        %v1390 = vmul.f32 %v1387, %v1352
        %v1391 = vmul.f32 %v1387, %v1353
        %v1392 = vmul.f32 %v1387, %v1354
        %v1393 = vmul.f32 %v1387, %v1355
        %v1394 = vmul.f32 %v1387, %v1356
        %v1395 = vmul.f32 %v1387, %v1357
        %v1396 = vmul.f32 %v1387, %v1358
        %v1397 = vmul.f32 %v1387, %v1359
        %v1398 = vmul.f32 %v1387, %v1360
        %v1399 = vmul.f32 %v1387, %v1361
        %v1400 = vmul.f32 %v1387, %v1362
        %v1401 = vmul.f32 %v1387, %v1363
        %v1402 = vmul.f32 %v1387, %v1364
        %v1403 = vmul.f32 %v1387, %v1365
        %v1404 = vmul.f32 %v1387, %v1366
        %v1405 = vmul.f32 %v1387, %v1367
        %v1406 = vmul.f32 %v1387, %v1368
        %v1407 = vmul.f32 %v1387, %v1369
        %v1408 = vmul.f32 %v1387, %v1370
        %v1409 = vmul.f32 %v1387, %v1371
        %v1410 = vmul.f32 %v1387, %v1372
        %v1411 = vmul.f32 %v1387, %v1373
        %v1412 = vmul.f32 %v1387, %v1374
        %v1413 = vmul.f32 %v1387, %v1375
        %v1414 = vmul.f32 %v1387, %v1376
        %v1415 = vmul.f32 %v1387, %v1377
        %v1416 = vmul.f32 %v1387, %v1378
        %v1417 = vmul.f32 %v1387, %v1379
        %v1418 = vmul.f32 %v1387, %v1380
        %v1419 = vmul.f32 %v1387, %v1381
        %v1420 = vmul.f32 %v1387, %v1382
        %v1421 = vadd.f32 %v1319, %v1389
        %v1422 = vadd.f32 %v1320, %v1390
        %v1423 = vadd.f32 %v1321, %v1391
        %v1424 = vadd.f32 %v1322, %v1392
        %v1425 = vadd.f32 %v1323, %v1393
        %v1426 = vadd.f32 %v1324, %v1394
        %v1427 = vadd.f32 %v1325, %v1395
        %v1428 = vadd.f32 %v1326, %v1396
        %v1429 = vadd.f32 %v1327, %v1397
        %v1430 = vadd.f32 %v1328, %v1398
        %v1431 = vadd.f32 %v1329, %v1399
        %v1432 = vadd.f32 %v1330, %v1400
        %v1433 = vadd.f32 %v1331, %v1401
        %v1434 = vadd.f32 %v1332, %v1402
        %v1435 = vadd.f32 %v1333, %v1403
        %v1436 = vadd.f32 %v1334, %v1404
        %v1437 = vadd.f32 %v1335, %v1405
        %v1438 = vadd.f32 %v1336, %v1406
        %v1439 = vadd.f32 %v1337, %v1407
        %v1440 = vadd.f32 %v1338, %v1408
        %v1441 = vadd.f32 %v1339, %v1409
        %v1442 = vadd.f32 %v1340, %v1410
        %v1443 = vadd.f32 %v1341, %v1411
        %v1444 = vadd.f32 %v1342, %v1412
        %v1445 = vadd.f32 %v1343, %v1413
        %v1446 = vadd.f32 %v1344, %v1414
        %v1447 = vadd.f32 %v1345, %v1415
        %v1448 = vadd.f32 %v1346, %v1416
        %v1449 = vadd.f32 %v1347, %v1417
        %v1450 = vadd.f32 %v1348, %v1418
        %v1451 = vadd.f32 %v1349, %v1419
        %v1452 = vadd.f32 %v1350, %v1420
        %v1453 = vpack.c.bf16 %v1422, %v1421
        %v1454 = vpack.c.bf16 %v1424, %v1423
        %v1455 = vpack.c.bf16 %v1426, %v1425
        %v1456 = vpack.c.bf16 %v1428, %v1427
        %v1457 = vpack.c.bf16 %v1430, %v1429
        %v1458 = vpack.c.bf16 %v1432, %v1431
        %v1459 = vpack.c.bf16 %v1434, %v1433
        %v1460 = vpack.c.bf16 %v1436, %v1435
        %v1461 = vpack.c.bf16 %v1438, %v1437
        %v1462 = vpack.c.bf16 %v1440, %v1439
        %v1463 = vpack.c.bf16 %v1442, %v1441
        %v1464 = vpack.c.bf16 %v1444, %v1443
        %v1465 = vpack.c.bf16 %v1446, %v1445
        %v1466 = vpack.c.bf16 %v1448, %v1447
        %v1467 = vpack.c.bf16 %v1450, %v1449
        %v1468 = vpack.c.bf16 %v1452, %v1451
        %v1469 = vld [vmem:[%s6] sm:$0xf]
        %v1470 = vld [vmem:[%s6 + $0x4] sm:$0xf]
        %v1471 = vld [vmem:[%s6 + $0x8] sm:$0xf]
        %v1472 = vld [vmem:[%s6 + $0xc] sm:$0xf]
        %v1473 = vld [vmem:[%s7] sm:$0x1]
        %v1475 = vlaneseq
        %v1476 = vshrl.u32 %v1475, 7
        %v1477 = vsub.s32 0, %v1476
        %v1478 = vrot.slane %v1473, %v1477
        %v1484 = vunpack.c.l.b16 %v1469
        %v1485 = vunpack.c.l.b16 %v1470
        %v1486 = vunpack.c.l.b16 %v1471
        %v1487 = vunpack.c.l.b16 %v1472
        %v1488 = vpack.c.b16 %v1485, %v1484
        %v1489 = vpack.c.b16 %v1487, %v1486
        %v1493 = vsel %vm869, %v1453, 0
        %v1496 = vsel %vm869, %v1454, 0
        %v1499 = vsel %vm869, %v1455, 0
        %v1502 = vsel %vm869, %v1456, 0
        %v1505 = vsel %vm869, %v1457, 0
        %v1508 = vsel %vm869, %v1458, 0
        %v1511 = vsel %vm869, %v1459, 0
        %v1514 = vsel %vm869, %v1460, 0
        %v1517 = vsel %vm869, %v1461, 0
        %v1520 = vsel %vm869, %v1462, 0
        %v1523 = vsel %vm869, %v1463, 0
        %v1526 = vsel %vm869, %v1464, 0
        %v1529 = vsel %vm869, %v1465, 0
        %v1532 = vsel %vm869, %v1466, 0
        %v1535 = vsel %vm869, %v1467, 0
        %v1538 = vsel %vm869, %v1468, 0
        %1540 = vmatprep.subr.bf16.mxu0 0
        %1541 = vmatpush1.bf16.msra.mxu0 %v1488
        %1542 = vmatprep.subr.bf16.mxu0 0
        %1543 = vmatpush1.bf16.msra.mxu0 %v1489
        %1544 = vmatprep.subr.bf16.mxu0 0
        %1545 = vmatpush1.bf16.msra.mxu0 0
        %1546 = vmatprep.subr.bf16.mxu0 0
        %1547 = vmatpush1.bf16.msra.mxu0 0
        %1548 = vmatprep.subr.bf16.mxu0 0
        %1549 = vmatpush1.bf16.msra.mxu0 0
        %1550 = vmatprep.subr.bf16.mxu0 0
        %1551 = vmatpush1.bf16.msra.mxu0 0
        %1552 = vmatprep.subr.bf16.mxu0 0
        %1553 = vmatpush1.bf16.msra.mxu0 0
        %1554 = vmatprep.subr.bf16.mxu0 0
        %1555 = vmatpush1.bf16.msra.mxu0 0
        %1556 = vmatprep.subr.bf16.mxu0 0
        %1557 = vmatpush1.bf16.msra.mxu0 0
        %1558 = vmatprep.subr.bf16.mxu0 0
        %1559 = vmatpush1.bf16.msra.mxu0 0
        %1560 = vmatprep.subr.bf16.mxu0 0
        %1561 = vmatpush1.bf16.msra.mxu0 0
        %1562 = vmatprep.subr.bf16.mxu0 0
        %1563 = vmatpush1.bf16.msra.mxu0 0
        %1564 = vmatprep.subr.bf16.mxu0 0
        %1565 = vmatpush1.bf16.msra.mxu0 0
        %1566 = vmatprep.subr.bf16.mxu0 0
        %1567 = vmatpush1.bf16.msra.mxu0 0
        %1568 = vmatprep.subr.bf16.mxu0 0
        %1569 = vmatpush1.bf16.msra.mxu0 0
        %1570 = vmatprep.subr.bf16.mxu0 0
        %1571 = vmatpush1.bf16.msra.mxu0 0
        %1572 = vmatprep.mubr.bf16.mxu0 0
        %1573 = vmatmul.mubr.bf16.gmra.mrb[0].mxu0 %v1493
        %v1574 = vpop.f32.mrb[0].mxu0
        %v1575 = vadd.f32 %v1478, %v1574
        %v1576 = vpop.f32.mrb[0].mxu0
        %v1577 = vpop.f32.mrb[0].mxu0
        %v1578 = vadd.f32 %v1478, %v1577
        %v1579 = vpop.f32.mrb[0].mxu0
        %1580 = vmatprep.mubr.bf16.mxu0 0
        %1581 = vmatmul.mubr.bf16.gmra.mrb[0].mxu0 %v1496
        %v1582 = vpop.f32.mrb[0].mxu0
        %v1583 = vadd.f32 %v1478, %v1582
        %v1584 = vpop.f32.mrb[0].mxu0
        %v1585 = vpop.f32.mrb[0].mxu0
        %v1586 = vadd.f32 %v1478, %v1585
        %v1587 = vpop.f32.mrb[0].mxu0
        %1588 = vmatprep.mubr.bf16.mxu0 0
        %1589 = vmatmul.mubr.bf16.gmra.mrb[0].mxu0 %v1499
        %v1590 = vpop.f32.mrb[0].mxu0
        %v1591 = vadd.f32 %v1478, %v1590
        %v1592 = vpop.f32.mrb[0].mxu0
        %v1593 = vpop.f32.mrb[0].mxu0
        %v1594 = vadd.f32 %v1478, %v1593
        %v1595 = vpop.f32.mrb[0].mxu0
        %1596 = vmatprep.mubr.bf16.mxu0 0
        %1597 = vmatmul.mubr.bf16.gmra.mrb[0].mxu0 %v1502
        %v1598 = vpop.f32.mrb[0].mxu0
        %v1599 = vadd.f32 %v1478, %v1598
        %v1600 = vpop.f32.mrb[0].mxu0
        %v1601 = vpop.f32.mrb[0].mxu0
        %v1602 = vadd.f32 %v1478, %v1601
        %v1603 = vpop.f32.mrb[0].mxu0
        %1604 = vmatprep.mubr.bf16.mxu0 0
        %1605 = vmatmul.mubr.bf16.gmra.mrb[0].mxu0 %v1505
        %v1606 = vpop.f32.mrb[0].mxu0
        %v1607 = vadd.f32 %v1478, %v1606
        %v1608 = vpop.f32.mrb[0].mxu0
        %v1609 = vpop.f32.mrb[0].mxu0
        %v1610 = vadd.f32 %v1478, %v1609
        %v1611 = vpop.f32.mrb[0].mxu0
        %1612 = vmatprep.mubr.bf16.mxu0 0
        %1613 = vmatmul.mubr.bf16.gmra.mrb[0].mxu0 %v1508
        %v1614 = vpop.f32.mrb[0].mxu0
        %v1615 = vadd.f32 %v1478, %v1614
        %v1616 = vpop.f32.mrb[0].mxu0
        %v1617 = vpop.f32.mrb[0].mxu0
        %v1618 = vadd.f32 %v1478, %v1617
        %v1619 = vpop.f32.mrb[0].mxu0
        %1620 = vmatprep.mubr.bf16.mxu0 0
        %1621 = vmatmul.mubr.bf16.gmra.mrb[0].mxu0 %v1511
        %v1622 = vpop.f32.mrb[0].mxu0
        %v1623 = vadd.f32 %v1478, %v1622
        %v1624 = vpop.f32.mrb[0].mxu0
        %v1625 = vpop.f32.mrb[0].mxu0
        %v1626 = vadd.f32 %v1478, %v1625
        %v1627 = vpop.f32.mrb[0].mxu0
        %1628 = vmatprep.mubr.bf16.mxu0 0
        %1629 = vmatmul.mubr.bf16.gmra.mrb[0].mxu0 %v1514
        %v1630 = vpop.f32.mrb[0].mxu0
        %v1631 = vadd.f32 %v1478, %v1630
        %v1632 = vpop.f32.mrb[0].mxu0
        %v1633 = vpop.f32.mrb[0].mxu0
        %v1634 = vadd.f32 %v1478, %v1633
        %v1635 = vpop.f32.mrb[0].mxu0
        %1636 = vmatprep.mubr.bf16.mxu0 0
        %1637 = vmatmul.mubr.bf16.gmra.mrb[0].mxu0 %v1517
        %v1638 = vpop.f32.mrb[0].mxu0
        %v1639 = vadd.f32 %v1478, %v1638
        %v1640 = vpop.f32.mrb[0].mxu0
        %v1641 = vpop.f32.mrb[0].mxu0
        %v1642 = vadd.f32 %v1478, %v1641
        %v1643 = vpop.f32.mrb[0].mxu0
        %1644 = vmatprep.mubr.bf16.mxu0 0
        %1645 = vmatmul.mubr.bf16.gmra.mrb[0].mxu0 %v1520
        %v1646 = vpop.f32.mrb[0].mxu0
        %v1647 = vadd.f32 %v1478, %v1646
        %v1648 = vpop.f32.mrb[0].mxu0
        %v1649 = vpop.f32.mrb[0].mxu0
        %v1650 = vadd.f32 %v1478, %v1649
        %v1651 = vpop.f32.mrb[0].mxu0
        %1652 = vmatprep.mubr.bf16.mxu0 0
        %1653 = vmatmul.mubr.bf16.gmra.mrb[0].mxu0 %v1523
        %v1654 = vpop.f32.mrb[0].mxu0
        %v1655 = vadd.f32 %v1478, %v1654
        %v1656 = vpop.f32.mrb[0].mxu0
        %v1657 = vpop.f32.mrb[0].mxu0
        %v1658 = vadd.f32 %v1478, %v1657
        %v1659 = vpop.f32.mrb[0].mxu0
        %1660 = vmatprep.mubr.bf16.mxu0 0
        %1661 = vmatmul.mubr.bf16.gmra.mrb[0].mxu0 %v1526
        %v1662 = vpop.f32.mrb[0].mxu0
        %v1663 = vadd.f32 %v1478, %v1662
        %v1664 = vpop.f32.mrb[0].mxu0
        %v1665 = vpop.f32.mrb[0].mxu0
        %v1666 = vadd.f32 %v1478, %v1665
        %v1667 = vpop.f32.mrb[0].mxu0
        %1668 = vmatprep.mubr.bf16.mxu0 0
        %1669 = vmatmul.mubr.bf16.gmra.mrb[0].mxu0 %v1529
        %v1670 = vpop.f32.mrb[0].mxu0
        %v1671 = vadd.f32 %v1478, %v1670
        %v1672 = vpop.f32.mrb[0].mxu0
        %v1673 = vpop.f32.mrb[0].mxu0
        %v1674 = vadd.f32 %v1478, %v1673
        %v1675 = vpop.f32.mrb[0].mxu0
        %1676 = vmatprep.mubr.bf16.mxu0 0
        %1677 = vmatmul.mubr.bf16.gmra.mrb[0].mxu0 %v1532
        %v1678 = vpop.f32.mrb[0].mxu0
        %v1679 = vadd.f32 %v1478, %v1678
        %v1680 = vpop.f32.mrb[0].mxu0
        %v1681 = vpop.f32.mrb[0].mxu0
        %v1682 = vadd.f32 %v1478, %v1681
        %v1683 = vpop.f32.mrb[0].mxu0
        %1684 = vmatprep.mubr.bf16.mxu0 0
        %1685 = vmatmul.mubr.bf16.gmra.mrb[0].mxu0 %v1535
        %v1686 = vpop.f32.mrb[0].mxu0
        %v1687 = vadd.f32 %v1478, %v1686
        %v1688 = vpop.f32.mrb[0].mxu0
        %v1689 = vpop.f32.mrb[0].mxu0
        %v1690 = vadd.f32 %v1478, %v1689
        %v1691 = vpop.f32.mrb[0].mxu0
        %1692 = vmatprep.mubr.bf16.mxu0 0
        %1693 = vmatmul.mubr.bf16.gmra.mrb[0].mxu0 %v1538
        %v1694 = vpop.f32.mrb[0].mxu0
        %v1695 = vadd.f32 %v1478, %v1694
        %v1696 = vpop.f32.mrb[0].mxu0
        %v1697 = vpop.f32.mrb[0].mxu0
        %v1698 = vadd.f32 %v1478, %v1697
        %v1699 = vpop.f32.mrb[0].mxu0
        %1700 = vdwg.mxu0
        %v1701 = vld [vmem:[%s410] sm:$0xff]
        %v1702 = vld [vmem:[%s410 + $0x8] sm:$0xff]
        %v1703 = vld [vmem:[%s410 + $0x10] sm:$0xff]
        %v1704 = vld [vmem:[%s410 + $0x18] sm:$0xff]
        %v1705 = vld [vmem:[%s410 + $0x20] sm:$0xff]
        %v1706 = vld [vmem:[%s410 + $0x28] sm:$0xff]
        %v1707 = vld [vmem:[%s410 + $0x30] sm:$0xff]
        %v1708 = vld [vmem:[%s410 + $0x38] sm:$0xff]
        %v1709 = vld [vmem:[%s410 + $0x40] sm:$0xff]
        %v1710 = vld [vmem:[%s410 + $0x48] sm:$0xff]
        %v1711 = vld [vmem:[%s410 + $0x50] sm:$0xff]
        %v1712 = vld [vmem:[%s410 + $0x58] sm:$0xff]
        %v1713 = vld [vmem:[%s410 + $0x60] sm:$0xff]
        %v1714 = vld [vmem:[%s410 + $0x68] sm:$0xff]
        %v1715 = vld [vmem:[%s410 + $0x70] sm:$0xff]
        %v1716 = vld [vmem:[%s410 + $0x78] sm:$0xff]
        %v1717 = vld [vmem:[%s410 + $0x80] sm:$0xff]
        %v1718 = vld [vmem:[%s410 + $0x88] sm:$0xff]
        %v1719 = vld [vmem:[%s410 + $0x90] sm:$0xff]
        %v1720 = vld [vmem:[%s410 + $0x98] sm:$0xff]
        %v1721 = vld [vmem:[%s410 + $0xa0] sm:$0xff]
        %v1722 = vld [vmem:[%s410 + $0xa8] sm:$0xff]
        %v1723 = vld [vmem:[%s410 + $0xb0] sm:$0xff]
        %v1724 = vld [vmem:[%s410 + $0xb8] sm:$0xff]
        %v1725 = vld [vmem:[%s410 + $0xc0] sm:$0xff]
        %v1726 = vld [vmem:[%s410 + $0xc8] sm:$0xff]
        %v1727 = vld [vmem:[%s410 + $0xd0] sm:$0xff]
        %v1728 = vld [vmem:[%s410 + $0xd8] sm:$0xff]
        %v1729 = vld [vmem:[%s410 + $0xe0] sm:$0xff]
        %v1730 = vld [vmem:[%s410 + $0xe8] sm:$0xff]
        %v1731 = vld [vmem:[%s410 + $0xf0] sm:$0xff]
        %v1732 = vld [vmem:[%s410 + $0xf8] sm:$0xff]
        %v1733 = vpack.c.bf16 %v1702, %v1701
        %v1734 = vpack.c.bf16 %v1704, %v1703
        %v1735 = vpack.c.bf16 %v1706, %v1705
        %v1736 = vpack.c.bf16 %v1708, %v1707
        %v1737 = vpack.c.bf16 %v1710, %v1709
        %v1738 = vpack.c.bf16 %v1712, %v1711
        %v1739 = vpack.c.bf16 %v1714, %v1713
        %v1740 = vpack.c.bf16 %v1716, %v1715
        %v1741 = vpack.c.bf16 %v1718, %v1717
        %v1742 = vpack.c.bf16 %v1720, %v1719
        %v1743 = vpack.c.bf16 %v1722, %v1721
        %v1744 = vpack.c.bf16 %v1724, %v1723
        %v1745 = vpack.c.bf16 %v1726, %v1725
        %v1746 = vpack.c.bf16 %v1728, %v1727
        %v1747 = vpack.c.bf16 %v1730, %v1729
        %v1748 = vpack.c.bf16 %v1732, %v1731
        %v1749 = vld [vmem:[%s9] sm:$0xf]
        %v1750 = vld [vmem:[%s9 + $0x4] sm:$0xf]
        %v1751 = vld [vmem:[%s9 + $0x8] sm:$0xf]
        %v1752 = vld [vmem:[%s9 + $0xc] sm:$0xf]
        %v1753 = vld [vmem:[%s9 + $0x10] sm:$0xf]
        %v1754 = vld [vmem:[%s9 + $0x14] sm:$0xf]
        %v1755 = vld [vmem:[%s9 + $0x18] sm:$0xf]
        %v1756 = vld [vmem:[%s9 + $0x1c] sm:$0xf]
        %v1757 = vld [vmem:[%s10] sm:$0x1]
        %v1759 = vlaneseq
        %v1760 = vshrl.u32 %v1759, 7
        %v1761 = vsub.s32 0, %v1760
        %v1762 = vrot.slane %v1757, %v1761
        %v1772 = vunpack.c.l.b16 %v1749
        %v1773 = vunpack.c.l.b16 %v1750
        %v1774 = vunpack.c.l.b16 %v1751
        %v1775 = vunpack.c.l.b16 %v1752
        %v1776 = vunpack.c.l.b16 %v1753
        %v1777 = vunpack.c.l.b16 %v1754
        %v1778 = vunpack.c.l.b16 %v1755
        %v1779 = vunpack.c.l.b16 %v1756
        %v1780 = vpack.c.b16 %v1773, %v1772
        %v1781 = vpack.c.b16 %v1775, %v1774
        %v1782 = vpack.c.b16 %v1777, %v1776
        %v1783 = vpack.c.b16 %v1779, %v1778
        %vm1788 = vcmask 523264
        %v1790 = vsel %vm1788, %v1733, 0
        %v1793 = vsel %vm1788, %v1734, 0
        %v1796 = vsel %vm1788, %v1735, 0
        %v1799 = vsel %vm1788, %v1736, 0
        %v1802 = vsel %vm1788, %v1737, 0
        %v1805 = vsel %vm1788, %v1738, 0
        %v1808 = vsel %vm1788, %v1739, 0
        %v1811 = vsel %vm1788, %v1740, 0
        %v1814 = vsel %vm1788, %v1741, 0
        %v1817 = vsel %vm1788, %v1742, 0
        %v1820 = vsel %vm1788, %v1743, 0
        %v1823 = vsel %vm1788, %v1744, 0
        %v1826 = vsel %vm1788, %v1745, 0
        %v1829 = vsel %vm1788, %v1746, 0
        %v1832 = vsel %vm1788, %v1747, 0
        %v1835 = vsel %vm1788, %v1748, 0
        %1837 = vmatprep.subr.bf16.mxu0 0
        %1838 = vmatpush1.bf16.msra.mxu0 %v1780
        %1839 = vmatprep.subr.bf16.mxu0 0
        %1840 = vmatpush1.bf16.msra.mxu0 %v1781
        %1841 = vmatprep.subr.bf16.mxu0 0
        %1842 = vmatpush1.bf16.msra.mxu0 %v1782
        %1843 = vmatprep.subr.bf16.mxu0 0
        %1844 = vmatpush1.bf16.msra.mxu0 %v1783
        %1845 = vmatprep.subr.bf16.mxu0 0
        %1846 = vmatpush1.bf16.msra.mxu0 0
        %1847 = vmatprep.subr.bf16.mxu0 0
        %1848 = vmatpush1.bf16.msra.mxu0 0
        %1849 = vmatprep.subr.bf16.mxu0 0
        %1850 = vmatpush1.bf16.msra.mxu0 0
        %1851 = vmatprep.subr.bf16.mxu0 0
        %1852 = vmatpush1.bf16.msra.mxu0 0
        %1853 = vmatprep.subr.bf16.mxu0 0
        %1854 = vmatpush1.bf16.msra.mxu0 0
        %1855 = vmatprep.subr.bf16.mxu0 0
        %1856 = vmatpush1.bf16.msra.mxu0 0
        %1857 = vmatprep.subr.bf16.mxu0 0
        %1858 = vmatpush1.bf16.msra.mxu0 0
        %1859 = vmatprep.subr.bf16.mxu0 0
        %1860 = vmatpush1.bf16.msra.mxu0 0
        %1861 = vmatprep.subr.bf16.mxu0 0
        %1862 = vmatpush1.bf16.msra.mxu0 0
        %1863 = vmatprep.subr.bf16.mxu0 0
        %1864 = vmatpush1.bf16.msra.mxu0 0
        %1865 = vmatprep.subr.bf16.mxu0 0
        %1866 = vmatpush1.bf16.msra.mxu0 0
        %1867 = vmatprep.subr.bf16.mxu0 0
        %1868 = vmatpush1.bf16.msra.mxu0 0
        %1869 = vmatprep.mubr.bf16.mxu0 0
        %1870 = vmatmul.mubr.bf16.gmra.mrb[0].mxu0 %v1790
        %v1871 = vpop.f32.mrb[0].mxu0
        %v1872 = vadd.f32 %v1762, %v1871
        %v1873 = vpop.f32.mrb[0].mxu0
        %v1874 = vpop.f32.mrb[0].mxu0
        %v1875 = vadd.f32 %v1762, %v1874
        %v1876 = vpop.f32.mrb[0].mxu0
        %1877 = vmatprep.mubr.bf16.mxu0 0
        %1878 = vmatmul.mubr.bf16.gmra.mrb[0].mxu0 %v1793
        %v1879 = vpop.f32.mrb[0].mxu0
        %v1880 = vadd.f32 %v1762, %v1879
        %v1881 = vpop.f32.mrb[0].mxu0
        %v1882 = vpop.f32.mrb[0].mxu0
        %v1883 = vadd.f32 %v1762, %v1882
        %v1884 = vpop.f32.mrb[0].mxu0
        %1885 = vmatprep.mubr.bf16.mxu0 0
        %1886 = vmatmul.mubr.bf16.gmra.mrb[0].mxu0 %v1796
        %v1887 = vpop.f32.mrb[0].mxu0
        %v1888 = vadd.f32 %v1762, %v1887
        %v1889 = vpop.f32.mrb[0].mxu0
        %v1890 = vpop.f32.mrb[0].mxu0
        %v1891 = vadd.f32 %v1762, %v1890
        %v1892 = vpop.f32.mrb[0].mxu0
        %1893 = vmatprep.mubr.bf16.mxu0 0
        %1894 = vmatmul.mubr.bf16.gmra.mrb[0].mxu0 %v1799
        %v1895 = vpop.f32.mrb[0].mxu0
        %v1896 = vadd.f32 %v1762, %v1895
        %v1897 = vpop.f32.mrb[0].mxu0
        %v1898 = vpop.f32.mrb[0].mxu0
        %v1899 = vadd.f32 %v1762, %v1898
        %v1900 = vpop.f32.mrb[0].mxu0
        %1901 = vmatprep.mubr.bf16.mxu0 0
        %1902 = vmatmul.mubr.bf16.gmra.mrb[0].mxu0 %v1802
        %v1903 = vpop.f32.mrb[0].mxu0
        %v1904 = vadd.f32 %v1762, %v1903
        %v1905 = vpop.f32.mrb[0].mxu0
        %v1906 = vpop.f32.mrb[0].mxu0
        %v1907 = vadd.f32 %v1762, %v1906
        %v1908 = vpop.f32.mrb[0].mxu0
        %1909 = vmatprep.mubr.bf16.mxu0 0
        %1910 = vmatmul.mubr.bf16.gmra.mrb[0].mxu0 %v1805
        %v1911 = vpop.f32.mrb[0].mxu0
        %v1912 = vadd.f32 %v1762, %v1911
        %v1913 = vpop.f32.mrb[0].mxu0
        %v1914 = vpop.f32.mrb[0].mxu0
        %v1915 = vadd.f32 %v1762, %v1914
        %v1916 = vpop.f32.mrb[0].mxu0
        %1917 = vmatprep.mubr.bf16.mxu0 0
        %1918 = vmatmul.mubr.bf16.gmra.mrb[0].mxu0 %v1808
        %v1919 = vpop.f32.mrb[0].mxu0
        %v1920 = vadd.f32 %v1762, %v1919
        %v1921 = vpop.f32.mrb[0].mxu0
        %v1922 = vpop.f32.mrb[0].mxu0
        %v1923 = vadd.f32 %v1762, %v1922
        %v1924 = vpop.f32.mrb[0].mxu0
        %1925 = vmatprep.mubr.bf16.mxu0 0
        %1926 = vmatmul.mubr.bf16.gmra.mrb[0].mxu0 %v1811
        %v1927 = vpop.f32.mrb[0].mxu0
        %v1928 = vadd.f32 %v1762, %v1927
        %v1929 = vpop.f32.mrb[0].mxu0
        %v1930 = vpop.f32.mrb[0].mxu0
        %v1931 = vadd.f32 %v1762, %v1930
        %v1932 = vpop.f32.mrb[0].mxu0
        %1933 = vmatprep.mubr.bf16.mxu0 0
        %1934 = vmatmul.mubr.bf16.gmra.mrb[0].mxu0 %v1814
        %v1935 = vpop.f32.mrb[0].mxu0
        %v1936 = vadd.f32 %v1762, %v1935
        %v1937 = vpop.f32.mrb[0].mxu0
        %v1938 = vpop.f32.mrb[0].mxu0
        %v1939 = vadd.f32 %v1762, %v1938
        %v1940 = vpop.f32.mrb[0].mxu0
        %1941 = vmatprep.mubr.bf16.mxu0 0
        %1942 = vmatmul.mubr.bf16.gmra.mrb[0].mxu0 %v1817
        %v1943 = vpop.f32.mrb[0].mxu0
        %v1944 = vadd.f32 %v1762, %v1943
        %v1945 = vpop.f32.mrb[0].mxu0
        %v1946 = vpop.f32.mrb[0].mxu0
        %v1947 = vadd.f32 %v1762, %v1946
        %v1948 = vpop.f32.mrb[0].mxu0
        %1949 = vmatprep.mubr.bf16.mxu0 0
        %1950 = vmatmul.mubr.bf16.gmra.mrb[0].mxu0 %v1820
        %v1951 = vpop.f32.mrb[0].mxu0
        %v1952 = vadd.f32 %v1762, %v1951
        %v1953 = vpop.f32.mrb[0].mxu0
        %v1954 = vpop.f32.mrb[0].mxu0
        %v1955 = vadd.f32 %v1762, %v1954
        %v1956 = vpop.f32.mrb[0].mxu0
        %1957 = vmatprep.mubr.bf16.mxu0 0
        %1958 = vmatmul.mubr.bf16.gmra.mrb[0].mxu0 %v1823
        %v1959 = vpop.f32.mrb[0].mxu0
        %v1960 = vadd.f32 %v1762, %v1959
        %v1961 = vpop.f32.mrb[0].mxu0
        %v1962 = vpop.f32.mrb[0].mxu0
        %v1963 = vadd.f32 %v1762, %v1962
        %v1964 = vpop.f32.mrb[0].mxu0
        %1965 = vmatprep.mubr.bf16.mxu0 0
        %1966 = vmatmul.mubr.bf16.gmra.mrb[0].mxu0 %v1826
        %v1967 = vpop.f32.mrb[0].mxu0
        %v1968 = vadd.f32 %v1762, %v1967
        %v1969 = vpop.f32.mrb[0].mxu0
        %v1970 = vpop.f32.mrb[0].mxu0
        %v1971 = vadd.f32 %v1762, %v1970
        %v1972 = vpop.f32.mrb[0].mxu0
        %1973 = vmatprep.mubr.bf16.mxu0 0
        %1974 = vmatmul.mubr.bf16.gmra.mrb[0].mxu0 %v1829
        %v1975 = vpop.f32.mrb[0].mxu0
        %v1976 = vadd.f32 %v1762, %v1975
        %v1977 = vpop.f32.mrb[0].mxu0
        %v1978 = vpop.f32.mrb[0].mxu0
        %v1979 = vadd.f32 %v1762, %v1978
        %v1980 = vpop.f32.mrb[0].mxu0
        %1981 = vmatprep.mubr.bf16.mxu0 0
        %1982 = vmatmul.mubr.bf16.gmra.mrb[0].mxu0 %v1832
        %v1983 = vpop.f32.mrb[0].mxu0
        %v1984 = vadd.f32 %v1762, %v1983
        %v1985 = vpop.f32.mrb[0].mxu0
        %v1986 = vpop.f32.mrb[0].mxu0
        %v1987 = vadd.f32 %v1762, %v1986
        %v1988 = vpop.f32.mrb[0].mxu0
        %1989 = vmatprep.mubr.bf16.mxu0 0
        %1990 = vmatmul.mubr.bf16.gmra.mrb[0].mxu0 %v1835
        %v1991 = vpop.f32.mrb[0].mxu0
        %v1992 = vadd.f32 %v1762, %v1991
        %v1993 = vpop.f32.mrb[0].mxu0
        %v1994 = vpop.f32.mrb[0].mxu0
        %v1995 = vadd.f32 %v1762, %v1994
        %v1996 = vpop.f32.mrb[0].mxu0
        %1997 = vdwg.mxu0
        %v1998 = vadd.f32 %v1575, %v1872
        %v1999 = vadd.f32 %v1578, %v1875
        %v2000 = vadd.f32 %v1583, %v1880
        %v2001 = vadd.f32 %v1586, %v1883
        %v2002 = vadd.f32 %v1591, %v1888
        %v2003 = vadd.f32 %v1594, %v1891
        %v2004 = vadd.f32 %v1599, %v1896
        %v2005 = vadd.f32 %v1602, %v1899
        %v2006 = vadd.f32 %v1607, %v1904
        %v2007 = vadd.f32 %v1610, %v1907
        %v2008 = vadd.f32 %v1615, %v1912
        %v2009 = vadd.f32 %v1618, %v1915
        %v2010 = vadd.f32 %v1623, %v1920
        %v2011 = vadd.f32 %v1626, %v1923
        %v2012 = vadd.f32 %v1631, %v1928
        %v2013 = vadd.f32 %v1634, %v1931
        %v2014 = vadd.f32 %v1639, %v1936
        %v2015 = vadd.f32 %v1642, %v1939
        %v2016 = vadd.f32 %v1647, %v1944
        %v2017 = vadd.f32 %v1650, %v1947
        %v2018 = vadd.f32 %v1655, %v1952
        %v2019 = vadd.f32 %v1658, %v1955
        %v2020 = vadd.f32 %v1663, %v1960
        %v2021 = vadd.f32 %v1666, %v1963
        %v2022 = vadd.f32 %v1671, %v1968
        %v2023 = vadd.f32 %v1674, %v1971
        %v2024 = vadd.f32 %v1679, %v1976
        %v2025 = vadd.f32 %v1682, %v1979
        %v2026 = vadd.f32 %v1687, %v1984
        %v2027 = vadd.f32 %v1690, %v1987
        %v2028 = vadd.f32 %v1695, %v1992
        %v2029 = vadd.f32 %v1698, %v1995
        %2030 = vst [vmem:[%s398] sm:$0xff] %v1998
        %2031 = vst [vmem:[%s398 + $0x8] sm:$0xff] %v1999
        %2032 = vst [vmem:[%s398 + $0x10] sm:$0xff] %v2000
        %2033 = vst [vmem:[%s398 + $0x18] sm:$0xff] %v2001
        %2034 = vst [vmem:[%s398 + $0x20] sm:$0xff] %v2002
        %2035 = vst [vmem:[%s398 + $0x28] sm:$0xff] %v2003
        %2036 = vst [vmem:[%s398 + $0x30] sm:$0xff] %v2004
        %2037 = vst [vmem:[%s398 + $0x38] sm:$0xff] %v2005
        %2038 = vst [vmem:[%s398 + $0x40] sm:$0xff] %v2006
        %2039 = vst [vmem:[%s398 + $0x48] sm:$0xff] %v2007
        %2040 = vst [vmem:[%s398 + $0x50] sm:$0xff] %v2008
        %2041 = vst [vmem:[%s398 + $0x58] sm:$0xff] %v2009
        %2042 = vst [vmem:[%s398 + $0x60] sm:$0xff] %v2010
        %2043 = vst [vmem:[%s398 + $0x68] sm:$0xff] %v2011
        %2044 = vst [vmem:[%s398 + $0x70] sm:$0xff] %v2012
        %2045 = vst [vmem:[%s398 + $0x78] sm:$0xff] %v2013
        %2046 = vst [vmem:[%s398 + $0x80] sm:$0xff] %v2014
        %2047 = vst [vmem:[%s398 + $0x88] sm:$0xff] %v2015
        %2048 = vst [vmem:[%s398 + $0x90] sm:$0xff] %v2016
        %2049 = vst [vmem:[%s398 + $0x98] sm:$0xff] %v2017
        %2050 = vst [vmem:[%s398 + $0xa0] sm:$0xff] %v2018
        %2051 = vst [vmem:[%s398 + $0xa8] sm:$0xff] %v2019
        %2052 = vst [vmem:[%s398 + $0xb0] sm:$0xff] %v2020
        %2053 = vst [vmem:[%s398 + $0xb8] sm:$0xff] %v2021
        %2054 = vst [vmem:[%s398 + $0xc0] sm:$0xff] %v2022
        %2055 = vst [vmem:[%s398 + $0xc8] sm:$0xff] %v2023
        %2056 = vst [vmem:[%s398 + $0xd0] sm:$0xff] %v2024
        %2057 = vst [vmem:[%s398 + $0xd8] sm:$0xff] %v2025
        %2058 = vst [vmem:[%s398 + $0xe0] sm:$0xff] %v2026
        %2059 = vst [vmem:[%s398 + $0xe8] sm:$0xff] %v2027
        %2060 = vst [vmem:[%s398 + $0xf0] sm:$0xff] %v2028
        %2061 = vst [vmem:[%s398 + $0xf8] sm:$0xff] %v2029
        %s2062 = sand.u32 %s274, 1
        %s2063 = scalar_lea.sflag [#allocation3], %s2062
        %s2064 = sand.u32 %s274, 1
        %s2065 = smul.addr %s2064, 256
        %s2066 = scalar_lea.vmem [#allocation2], %s2065
        // Predicated region
        $region65: #{bottleneck_forward.3} parent=63 // pred_check
          %p2067 = pneg %p284
        $region66: #{bottleneck_forward.3} parent=63 // pred_check_branch
          %2069 = sbr.rel (%p2067) target = $region68
        $region67: #{bottleneck_forward.3} parent=63 // pred_region
          %s2070 = smul.u32 32, %s25
          %s2072 = ssub.s32 4096, 4096
          %2073 = vsyncadd %s2063, %s2072
          %s2074 = smul.addr %s2070, 128
          %s2075 = scalar_lea.hbm %s11, %s2074
          %s2076 = sshll.u32 %s2066, 4
          %s2077 = int_to_ptr.vmem [resolvable:$true] %s2076
          %2082 = dma.vmem_to_hbm [thread:$0]  %s2077, 4096, %s2075, %s2063, 128, 128, 8
        $region68: #{bottleneck_forward.3} parent=63 // pred_fallthru
          _
      $region64: #{bottleneck_forward.3} parent=5 // pred_fallthru
        _
      %p2083 = scmp.le.s32.totalorder 2, %s20
      // Predicated region
      $region69: #{bottleneck_forward.3} parent=5 // pred_check
        %p2084 = pneg %p2083
      $region70: #{bottleneck_forward.3} parent=5 // pred_check_branch
        %2086 = sbr.rel (%p2084) target = $region72
      $region71: #{bottleneck_forward.3} parent=5 // pred_region
        %s2087 = ssub.s32 %s20, 2
        // Predicated region
        $region73: #{bottleneck_forward.3} parent=71 // pred_check
          %p2088 = pneg %p290
        $region74: #{bottleneck_forward.3} parent=71 // pred_check_branch
          %2090 = sbr.rel (%p2088) target = $region76
        $region75: #{bottleneck_forward.3} parent=71 // pred_region
          %s2091 = sand.u32 %s275, 1
          %s2092 = scalar_lea.sflag [#allocation3], %s2091
          %s2093 = sand.u32 %s275, 1
          %s2094 = smul.addr %s2093, 256
          %s2095 = scalar_lea.vmem [#allocation2], %s2094
          %2096 = dma.done %s2092, 4096
        $region76: #{bottleneck_forward.3} parent=71 // pred_fallthru
          _
      $region72: #{bottleneck_forward.3} parent=5 // pred_fallthru
        _
    $region6: #{bottleneck_forward.3} parent=1 // loop_footer
      %s24 = sadd.s32 1, %s20
    $region7: #{bottleneck_forward.3} parent=1 // loop_footer_branch
      %19 = sbr.rel target = $region3
    $region8: #{bottleneck_forward.3} parent=1 // loop_exit
      _
    %2097 = vsyncpa [#allocation3], 1
    %s2098 = scalar_lea.sflag [#allocation3], 1
    %2099 = vsyncpa %s2098, 1

</llo_original>
